<compile_context>
chip_gen: v7x
topology: tpu7x:2x2x1
jax: 0.10.0
libtpu: 0.0.40
codegen_flags: <defaults>
</compile_context>

<pallas_src>
import jax
import jax.numpy as jnp
from jax.experimental import pallas as pl
from jax.experimental.pallas import tpu as pltpu


def cblock_kernel(x_ref,
                  w1_ref, b1_ref,      # conv1 (BN1 folded), block-diagonal   (WC,WC), (1,WC)
                  e_ref, b2_ref,       # dwconv3x3x3 + conv2 fused            (9,WC,WC), (1,WC)
                  wf1_ref, bf1_ref,    # mlp.fc1 (BN2 folded), block-diagonal (WC,WH), (1,WH)
                  wf2_ref, bf2_ref,    # mlp.fc2, block-diagonal              (WH,WC), (1,WC)
                  o_ref,
                  pad_ref):            # VMEM scratch (T+2, H+2, WC): zero-halo buffer
    _, T, H, WC = x_ref.shape
    x = x_ref[0].astype(jnp.float32)                                   # (T, H, WC) lane-dense
    xm = x.reshape(T * H, WC)

    # ---------- branch 1: conv2(dwconv3x3x3(conv1(bn1(x)))), all on the MXU ----------
    y = jnp.dot(xm, w1_ref[...], preferred_element_type=jnp.float32) + b1_ref[...]

    # The scratch is fully rewritten every grid step (aligned full-ref zero store + interior
    # store), so it is correct even when the parallel grid axis is split across TensorCores.
    pad_ref[...] = jnp.zeros((T + 2, H + 2, WC), jnp.float32)
    pad_ref[1:T + 1, 1:H + 1, :] = y.reshape(T, H, WC)

    # depthwise 3x3x3 + conv2: 9 (T,H)-shifted matmuls against precomputed block-banded weights
    # (the W taps, per-channel depthwise weights and conv2 are folded into E on the host).
    z = jnp.zeros((T * H, WC), jnp.float32)
    for kt in range(3):
        for kh in range(3):
            tap = pad_ref[kt:kt + T, kh:kh + H, :].reshape(T * H, WC)
            z = z + jnp.dot(tap, e_ref[3 * kt + kh],
                            preferred_element_type=jnp.float32)
    x1 = xm + z + b2_ref[...]                                          # residual add 1

    # ---------- branch 2: FFN  fc2(gelu(fc1(bn2(x1)))) ----------
    h = jnp.dot(x1, wf1_ref[...], preferred_element_type=jnp.float32) + bf1_ref[...]
    # tanh-form GELU: transcendental on the EUP (f32 math, v5e-safe); ~1e-3 from exact-erf GELU.
    h = 0.5 * h * (1.0 + jnp.tanh(0.7978845608028654 * (h + 0.044715 * (h * h * h))))
    z2 = jnp.dot(h, wf2_ref[...], preferred_element_type=jnp.float32) + bf2_ref[...]

    o_ref[0] = (x1 + z2).reshape(T, H, WC).astype(o_ref.dtype)         # residual add 2


def cblock_forward(x, kp):
    """x: (N, T, H, W, C) channels-last; kp: kernel params from prepare_params()."""
    N, T, H, W, C = x.shape
    WC = W * C
    WH = kp["wf1"].shape[1]                    # W * hidden_dim
    xd = x.reshape(N, T, H, WC)                # lane-dense view (trailing dims merge -> free)

    out = pl.pallas_call(
        cblock_kernel,
        out_shape=jax.ShapeDtypeStruct((N, T, H, WC), x.dtype),
        grid_spec=pltpu.PrefetchScalarGridSpec(
            num_scalar_prefetch=0,
            grid=(N,),
            in_specs=[
                pl.BlockSpec((1, T, H, WC), lambda n: (n, 0, 0, 0)),
                pl.BlockSpec((WC, WC), lambda n: (0, 0)),
                pl.BlockSpec((1, WC), lambda n: (0, 0)),
                pl.BlockSpec((9, WC, WC), lambda n: (0, 0, 0)),
                pl.BlockSpec((1, WC), lambda n: (0, 0)),
                pl.BlockSpec((WC, WH), lambda n: (0, 0)),
                pl.BlockSpec((1, WH), lambda n: (0, 0)),
                pl.BlockSpec((WH, WC), lambda n: (0, 0)),
                pl.BlockSpec((1, WC), lambda n: (0, 0)),
            ],
            out_specs=pl.BlockSpec((1, T, H, WC), lambda n: (n, 0, 0, 0)),
            scratch_shapes=[pltpu.VMEM((T + 2, H + 2, WC), jnp.float32)],
        ),
        compiler_params=pltpu.CompilerParams(dimension_semantics=("parallel",)),
    )(xd, kp["w1"], kp["b1"], kp["e"], kp["b2"],
      kp["wf1"], kp["bf1"], kp["wf2"], kp["bf2"])
    return out.reshape(N, T, H, W, C)


def prepare_params(raw, W, eps=1e-5):
    """One-time host-side folding / re-layout of PyTorch-layout params for the kernel."""
    C = raw["conv1_b"].shape[0]
    CH = raw["fc1_b"].shape[0]

    # Eval-mode BN folded to per-channel scale/shift.
    s1 = raw["bn1_g"] / jnp.sqrt(raw["bn1_v"] + eps)
    t1 = raw["bn1_b"] - raw["bn1_m"] * s1
    s2 = raw["bn2_g"] / jnp.sqrt(raw["bn2_v"] + eps)
    t2 = raw["bn2_b"] - raw["bn2_m"] * s2

    w1 = raw["conv1_w"].reshape(C, C).T                               # (Cin, Cout)
    w2 = raw["conv2_w"].reshape(C, C).T
    wf1 = raw["fc1_w"].reshape(CH, C).T                               # (C, CH)
    wf2 = raw["fc2_w"].reshape(C, CH).T                               # (CH, C)
    wdw = jnp.transpose(raw["attn_w"].reshape(C, 3, 3, 3), (1, 2, 3, 0))   # (3,3,3,C)

    eye_w = jnp.eye(W, dtype=jnp.float32)

    # conv1 with BN1 folded:  bn1(x) @ w1 + b1 = x @ (s1*w1) + (t1 @ w1 + b1)
    w1f = s1[:, None] * w1
    b1f = t1 @ w1 + raw["conv1_b"]
    w1bd = jnp.kron(eye_w, w1f)                                       # (W*C, W*C) block-diagonal
    b1bd = jnp.tile(b1f, W).reshape(1, W * C)

    # dwconv3x3x3 fused with conv2:
    #   out = sum_{kt,kh} shift_TH(y, kt, kh) @ E[kt,kh]
    #   E[kt,kh] = sum_kw  P_kw  (kron)  (wdw[kt,kh,kw][:,None] * w2)
    # where P_kw shifts along W (out at w reads w+kw-1): super-diag / identity / sub-diag;
    # missing bands at the W edges reproduce the zero padding along W.
    p_kw = [jnp.eye(W, k=1, dtype=jnp.float32),     # kw=0: reads w-1
            jnp.eye(W, k=0, dtype=jnp.float32),     # kw=1: reads w
            jnp.eye(W, k=-1, dtype=jnp.float32)]    # kw=2: reads w+1
    e_list = []
    for kt in range(3):
        for kh in range(3):
            e_kt_kh = sum(jnp.kron(p_kw[kw], wdw[kt, kh, kw][:, None] * w2)
                          for kw in range(3))
            e_list.append(e_kt_kh)
    e = jnp.stack(e_list, axis=0)                                     # (9, W*C, W*C)
    b2tot = raw["attn_b"] @ w2 + raw["conv2_b"]                       # dw bias pushed through conv2
    b2bd = jnp.tile(b2tot, W).reshape(1, W * C)

    # fc1 with BN2 folded, fc2.
    wf1f = s2[:, None] * wf1
    bf1f = t2 @ wf1 + raw["fc1_b"]
    wf1bd = jnp.kron(eye_w, wf1f)                                     # (W*C, W*CH)
    bf1bd = jnp.tile(bf1f, W).reshape(1, W * CH)
    wf2bd = jnp.kron(eye_w, wf2)                                      # (W*CH, W*C)
    bf2bd = jnp.tile(raw["fc2_b"], W).reshape(1, W * C)

    return dict(w1=w1bd, b1=b1bd, e=e, b2=b2bd,
                wf1=wf1bd, bf1=bf1bd, wf2=wf2bd, bf2=bf2bd)


def cblock_reference(x, raw, eps=1e-5):
    """Pure-JAX reference computed directly from the PyTorch-layout parameters (NTHWC input)."""
    N, T, H, W, C = x.shape
    CH = raw["fc1_b"].shape[0]
    hp = jax.lax.Precision.HIGHEST

    s1 = raw["bn1_g"] / jnp.sqrt(raw["bn1_v"] + eps)
    t1 = raw["bn1_b"] - raw["bn1_m"] * s1
    s2 = raw["bn2_g"] / jnp.sqrt(raw["bn2_v"] + eps)
    t2 = raw["bn2_b"] - raw["bn2_m"] * s2
    w1 = raw["conv1_w"].reshape(C, C).T
    w2 = raw["conv2_w"].reshape(C, C).T
    wf1 = raw["fc1_w"].reshape(CH, C).T
    wf2 = raw["fc2_w"].reshape(C, CH).T
    wdw = jnp.transpose(raw["attn_w"].reshape(C, 3, 3, 3), (1, 2, 3, 0))

    y = x * s1 + t1
    y = jnp.einsum("nthwc,cd->nthwd", y, w1, precision=hp) + raw["conv1_b"]
    yp = jnp.pad(y, ((0, 0), (1, 1), (1, 1), (1, 1), (0, 0)))
    acc = jnp.zeros_like(y)
    for kt in range(3):
        for kh in range(3):
            for kw in range(3):
                acc = acc + yp[:, kt:kt + T, kh:kh + H, kw:kw + W, :] * wdw[kt, kh, kw]
    acc = acc + raw["attn_b"]
    z = jnp.einsum("nthwc,cd->nthwd", acc, w2, precision=hp) + raw["conv2_b"]
    x1 = x + z

    y2 = x1 * s2 + t2
    h = jnp.einsum("nthwc,cd->nthwd", y2, wf1, precision=hp) + raw["fc1_b"]
    h = jax.nn.gelu(h, approximate=False)          # PyTorch nn.GELU() default (exact erf)
    z2 = jnp.einsum("nthwd,dc->nthwc", h, wf2, precision=hp) + raw["fc2_b"]
    return x1 + z2


if __name__ == "__main__":
    # Small shapes consistent with the module: dim=32, mlp_ratio=4 -> hidden=128.
    N, C, T, H, W = 2, 32, 4, 8, 8
    CH = int(C * 4.0)

    key = jax.random.PRNGKey(0)
    ks = jax.random.split(key, 20)

    def nrm(k, shape, scale=0.1):
        return scale * jax.random.normal(k, shape, jnp.float32)

    # PyTorch-layout parameters (shapes exactly as the module's __init__ creates them).
    x_ncdhw = jax.random.normal(ks[0], (N, C, T, H, W), jnp.float32)
    raw = dict(
        conv1_w=nrm(ks[1], (C, C, 1, 1, 1)), conv1_b=nrm(ks[2], (C,)),
        conv2_w=nrm(ks[3], (C, C, 1, 1, 1)), conv2_b=nrm(ks[4], (C,)),   # module zero-inits these
        attn_w=nrm(ks[5], (C, 1, 3, 3, 3)), attn_b=nrm(ks[6], (C,)),     # depthwise (groups=dim)
        fc1_w=nrm(ks[7], (CH, C, 1, 1, 1)), fc1_b=nrm(ks[8], (CH,)),
        fc2_w=nrm(ks[9], (C, CH, 1, 1, 1)), fc2_b=nrm(ks[10], (C,)),     # module zero-inits these
        bn1_g=1.0 + nrm(ks[11], (C,)), bn1_b=nrm(ks[12], (C,)),
        bn1_m=nrm(ks[13], (C,)), bn1_v=1.0 + jnp.abs(nrm(ks[14], (C,))),
        bn2_g=1.0 + nrm(ks[15], (C,)), bn2_b=nrm(ks[16], (C,)),
        bn2_m=nrm(ks[17], (C,)), bn2_v=1.0 + jnp.abs(nrm(ks[18], (C,))),
    )

    # NCDHW -> NTHWC (kernel layout) and one-time host-side weight folding / re-layout.
    x = jnp.transpose(x_ncdhw, (0, 2, 3, 4, 1))
    kp = prepare_params(raw, W=W)

    out = jax.block_until_ready(cblock_forward(x, kp))
    ref = cblock_reference(x, raw)

    assert out.shape == (N, T, H, W, C), out.shape
    diff = jnp.abs(out - ref)
    max_diff = float(jnp.max(diff))
    mean_diff = float(jnp.mean(diff))
    # Tolerances cover the default (bf16-pass) MXU precision across the chained matmuls plus
    # tanh-GELU vs exact-erf GELU; structural bugs would produce O(0.1-1) errors.
    assert max_diff < 5e-2, f"mismatch vs reference: max |diff| = {max_diff}"
    assert mean_diff < 1e-2, f"mismatch vs reference: mean |diff| = {mean_diff}"

    print("KERNEL_OK")
</pallas_src>

<mosaic_0001>
module attributes {stable_mosaic.version = 11 : i64} {
  func.func @cblock_kernel(%arg0: i32, %arg1: memref<1x4x8x256xf32, #tpu.memory_space<vmem>>, %arg2: memref<256x256xf32, #tpu.memory_space<vmem>>, %arg3: memref<1x256xf32, #tpu.memory_space<vmem>>, %arg4: memref<9x256x256xf32, #tpu.memory_space<vmem>>, %arg5: memref<1x256xf32, #tpu.memory_space<vmem>>, %arg6: memref<256x1024xf32, #tpu.memory_space<vmem>>, %arg7: memref<1x1024xf32, #tpu.memory_space<vmem>>, %arg8: memref<1024x256xf32, #tpu.memory_space<vmem>>, %arg9: memref<1x256xf32, #tpu.memory_space<vmem>>, %arg10: memref<1x4x8x256xf32, #tpu.memory_space<vmem>>, %arg11: memref<6x10x256xf32, #tpu.memory_space<vmem>>) attributes {dimension_semantics = [#tpu.dimension_semantics<parallel>], iteration_bounds = array<i64: 2>, scalar_prefetch = 0 : i64, scratch_operands = 1 : i64, tpu.core_type = #tpu.core_type<tc>, window_params = [{transform_indices = @transform_0, window_bounds = array<i64: 1, 4, 8, 256>}, {pipeline_mode = #tpu.pipeline_mode<synchronous>, transform_indices = @transform_1, window_bounds = array<i64: 256, 256>}, {pipeline_mode = #tpu.pipeline_mode<synchronous>, transform_indices = @transform_2, window_bounds = array<i64: 1, 256>}, {pipeline_mode = #tpu.pipeline_mode<synchronous>, transform_indices = @transform_3, window_bounds = array<i64: 9, 256, 256>}, {pipeline_mode = #tpu.pipeline_mode<synchronous>, transform_indices = @transform_4, window_bounds = array<i64: 1, 256>}, {pipeline_mode = #tpu.pipeline_mode<synchronous>, transform_indices = @transform_5, window_bounds = array<i64: 256, 1024>}, {pipeline_mode = #tpu.pipeline_mode<synchronous>, transform_indices = @transform_6, window_bounds = array<i64: 1, 1024>}, {pipeline_mode = #tpu.pipeline_mode<synchronous>, transform_indices = @transform_7, window_bounds = array<i64: 1024, 256>}, {pipeline_mode = #tpu.pipeline_mode<synchronous>, transform_indices = @transform_8, window_bounds = array<i64: 1, 256>}, {transform_indices = @transform_9, window_bounds = array<i64: 1, 4, 8, 256>}]} {
    %c0 = arith.constant 0 : index
    %c0_0 = arith.constant 0 : index
    %c0_1 = arith.constant 0 : index
    %c0_2 = arith.constant 0 : index
    %0 = vector.load %arg1[%c0, %c0_0, %c0_1, %c0_2] : memref<1x4x8x256xf32, #tpu.memory_space<vmem>>, vector<1x4x8x256xf32>
    %1 = vector.shape_cast %0 : vector<1x4x8x256xf32> to vector<4x8x256xf32>
    %2 = vector.shape_cast %1 : vector<4x8x256xf32> to vector<32x256xf32>
    %c0_3 = arith.constant 0 : index
    %c0_4 = arith.constant 0 : index
    %3 = vector.load %arg2[%c0_3, %c0_4] : memref<256x256xf32, #tpu.memory_space<vmem>>, vector<256x256xf32>
    %cst = arith.constant dense<0.000000e+00> : vector<32x256xf32>
    %4 = tpu.matmul %2, %3, %cst {dimension_numbers = #tpu.dot_dimension_numbers<[1], [0], [0], [1], [0, 0, 1, 1], [], []>} : vector<32x256xf32>, vector<256x256xf32>, vector<32x256xf32> -> vector<32x256xf32>
    %c0_5 = arith.constant 0 : index
    %c0_6 = arith.constant 0 : index
    %5 = vector.load %arg3[%c0_5, %c0_6] : memref<1x256xf32, #tpu.memory_space<vmem>>, vector<1x256xf32>
    %6 = vector.broadcast %5 : vector<1x256xf32> to vector<32x256xf32>
    %7 = arith.addf %4, %6 : vector<32x256xf32>
    %cst_7 = arith.constant 0.000000e+00 : f32
    %8 = vector.broadcast %cst_7 : f32 to vector<6x10x256xf32>
    %c0_8 = arith.constant 0 : index
    %c0_9 = arith.constant 0 : index
    %c0_10 = arith.constant 0 : index
    %9 = vector.load %arg11[%c0_8, %c0_9, %c0_10] : memref<6x10x256xf32, #tpu.memory_space<vmem>>, vector<6x10x256xf32>
    tpu.vector_store %arg11[%c0_8, %c0_9, %c0_10], %8 {strides = array<i32>} : memref<6x10x256xf32, #tpu.memory_space<vmem>>, vector<6x10x256xf32>,
    %10 = vector.shape_cast %7 : vector<32x256xf32> to vector<4x8x256xf32>
    %c1 = arith.constant 1 : index
    %c1_11 = arith.constant 1 : index
    %c0_12 = arith.constant 0 : index
    %11 = vector.load %arg11[%c1, %c1_11, %c0_12] : memref<6x10x256xf32, #tpu.memory_space<vmem>>, vector<4x8x256xf32>
    tpu.vector_store %arg11[%c1, %c1_11, %c0_12], %10 {strides = array<i32>} : memref<6x10x256xf32, #tpu.memory_space<vmem>>, vector<4x8x256xf32>,
    %cst_13 = arith.constant 0.000000e+00 : f32
    %12 = vector.broadcast %cst_13 : f32 to vector<32x256xf32>
    %c0_14 = arith.constant 0 : index
    %c0_15 = arith.constant 0 : index
    %c0_16 = arith.constant 0 : index
    %13 = vector.load %arg11[%c0_14, %c0_15, %c0_16] : memref<6x10x256xf32, #tpu.memory_space<vmem>>, vector<4x8x256xf32>
    %14 = vector.shape_cast %13 : vector<4x8x256xf32> to vector<32x256xf32>
    %c0_17 = arith.constant 0 : index
    %c0_18 = arith.constant 0 : index
    %c0_19 = arith.constant 0 : index
    %15 = vector.load %arg4[%c0_17, %c0_18, %c0_19] : memref<9x256x256xf32, #tpu.memory_space<vmem>>, vector<1x256x256xf32>
    %16 = vector.shape_cast %15 : vector<1x256x256xf32> to vector<256x256xf32>
    %cst_20 = arith.constant dense<0.000000e+00> : vector<32x256xf32>
    %17 = tpu.matmul %14, %16, %cst_20 {dimension_numbers = #tpu.dot_dimension_numbers<[1], [0], [0], [1], [0, 0, 1, 1], [], []>} : vector<32x256xf32>, vector<256x256xf32>, vector<32x256xf32> -> vector<32x256xf32>
    %18 = arith.addf %12, %17 : vector<32x256xf32>
    %c0_21 = arith.constant 0 : index
    %c1_22 = arith.constant 1 : index
    %c0_23 = arith.constant 0 : index
    %19 = vector.load %arg11[%c0_21, %c1_22, %c0_23] : memref<6x10x256xf32, #tpu.memory_space<vmem>>, vector<4x8x256xf32>
    %20 = vector.shape_cast %19 : vector<4x8x256xf32> to vector<32x256xf32>
    %c1_24 = arith.constant 1 : index
    %c0_25 = arith.constant 0 : index
    %c0_26 = arith.constant 0 : index
    %21 = vector.load %arg4[%c1_24, %c0_25, %c0_26] : memref<9x256x256xf32, #tpu.memory_space<vmem>>, vector<1x256x256xf32>
    %22 = vector.shape_cast %21 : vector<1x256x256xf32> to vector<256x256xf32>
    %cst_27 = arith.constant dense<0.000000e+00> : vector<32x256xf32>
    %23 = tpu.matmul %20, %22, %cst_27 {dimension_numbers = #tpu.dot_dimension_numbers<[1], [0], [0], [1], [0, 0, 1, 1], [], []>} : vector<32x256xf32>, vector<256x256xf32>, vector<32x256xf32> -> vector<32x256xf32>
    %24 = arith.addf %18, %23 : vector<32x256xf32>
    %c0_28 = arith.constant 0 : index
    %c2 = arith.constant 2 : index
    %c0_29 = arith.constant 0 : index
    %25 = vector.load %arg11[%c0_28, %c2, %c0_29] : memref<6x10x256xf32, #tpu.memory_space<vmem>>, vector<4x8x256xf32>
    %26 = vector.shape_cast %25 : vector<4x8x256xf32> to vector<32x256xf32>
    %c2_30 = arith.constant 2 : index
    %c0_31 = arith.constant 0 : index
    %c0_32 = arith.constant 0 : index
    %27 = vector.load %arg4[%c2_30, %c0_31, %c0_32] : memref<9x256x256xf32, #tpu.memory_space<vmem>>, vector<1x256x256xf32>
    %28 = vector.shape_cast %27 : vector<1x256x256xf32> to vector<256x256xf32>
    %cst_33 = arith.constant dense<0.000000e+00> : vector<32x256xf32>
    %29 = tpu.matmul %26, %28, %cst_33 {dimension_numbers = #tpu.dot_dimension_numbers<[1], [0], [0], [1], [0, 0, 1, 1], [], []>} : vector<32x256xf32>, vector<256x256xf32>, vector<32x256xf32> -> vector<32x256xf32>
    %30 = arith.addf %24, %29 : vector<32x256xf32>
    %c1_34 = arith.constant 1 : index
    %c0_35 = arith.constant 0 : index
    %c0_36 = arith.constant 0 : index
    %31 = vector.load %arg11[%c1_34, %c0_35, %c0_36] : memref<6x10x256xf32, #tpu.memory_space<vmem>>, vector<4x8x256xf32>
    %32 = vector.shape_cast %31 : vector<4x8x256xf32> to vector<32x256xf32>
    %c3 = arith.constant 3 : index
    %c0_37 = arith.constant 0 : index
    %c0_38 = arith.constant 0 : index
    %33 = vector.load %arg4[%c3, %c0_37, %c0_38] : memref<9x256x256xf32, #tpu.memory_space<vmem>>, vector<1x256x256xf32>
    %34 = vector.shape_cast %33 : vector<1x256x256xf32> to vector<256x256xf32>
    %cst_39 = arith.constant dense<0.000000e+00> : vector<32x256xf32>
    %35 = tpu.matmul %32, %34, %cst_39 {dimension_numbers = #tpu.dot_dimension_numbers<[1], [0], [0], [1], [0, 0, 1, 1], [], []>} : vector<32x256xf32>, vector<256x256xf32>, vector<32x256xf32> -> vector<32x256xf32>
    %36 = arith.addf %30, %35 : vector<32x256xf32>
    %c1_40 = arith.constant 1 : index
    %c1_41 = arith.constant 1 : index
    %c0_42 = arith.constant 0 : index
    %37 = vector.load %arg11[%c1_40, %c1_41, %c0_42] : memref<6x10x256xf32, #tpu.memory_space<vmem>>, vector<4x8x256xf32>
    %38 = vector.shape_cast %37 : vector<4x8x256xf32> to vector<32x256xf32>
    %c4 = arith.constant 4 : index
    %c0_43 = arith.constant 0 : index
    %c0_44 = arith.constant 0 : index
    %39 = vector.load %arg4[%c4, %c0_43, %c0_44] : memref<9x256x256xf32, #tpu.memory_space<vmem>>, vector<1x256x256xf32>
    %40 = vector.shape_cast %39 : vector<1x256x256xf32> to vector<256x256xf32>
    %cst_45 = arith.constant dense<0.000000e+00> : vector<32x256xf32>
    %41 = tpu.matmul %38, %40, %cst_45 {dimension_numbers = #tpu.dot_dimension_numbers<[1], [0], [0], [1], [0, 0, 1, 1], [], []>} : vector<32x256xf32>, vector<256x256xf32>, vector<32x256xf32> -> vector<32x256xf32>
    %42 = arith.addf %36, %41 : vector<32x256xf32>
    %c1_46 = arith.constant 1 : index
    %c2_47 = arith.constant 2 : index
    %c0_48 = arith.constant 0 : index
    %43 = vector.load %arg11[%c1_46, %c2_47, %c0_48] : memref<6x10x256xf32, #tpu.memory_space<vmem>>, vector<4x8x256xf32>
    %44 = vector.shape_cast %43 : vector<4x8x256xf32> to vector<32x256xf32>
    %c5 = arith.constant 5 : index
    %c0_49 = arith.constant 0 : index
    %c0_50 = arith.constant 0 : index
    %45 = vector.load %arg4[%c5, %c0_49, %c0_50] : memref<9x256x256xf32, #tpu.memory_space<vmem>>, vector<1x256x256xf32>
    %46 = vector.shape_cast %45 : vector<1x256x256xf32> to vector<256x256xf32>
    %cst_51 = arith.constant dense<0.000000e+00> : vector<32x256xf32>
    %47 = tpu.matmul %44, %46, %cst_51 {dimension_numbers = #tpu.dot_dimension_numbers<[1], [0], [0], [1], [0, 0, 1, 1], [], []>} : vector<32x256xf32>, vector<256x256xf32>, vector<32x256xf32> -> vector<32x256xf32>
    %48 = arith.addf %42, %47 : vector<32x256xf32>
    %c2_52 = arith.constant 2 : index
    %c0_53 = arith.constant 0 : index
    %c0_54 = arith.constant 0 : index
    %49 = vector.load %arg11[%c2_52, %c0_53, %c0_54] : memref<6x10x256xf32, #tpu.memory_space<vmem>>, vector<4x8x256xf32>
    %50 = vector.shape_cast %49 : vector<4x8x256xf32> to vector<32x256xf32>
    %c6 = arith.constant 6 : index
    %c0_55 = arith.constant 0 : index
    %c0_56 = arith.constant 0 : index
    %51 = vector.load %arg4[%c6, %c0_55, %c0_56] : memref<9x256x256xf32, #tpu.memory_space<vmem>>, vector<1x256x256xf32>
    %52 = vector.shape_cast %51 : vector<1x256x256xf32> to vector<256x256xf32>
    %cst_57 = arith.constant dense<0.000000e+00> : vector<32x256xf32>
    %53 = tpu.matmul %50, %52, %cst_57 {dimension_numbers = #tpu.dot_dimension_numbers<[1], [0], [0], [1], [0, 0, 1, 1], [], []>} : vector<32x256xf32>, vector<256x256xf32>, vector<32x256xf32> -> vector<32x256xf32>
    %54 = arith.addf %48, %53 : vector<32x256xf32>
    %c2_58 = arith.constant 2 : index
    %c1_59 = arith.constant 1 : index
    %c0_60 = arith.constant 0 : index
    %55 = vector.load %arg11[%c2_58, %c1_59, %c0_60] : memref<6x10x256xf32, #tpu.memory_space<vmem>>, vector<4x8x256xf32>
    %56 = vector.shape_cast %55 : vector<4x8x256xf32> to vector<32x256xf32>
    %c7 = arith.constant 7 : index
    %c0_61 = arith.constant 0 : index
    %c0_62 = arith.constant 0 : index
    %57 = vector.load %arg4[%c7, %c0_61, %c0_62] : memref<9x256x256xf32, #tpu.memory_space<vmem>>, vector<1x256x256xf32>
    %58 = vector.shape_cast %57 : vector<1x256x256xf32> to vector<256x256xf32>
    %cst_63 = arith.constant dense<0.000000e+00> : vector<32x256xf32>
    %59 = tpu.matmul %56, %58, %cst_63 {dimension_numbers = #tpu.dot_dimension_numbers<[1], [0], [0], [1], [0, 0, 1, 1], [], []>} : vector<32x256xf32>, vector<256x256xf32>, vector<32x256xf32> -> vector<32x256xf32>
    %60 = arith.addf %54, %59 : vector<32x256xf32>
    %c2_64 = arith.constant 2 : index
    %c2_65 = arith.constant 2 : index
    %c0_66 = arith.constant 0 : index
    %61 = vector.load %arg11[%c2_64, %c2_65, %c0_66] : memref<6x10x256xf32, #tpu.memory_space<vmem>>, vector<4x8x256xf32>
    %62 = vector.shape_cast %61 : vector<4x8x256xf32> to vector<32x256xf32>
    %c8 = arith.constant 8 : index
    %c0_67 = arith.constant 0 : index
    %c0_68 = arith.constant 0 : index
    %63 = vector.load %arg4[%c8, %c0_67, %c0_68] : memref<9x256x256xf32, #tpu.memory_space<vmem>>, vector<1x256x256xf32>
    %64 = vector.shape_cast %63 : vector<1x256x256xf32> to vector<256x256xf32>
    %cst_69 = arith.constant dense<0.000000e+00> : vector<32x256xf32>
    %65 = tpu.matmul %62, %64, %cst_69 {dimension_numbers = #tpu.dot_dimension_numbers<[1], [0], [0], [1], [0, 0, 1, 1], [], []>} : vector<32x256xf32>, vector<256x256xf32>, vector<32x256xf32> -> vector<32x256xf32>
    %66 = arith.addf %60, %65 : vector<32x256xf32>
    %67 = arith.addf %2, %66 : vector<32x256xf32>
    %c0_70 = arith.constant 0 : index
    %c0_71 = arith.constant 0 : index
    %68 = vector.load %arg5[%c0_70, %c0_71] : memref<1x256xf32, #tpu.memory_space<vmem>>, vector<1x256xf32>
    %69 = vector.broadcast %68 : vector<1x256xf32> to vector<32x256xf32>
    %70 = arith.addf %67, %69 : vector<32x256xf32>
    %c0_72 = arith.constant 0 : index
    %c0_73 = arith.constant 0 : index
    %71 = vector.load %arg6[%c0_72, %c0_73] : memref<256x1024xf32, #tpu.memory_space<vmem>>, vector<256x1024xf32>
    %cst_74 = arith.constant dense<0.000000e+00> : vector<32x1024xf32>
    %72 = tpu.matmul %70, %71, %cst_74 {dimension_numbers = #tpu.dot_dimension_numbers<[1], [0], [0], [1], [0, 0, 1, 1], [], []>} : vector<32x256xf32>, vector<256x1024xf32>, vector<32x1024xf32> -> vector<32x1024xf32>
    %c0_75 = arith.constant 0 : index
    %c0_76 = arith.constant 0 : index
    %73 = vector.load %arg7[%c0_75, %c0_76] : memref<1x1024xf32, #tpu.memory_space<vmem>>, vector<1x1024xf32>
    %74 = vector.broadcast %73 : vector<1x1024xf32> to vector<32x1024xf32>
    %75 = arith.addf %72, %74 : vector<32x1024xf32>
    %cst_77 = arith.constant 5.000000e-01 : f32
    %76 = vector.broadcast %cst_77 : f32 to vector<32x1024xf32>
    %77 = arith.mulf %76, %75 : vector<32x1024xf32>
    %78 = arith.mulf %75, %75 : vector<32x1024xf32>
    %79 = arith.mulf %78, %75 : vector<32x1024xf32>
    %cst_78 = arith.constant 4.471500e-02 : f32
    %80 = vector.broadcast %cst_78 : f32 to vector<32x1024xf32>
    %81 = arith.mulf %80, %79 : vector<32x1024xf32>
    %82 = arith.addf %75, %81 : vector<32x1024xf32>
    %cst_79 = arith.constant 0.797884583 : f32
    %83 = vector.broadcast %cst_79 : f32 to vector<32x1024xf32>
    %84 = arith.mulf %83, %82 : vector<32x1024xf32>
    %85 = math.tanh %84 : vector<32x1024xf32>
    %cst_80 = arith.constant 1.000000e+00 : f32
    %86 = vector.broadcast %cst_80 : f32 to vector<32x1024xf32>
    %87 = arith.addf %86, %85 : vector<32x1024xf32>
    %88 = arith.mulf %77, %87 : vector<32x1024xf32>
    %c0_81 = arith.constant 0 : index
    %c0_82 = arith.constant 0 : index
    %89 = vector.load %arg8[%c0_81, %c0_82] : memref<1024x256xf32, #tpu.memory_space<vmem>>, vector<1024x256xf32>
    %cst_83 = arith.constant dense<0.000000e+00> : vector<32x256xf32>
    %90 = tpu.matmul %88, %89, %cst_83 {dimension_numbers = #tpu.dot_dimension_numbers<[1], [0], [0], [1], [0, 0, 1, 1], [], []>} : vector<32x1024xf32>, vector<1024x256xf32>, vector<32x256xf32> -> vector<32x256xf32>
    %c0_84 = arith.constant 0 : index
    %c0_85 = arith.constant 0 : index
    %91 = vector.load %arg9[%c0_84, %c0_85] : memref<1x256xf32, #tpu.memory_space<vmem>>, vector<1x256xf32>
    %92 = vector.broadcast %91 : vector<1x256xf32> to vector<32x256xf32>
    %93 = arith.addf %90, %92 : vector<32x256xf32>
    %94 = arith.addf %70, %93 : vector<32x256xf32>
    %95 = vector.shape_cast %94 : vector<32x256xf32> to vector<4x8x256xf32>
    %c0_86 = arith.constant 0 : index
    %c0_87 = arith.constant 0 : index
    %c0_88 = arith.constant 0 : index
    %c0_89 = arith.constant 0 : index
    %96 = vector.load %arg10[%c0_86, %c0_87, %c0_88, %c0_89] : memref<1x4x8x256xf32, #tpu.memory_space<vmem>>, vector<1x4x8x256xf32>
    %97 = vector.shape_cast %96 : vector<1x4x8x256xf32> to vector<4x8x256xf32>
    %98 = vector.shape_cast %95 : vector<4x8x256xf32> to vector<1x4x8x256xf32>
    tpu.vector_store %arg10[%c0_86, %c0_87, %c0_88, %c0_89], %98 {strides = array<i32>} : memref<1x4x8x256xf32, #tpu.memory_space<vmem>>, vector<1x4x8x256xf32>,
    return
  }
  func.func @transform_0(%arg0: i32) -> (i32, i32, i32, i32) {
    %c0_i32 = arith.constant 0 : i32
    %c0_i32_0 = arith.constant 0 : i32
    %c0_i32_1 = arith.constant 0 : i32
    %c0_i32_2 = arith.constant 0 : i32
    return %arg0, %c0_i32, %c0_i32_0, %c0_i32_1 : i32, i32, i32, i32
  }
  func.func @transform_1(%arg0: i32) -> (i32, i32) {
    %c0_i32 = arith.constant 0 : i32
    %c0_i32_0 = arith.constant 0 : i32
    %c0_i32_1 = arith.constant 0 : i32
    return %c0_i32, %c0_i32_0 : i32, i32
  }
  func.func @transform_2(%arg0: i32) -> (i32, i32) {
    %c0_i32 = arith.constant 0 : i32
    %c0_i32_0 = arith.constant 0 : i32
    %c0_i32_1 = arith.constant 0 : i32
    return %c0_i32, %c0_i32_0 : i32, i32
  }
  func.func @transform_3(%arg0: i32) -> (i32, i32, i32) {
    %c0_i32 = arith.constant 0 : i32
    %c0_i32_0 = arith.constant 0 : i32
    %c0_i32_1 = arith.constant 0 : i32
    %c0_i32_2 = arith.constant 0 : i32
    return %c0_i32, %c0_i32_0, %c0_i32_1 : i32, i32, i32
  }
  func.func @transform_4(%arg0: i32) -> (i32, i32) {
    %c0_i32 = arith.constant 0 : i32
    %c0_i32_0 = arith.constant 0 : i32
    %c0_i32_1 = arith.constant 0 : i32
    return %c0_i32, %c0_i32_0 : i32, i32
  }
  func.func @transform_5(%arg0: i32) -> (i32, i32) {
    %c0_i32 = arith.constant 0 : i32
    %c0_i32_0 = arith.constant 0 : i32
    %c0_i32_1 = arith.constant 0 : i32
    return %c0_i32, %c0_i32_0 : i32, i32
  }
  func.func @transform_6(%arg0: i32) -> (i32, i32) {
    %c0_i32 = arith.constant 0 : i32
    %c0_i32_0 = arith.constant 0 : i32
    %c0_i32_1 = arith.constant 0 : i32
    return %c0_i32, %c0_i32_0 : i32, i32
  }
  func.func @transform_7(%arg0: i32) -> (i32, i32) {
    %c0_i32 = arith.constant 0 : i32
    %c0_i32_0 = arith.constant 0 : i32
    %c0_i32_1 = arith.constant 0 : i32
    return %c0_i32, %c0_i32_0 : i32, i32
  }
  func.func @transform_8(%arg0: i32) -> (i32, i32) {
    %c0_i32 = arith.constant 0 : i32
    %c0_i32_0 = arith.constant 0 : i32
    %c0_i32_1 = arith.constant 0 : i32
    return %c0_i32, %c0_i32_0 : i32, i32
  }
  func.func @transform_9(%arg0: i32) -> (i32, i32, i32, i32) {
    %c0_i32 = arith.constant 0 : i32
    %c0_i32_0 = arith.constant 0 : i32
    %c0_i32_1 = arith.constant 0 : i32
    %c0_i32_2 = arith.constant 0 : i32
    return %arg0, %c0_i32, %c0_i32_0, %c0_i32_1 : i32, i32, i32, i32
  }
}

</mosaic_0001>

<llo_original>
// kernel: tpu_custom_call.1
$region0: #{tpu_custom_call.1}
  #allocation0 [shape = 'u32[]', space=smem, size = 0x4, offset = 0x4, fixed_abs, tag = 'smem constant byte address 0x4 - core index']
  #allocation1 [shape = 'u32[144,128]{1,0:T(1,128)}', space=vmem, size = 0x12000, scoped, tag = 'internal scratch']
  #allocation2 [shape = 'f32[6,10,256]{2,1,0:T(8,128)}', space=vmem, size = 0x18000, scoped, tag = 'scratch operand']
  %s0 = inlined_call_operand.hbm [shape: f32[2,4,8,256], index: 0, kind: input, shape index: {}]
  %s1 = inlined_call_operand.hbm [shape: f32[256,256], index: 1, kind: input, shape index: {}]
  %s2 = inlined_call_operand.hbm [shape: f32[1,256], index: 2, kind: input, shape index: {}]
  %s3 = inlined_call_operand.hbm [shape: f32[9,256,256], index: 3, kind: input, shape index: {}]
  %s4 = inlined_call_operand.hbm [shape: f32[1,256], index: 4, kind: input, shape index: {}]
  %s5 = inlined_call_operand.hbm [shape: f32[256,1024], index: 5, kind: input, shape index: {}]
  %s6 = inlined_call_operand.hbm [shape: f32[1,1024], index: 6, kind: input, shape index: {}]
  %s7 = inlined_call_operand.hbm [shape: f32[1024,256], index: 7, kind: input, shape index: {}]
  %s8 = inlined_call_operand.hbm [shape: f32[1,256], index: 8, kind: input, shape index: {}]
  %s9 = inlined_call_operand.hbm [shape: f32[2,4,8,256], index: 9, kind: output, shape index: {}]
  %s10 = sld [smem:[#allocation0]]
  $region105: #{tpu_custom_call.1} parent=0
    _
  %s12 = ssub.s32 1, %s10
  %s13 = scalar_select 0, %s12, %s10
  $region1: #{tpu_custom_call.1} parent=0
    #allocation3 [shape = 'u8[65536]{0}', space=vmem, size = 0x10000, scoped, tag = 'input window, operand 0']
    #allocation4 [shape = 's32[2]{0}', space=sflag, size = 0x8, scoped, tag = 'scoped memory for tpu_custom_call.1']
    #allocation5 [shape = 's32[2]{0}', space=sflag, size = 0x8, scoped, tag = 'scoped memory for tpu_custom_call.1']
    #allocation6 [shape = 'u8[262144]{0}', space=vmem, size = 0x40000, scoped, tag = 'input window, operand 1, single buffered']
    #allocation7 [shape = 's32[1]{0}', space=sflag, size = 0x4, scoped, tag = 'scoped memory for tpu_custom_call.1']
    #allocation8 [shape = 'u8[1024]{0}', space=vmem, size = 0x400, scoped, tag = 'input window, operand 2, single buffered']
    #allocation9 [shape = 'u8[2359296]{0}', space=vmem, size = 0x240000, scoped, tag = 'input window, operand 3, single buffered']
    #allocation10 [shape = 's32[1]{0}', space=sflag, size = 0x4, scoped, tag = 'scoped memory for tpu_custom_call.1']
    #allocation11 [shape = 'u8[1024]{0}', space=vmem, size = 0x400, scoped, tag = 'input window, operand 4, single buffered']
    #allocation12 [shape = 'u8[1048576]{0}', space=vmem, size = 0x100000, scoped, tag = 'input window, operand 5, single buffered']
    #allocation13 [shape = 's32[1]{0}', space=sflag, size = 0x4, scoped, tag = 'scoped memory for tpu_custom_call.1']
    #allocation14 [shape = 'u8[4096]{0}', space=vmem, size = 0x1000, scoped, tag = 'input window, operand 6, single buffered']
    #allocation15 [shape = 'u8[1048576]{0}', space=vmem, size = 0x100000, scoped, tag = 'input window, operand 7, single buffered']
    #allocation16 [shape = 's32[1]{0}', space=sflag, size = 0x4, scoped, tag = 'scoped memory for tpu_custom_call.1']
    #allocation17 [shape = 'u8[1024]{0}', space=vmem, size = 0x400, scoped, tag = 'input window, operand 8, single buffered']
    #allocation18 [shape = 'u8[65536]{0}', space=vmem, size = 0x10000, scoped, tag = 'output window, operand 0']
    %14 = vsyncpa [#allocation4], 0
    %s15 = scalar_lea.sflag [#allocation4], 1
    %16 = vsyncpa %s15, 0
    %17 = vsyncpa [#allocation7], 0
    %18 = vsyncpa [#allocation10], 0
    %19 = vsyncpa [#allocation13], 0
    %20 = vsyncpa [#allocation16], 0
    %21 = vsyncpa [#allocation5], 0
    %s22 = scalar_lea.sflag [#allocation5], 1
    %23 = vsyncpa %s22, 0
    loop: start=0, step=1, limit=4
    $region2: #{tpu_custom_call.1} parent=1 // loop_pre_header
      _
    $region3: #{tpu_custom_call.1} parent=1 // loop_header
      %s25 = sphi 0, %s29
      %p26 = scmp.ge.s32.totalorder %s25, 4
      %s35 = sphi 0, %s37
      %s38 = sphi 0, %s35
      %s39 = sphi 0, %s38
      %s55 = sphi 0, %s39
      %s59 = sphi 0, %s59
      %s61 = sphi 0, %s59
      %s62 = sphi 0, %s61
      %s76 = sphi 0, %s62
      %s80 = sphi 0, %s80
      %s82 = sphi 0, %s80
      %s83 = sphi 0, %s82
      %s97 = sphi 0, %s83
      %s101 = sphi 0, %s101
      %s103 = sphi 0, %s101
      %s104 = sphi 0, %s103
      %s118 = sphi 0, %s104
      %s122 = sphi 0, %s122
      %s124 = sphi 0, %s122
      %s125 = sphi 0, %s124
      %s139 = sphi 0, %s125
      %s143 = sphi 0, %s143
      %s145 = sphi 0, %s143
      %s146 = sphi 0, %s145
      %s160 = sphi 0, %s146
      %s164 = sphi 0, %s164
      %s166 = sphi 0, %s164
      %s167 = sphi 0, %s166
      %s181 = sphi 0, %s167
      %s185 = sphi 0, %s185
      %s187 = sphi 0, %s185
      %s188 = sphi 0, %s187
      %s202 = sphi 0, %s188
      %s206 = sphi 0, %s206
      %s208 = sphi 0, %s206
      %s209 = sphi 0, %s208
      %s223 = sphi 0, %s209
      %s229 = sphi 0, %s231
      %s232 = sphi 0, %s229
      %s233 = sphi 0, %s232
      %s249 = sphi 0, %s233
    $region4: #{tpu_custom_call.1} parent=1 // loop_header_branch
      %28 = sbr.rel (%p26) target = $region8
    $region5: #{tpu_custom_call.1} parent=1 // loop_body
      %s30 = ssub.s32 %s25, 1
      %s31 = ssub.s32 %s25, 2
      %s32 = sadd.s32 %s25, 1
      %s33 = ssub.s32 %s25, %s32
      %p34 = scmp.eq.s32.totalorder %s33, 0
      %s36 = sadd.s32 %s35, 1
      %s37 = scalar_select %p34, %s35, %s36
      %p40 = pneg %p34
      %p41 = scmp.eq.s32.totalorder %s25, 1
      %p42 = por %p40, %p41
      %p43 = scmp.ne.s32.totalorder %s35, %s38
      %p44 = scmp.eq.s32.totalorder %s25, 0
      %p45 = por %p43, %p44
      %p46 = scmp.ne.s32.totalorder %s35, %s38
      %p47 = scmp.eq.s32.totalorder %s30, 1
      %p48 = por %p46, %p47
      %p49 = scmp.ne.s32.totalorder %s38, %s39
      %p50 = scmp.eq.s32.totalorder %s30, 0
      %p51 = por %p49, %p50
      %p52 = scmp.ne.s32.totalorder %s38, %s39
      %p53 = scmp.eq.s32.totalorder %s31, 1
      %p54 = por %p52, %p53
      %p56 = scmp.ne.s32.totalorder %s39, %s55
      %p57 = scmp.eq.s32.totalorder %s31, 0
      %p58 = por %p56, %p57
      %s60 = sadd.s32 %s59, 1
      %p63 = scmp.eq.s32.totalorder %s25, 1
      %p64 = scmp.ne.s32.totalorder %s59, %s61
      %p65 = scmp.eq.s32.totalorder %s25, 0
      %p66 = por %p64, %p65
      %p67 = scmp.ne.s32.totalorder %s59, %s61
      %p68 = scmp.eq.s32.totalorder %s30, 1
      %p69 = por %p67, %p68
      %p70 = scmp.ne.s32.totalorder %s61, %s62
      %p71 = scmp.eq.s32.totalorder %s30, 0
      %p72 = por %p70, %p71
      %p73 = scmp.ne.s32.totalorder %s61, %s62
      %p74 = scmp.eq.s32.totalorder %s31, 1
      %p75 = por %p73, %p74
      %p77 = scmp.ne.s32.totalorder %s62, %s76
      %p78 = scmp.eq.s32.totalorder %s31, 0
      %p79 = por %p77, %p78
      %s81 = sadd.s32 %s80, 1
      %p84 = scmp.eq.s32.totalorder %s25, 1
      %p85 = scmp.ne.s32.totalorder %s80, %s82
      %p86 = scmp.eq.s32.totalorder %s25, 0
      %p87 = por %p85, %p86
      %p88 = scmp.ne.s32.totalorder %s80, %s82
      %p89 = scmp.eq.s32.totalorder %s30, 1
      %p90 = por %p88, %p89
      %p91 = scmp.ne.s32.totalorder %s82, %s83
      %p92 = scmp.eq.s32.totalorder %s30, 0
      %p93 = por %p91, %p92
      %p94 = scmp.ne.s32.totalorder %s82, %s83
      %p95 = scmp.eq.s32.totalorder %s31, 1
      %p96 = por %p94, %p95
      %p98 = scmp.ne.s32.totalorder %s83, %s97
      %p99 = scmp.eq.s32.totalorder %s31, 0
      %p100 = por %p98, %p99
      %s102 = sadd.s32 %s101, 1
      %p105 = scmp.eq.s32.totalorder %s25, 1
      %p106 = scmp.ne.s32.totalorder %s101, %s103
      %p107 = scmp.eq.s32.totalorder %s25, 0
      %p108 = por %p106, %p107
      %p109 = scmp.ne.s32.totalorder %s101, %s103
      %p110 = scmp.eq.s32.totalorder %s30, 1
      %p111 = por %p109, %p110
      %p112 = scmp.ne.s32.totalorder %s103, %s104
      %p113 = scmp.eq.s32.totalorder %s30, 0
      %p114 = por %p112, %p113
      %p115 = scmp.ne.s32.totalorder %s103, %s104
      %p116 = scmp.eq.s32.totalorder %s31, 1
      %p117 = por %p115, %p116
      %p119 = scmp.ne.s32.totalorder %s104, %s118
      %p120 = scmp.eq.s32.totalorder %s31, 0
      %p121 = por %p119, %p120
      %s123 = sadd.s32 %s122, 1
      %p126 = scmp.eq.s32.totalorder %s25, 1
      %p127 = scmp.ne.s32.totalorder %s122, %s124
      %p128 = scmp.eq.s32.totalorder %s25, 0
      %p129 = por %p127, %p128
      %p130 = scmp.ne.s32.totalorder %s122, %s124
      %p131 = scmp.eq.s32.totalorder %s30, 1
      %p132 = por %p130, %p131
      %p133 = scmp.ne.s32.totalorder %s124, %s125
      %p134 = scmp.eq.s32.totalorder %s30, 0
      %p135 = por %p133, %p134
      %p136 = scmp.ne.s32.totalorder %s124, %s125
      %p137 = scmp.eq.s32.totalorder %s31, 1
      %p138 = por %p136, %p137
      %p140 = scmp.ne.s32.totalorder %s125, %s139
      %p141 = scmp.eq.s32.totalorder %s31, 0
      %p142 = por %p140, %p141
      %s144 = sadd.s32 %s143, 1
      %p147 = scmp.eq.s32.totalorder %s25, 1
      %p148 = scmp.ne.s32.totalorder %s143, %s145
      %p149 = scmp.eq.s32.totalorder %s25, 0
      %p150 = por %p148, %p149
      %p151 = scmp.ne.s32.totalorder %s143, %s145
      %p152 = scmp.eq.s32.totalorder %s30, 1
      %p153 = por %p151, %p152
      %p154 = scmp.ne.s32.totalorder %s145, %s146
      %p155 = scmp.eq.s32.totalorder %s30, 0
      %p156 = por %p154, %p155
      %p157 = scmp.ne.s32.totalorder %s145, %s146
      %p158 = scmp.eq.s32.totalorder %s31, 1
      %p159 = por %p157, %p158
      %p161 = scmp.ne.s32.totalorder %s146, %s160
      %p162 = scmp.eq.s32.totalorder %s31, 0
      %p163 = por %p161, %p162
      %s165 = sadd.s32 %s164, 1
      %p168 = scmp.eq.s32.totalorder %s25, 1
      %p169 = scmp.ne.s32.totalorder %s164, %s166
      %p170 = scmp.eq.s32.totalorder %s25, 0
      %p171 = por %p169, %p170
      %p172 = scmp.ne.s32.totalorder %s164, %s166
      %p173 = scmp.eq.s32.totalorder %s30, 1
      %p174 = por %p172, %p173
      %p175 = scmp.ne.s32.totalorder %s166, %s167
      %p176 = scmp.eq.s32.totalorder %s30, 0
      %p177 = por %p175, %p176
      %p178 = scmp.ne.s32.totalorder %s166, %s167
      %p179 = scmp.eq.s32.totalorder %s31, 1
      %p180 = por %p178, %p179
      %p182 = scmp.ne.s32.totalorder %s167, %s181
      %p183 = scmp.eq.s32.totalorder %s31, 0
      %p184 = por %p182, %p183
      %s186 = sadd.s32 %s185, 1
      %p189 = scmp.eq.s32.totalorder %s25, 1
      %p190 = scmp.ne.s32.totalorder %s185, %s187
      %p191 = scmp.eq.s32.totalorder %s25, 0
      %p192 = por %p190, %p191
      %p193 = scmp.ne.s32.totalorder %s185, %s187
      %p194 = scmp.eq.s32.totalorder %s30, 1
      %p195 = por %p193, %p194
      %p196 = scmp.ne.s32.totalorder %s187, %s188
      %p197 = scmp.eq.s32.totalorder %s30, 0
      %p198 = por %p196, %p197
      %p199 = scmp.ne.s32.totalorder %s187, %s188
      %p200 = scmp.eq.s32.totalorder %s31, 1
      %p201 = por %p199, %p200
      %p203 = scmp.ne.s32.totalorder %s188, %s202
      %p204 = scmp.eq.s32.totalorder %s31, 0
      %p205 = por %p203, %p204
      %s207 = sadd.s32 %s206, 1
      %p210 = scmp.eq.s32.totalorder %s25, 1
      %p211 = scmp.ne.s32.totalorder %s206, %s208
      %p212 = scmp.eq.s32.totalorder %s25, 0
      %p213 = por %p211, %p212
      %p214 = scmp.ne.s32.totalorder %s206, %s208
      %p215 = scmp.eq.s32.totalorder %s30, 1
      %p216 = por %p214, %p215
      %p217 = scmp.ne.s32.totalorder %s208, %s209
      %p218 = scmp.eq.s32.totalorder %s30, 0
      %p219 = por %p217, %p218
      %p220 = scmp.ne.s32.totalorder %s208, %s209
      %p221 = scmp.eq.s32.totalorder %s31, 1
      %p222 = por %p220, %p221
      %p224 = scmp.ne.s32.totalorder %s209, %s223
      %p225 = scmp.eq.s32.totalorder %s31, 0
      %p226 = por %p224, %p225
      %s227 = ssub.s32 %s25, %s32
      %p228 = scmp.eq.s32.totalorder %s227, 0
      %s230 = sadd.s32 %s229, 1
      %s231 = scalar_select %p228, %s229, %s230
      %p234 = pneg %p228
      %p235 = scmp.eq.s32.totalorder %s25, 1
      %p236 = por %p234, %p235
      %p237 = scmp.ne.s32.totalorder %s229, %s232
      %p238 = scmp.eq.s32.totalorder %s25, 0
      %p239 = por %p237, %p238
      %p240 = scmp.ne.s32.totalorder %s229, %s232
      %p241 = scmp.eq.s32.totalorder %s30, 1
      %p242 = por %p240, %p241
      %p243 = scmp.ne.s32.totalorder %s232, %s233
      %p244 = scmp.eq.s32.totalorder %s30, 0
      %p245 = por %p243, %p244
      %p246 = scmp.ne.s32.totalorder %s232, %s233
      %p247 = scmp.eq.s32.totalorder %s31, 1
      %p248 = por %p246, %p247
      %p250 = scmp.ne.s32.totalorder %s233, %s249
      %p251 = scmp.eq.s32.totalorder %s31, 0
      %p252 = por %p250, %p251
      %p253 = scmp.le.s32.totalorder 1, %s25
      %p254 = scmp.lt.s32.totalorder %s25, 3
      %p255 = pnand %p253, %p254
      %p256 = pneg %p255
      // Predicated region
      $region9: #{tpu_custom_call.1} parent=5 // pred_check
        _
      $region10: #{tpu_custom_call.1} parent=5 // pred_check_branch
        %258 = sbr.rel (%p255) target = $region12
      $region11: #{tpu_custom_call.1} parent=5 // pred_region
        %s259 = ssub.s32 %s25, 1
        // Predicated region
        $region13: #{tpu_custom_call.1} parent=11 // pred_check
          %p260 = pneg %p72
        $region14: #{tpu_custom_call.1} parent=11 // pred_check_branch
          %262 = sbr.rel (%p260) target = $region16
        $region15: #{tpu_custom_call.1} parent=11 // pred_region
          %s264 = ssub.s32 8192, 8192
          %265 = vsyncadd [#allocation7], %s264
          %s266 = sshll.u32 [#allocation6], 4
          %s267 = int_to_ptr.vmem [resolvable:$true] %s266
          %272 = dma.hbm_to_vmem [thread:$0]  %s1, 8192, %s267, [#allocation7], 256, 256, 16
        $region16: #{tpu_custom_call.1} parent=11 // pred_fallthru
          _
        // Predicated region
        $region17: #{tpu_custom_call.1} parent=11 // pred_check
          %p273 = pneg %p93
        $region18: #{tpu_custom_call.1} parent=11 // pred_check_branch
          %275 = sbr.rel (%p273) target = $region20
        $region19: #{tpu_custom_call.1} parent=11 // pred_region
          %s277 = ssub.s32 32, 32
          %278 = vsyncadd [#allocation7], %s277
          %s280 = sshll.u32 [#allocation8], 4
          %s281 = int_to_ptr.vmem [resolvable:$true] %s280
          %283 = dma.hbm_to_vmem [thread:$0]  %s2, 32, %s281, [#allocation7]
        $region20: #{tpu_custom_call.1} parent=11 // pred_fallthru
          _
        // Predicated region
        $region21: #{tpu_custom_call.1} parent=11 // pred_check
          %p284 = pneg %p114
        $region22: #{tpu_custom_call.1} parent=11 // pred_check_branch
          %286 = sbr.rel (%p284) target = $region24
        $region23: #{tpu_custom_call.1} parent=11 // pred_region
          %s288 = ssub.s32 73728, 73728
          %289 = vsyncadd [#allocation10], %s288
          %s290 = sshll.u32 [#allocation9], 4
          %s291 = int_to_ptr.vmem [resolvable:$true] %s290
          %296 = dma.hbm_to_vmem [thread:$0]  %s3, 73728, %s291, [#allocation10], 256, 256, 16
        $region24: #{tpu_custom_call.1} parent=11 // pred_fallthru
          _
        // Predicated region
        $region25: #{tpu_custom_call.1} parent=11 // pred_check
          %p297 = pneg %p135
        $region26: #{tpu_custom_call.1} parent=11 // pred_check_branch
          %299 = sbr.rel (%p297) target = $region28
        $region27: #{tpu_custom_call.1} parent=11 // pred_region
          %s301 = ssub.s32 32, 32
          %302 = vsyncadd [#allocation10], %s301
          %s304 = sshll.u32 [#allocation11], 4
          %s305 = int_to_ptr.vmem [resolvable:$true] %s304
          %307 = dma.hbm_to_vmem [thread:$0]  %s4, 32, %s305, [#allocation10]
        $region28: #{tpu_custom_call.1} parent=11 // pred_fallthru
          _
        // Predicated region
        $region29: #{tpu_custom_call.1} parent=11 // pred_check
          %p308 = pneg %p156
        $region30: #{tpu_custom_call.1} parent=11 // pred_check_branch
          %310 = sbr.rel (%p308) target = $region32
        $region31: #{tpu_custom_call.1} parent=11 // pred_region
          %s312 = ssub.s32 32768, 32768
          %313 = vsyncadd [#allocation13], %s312
          %s314 = sshll.u32 [#allocation12], 4
          %s315 = int_to_ptr.vmem [resolvable:$true] %s314
          %320 = dma.hbm_to_vmem [thread:$0]  %s5, 32768, %s315, [#allocation13], 1024, 1024, 64
        $region32: #{tpu_custom_call.1} parent=11 // pred_fallthru
          _
        // Predicated region
        $region33: #{tpu_custom_call.1} parent=11 // pred_check
          %p321 = pneg %p177
        $region34: #{tpu_custom_call.1} parent=11 // pred_check_branch
          %323 = sbr.rel (%p321) target = $region36
        $region35: #{tpu_custom_call.1} parent=11 // pred_region
          %s325 = ssub.s32 128, 128
          %326 = vsyncadd [#allocation13], %s325
          %s328 = sshll.u32 [#allocation14], 4
          %s329 = int_to_ptr.vmem [resolvable:$true] %s328
          %331 = dma.hbm_to_vmem [thread:$0]  %s6, 128, %s329, [#allocation13]
        $region36: #{tpu_custom_call.1} parent=11 // pred_fallthru
          _
        // Predicated region
        $region37: #{tpu_custom_call.1} parent=11 // pred_check
          %p332 = pneg %p198
        $region38: #{tpu_custom_call.1} parent=11 // pred_check_branch
          %334 = sbr.rel (%p332) target = $region40
        $region39: #{tpu_custom_call.1} parent=11 // pred_region
          %s336 = ssub.s32 32768, 32768
          %337 = vsyncadd [#allocation16], %s336
          %s338 = sshll.u32 [#allocation15], 4
          %s339 = int_to_ptr.vmem [resolvable:$true] %s338
          %344 = dma.hbm_to_vmem [thread:$0]  %s7, 32768, %s339, [#allocation16], 256, 256, 16
        $region40: #{tpu_custom_call.1} parent=11 // pred_fallthru
          _
        // Predicated region
        $region41: #{tpu_custom_call.1} parent=11 // pred_check
          %p345 = pneg %p219
        $region42: #{tpu_custom_call.1} parent=11 // pred_check_branch
          %347 = sbr.rel (%p345) target = $region44
        $region43: #{tpu_custom_call.1} parent=11 // pred_region
          %s349 = ssub.s32 32, 32
          %350 = vsyncadd [#allocation16], %s349
          %s352 = sshll.u32 [#allocation17], 4
          %s353 = int_to_ptr.vmem [resolvable:$true] %s352
          %355 = dma.hbm_to_vmem [thread:$0]  %s8, 32, %s353, [#allocation16]
        $region44: #{tpu_custom_call.1} parent=11 // pred_fallthru
          _
      $region12: #{tpu_custom_call.1} parent=5 // pred_fallthru
        _
      %p356 = scmp.lt.s32.totalorder %s25, 2
      // Predicated region
      $region45: #{tpu_custom_call.1} parent=5 // pred_check
        %p357 = pneg %p356
      $region46: #{tpu_custom_call.1} parent=5 // pred_check_branch
        %359 = sbr.rel (%p357) target = $region48
      $region47: #{tpu_custom_call.1} parent=5 // pred_region
        // Predicated region
        $region49: #{tpu_custom_call.1} parent=47 // pred_check
          %p360 = pneg %p45
        $region50: #{tpu_custom_call.1} parent=47 // pred_check_branch
          %362 = sbr.rel (%p360) target = $region52
        $region51: #{tpu_custom_call.1} parent=47 // pred_region
          %s363 = sand.u32 %s35, 1
          %s364 = scalar_lea.sflag [#allocation4], %s363
          %s365 = sand.u32 %s35, 1
          %s366 = smul.addr %s365, 64
          %s367 = scalar_lea.vmem [#allocation3], %s366
          %s369 = ssub.s32 1024, 1024
          %370 = vsyncadd %s364, %s369
          %s371 = smul.addr %s25, 8
          %s372 = smul.addr %s371, 128
          %s373 = scalar_lea.hbm %s0, %s372
          %s374 = sshll.u32 %s367, 4
          %s375 = int_to_ptr.vmem [resolvable:$true] %s374
          %380 = dma.hbm_to_vmem [thread:$0]  %s373, 1024, %s375, %s364, 256, 256, 16
        $region52: #{tpu_custom_call.1} parent=47 // pred_fallthru
          _
      $region48: #{tpu_custom_call.1} parent=5 // pred_fallthru
        _
      %p381 = scmp.le.s32.totalorder 1, %s25
      %p382 = scmp.lt.s32.totalorder %s25, 3
      %p383 = pnand %p381, %p382
      %p384 = pneg %p383
      // Predicated region
      $region53: #{tpu_custom_call.1} parent=5 // pred_check
        _
      $region54: #{tpu_custom_call.1} parent=5 // pred_check_branch
        %386 = sbr.rel (%p383) target = $region56
      $region55: #{tpu_custom_call.1} parent=5 // pred_region
        %s387 = ssub.s32 %s25, 1
        %s388 = sand.u32 %s38, 1
        %s389 = scalar_lea.sflag [#allocation4], %s388
        %s390 = sand.u32 %s38, 1
        %s391 = smul.addr %s390, 64
        %s392 = scalar_lea.vmem [#allocation3], %s391
        // Predicated region
        $region57: #{tpu_custom_call.1} parent=55 // pred_check
          %p393 = pneg %p51
        $region58: #{tpu_custom_call.1} parent=55 // pred_check_branch
          %395 = sbr.rel (%p393) target = $region60
        $region59: #{tpu_custom_call.1} parent=55 // pred_region
          %396 = dma.done %s389, 1024
        $region60: #{tpu_custom_call.1} parent=55 // pred_fallthru
          _
        // Predicated region
        $region61: #{tpu_custom_call.1} parent=55 // pred_check
          %p397 = pneg %p72
        $region62: #{tpu_custom_call.1} parent=55 // pred_check_branch
          %399 = sbr.rel (%p397) target = $region64
        $region63: #{tpu_custom_call.1} parent=55 // pred_region
          %400 = dma.done [#allocation7], 8192
        $region64: #{tpu_custom_call.1} parent=55 // pred_fallthru
          _
        // Predicated region
        $region65: #{tpu_custom_call.1} parent=55 // pred_check
          %p401 = pneg %p93
        $region66: #{tpu_custom_call.1} parent=55 // pred_check_branch
          %403 = sbr.rel (%p401) target = $region68
        $region67: #{tpu_custom_call.1} parent=55 // pred_region
          %404 = dma.done [#allocation7], 32
        $region68: #{tpu_custom_call.1} parent=55 // pred_fallthru
          _
        // Predicated region
        $region69: #{tpu_custom_call.1} parent=55 // pred_check
          %p405 = pneg %p114
        $region70: #{tpu_custom_call.1} parent=55 // pred_check_branch
          %407 = sbr.rel (%p405) target = $region72
        $region71: #{tpu_custom_call.1} parent=55 // pred_region
          %408 = dma.done [#allocation10], 73728
        $region72: #{tpu_custom_call.1} parent=55 // pred_fallthru
          _
        // Predicated region
        $region73: #{tpu_custom_call.1} parent=55 // pred_check
          %p409 = pneg %p135
        $region74: #{tpu_custom_call.1} parent=55 // pred_check_branch
          %411 = sbr.rel (%p409) target = $region76
        $region75: #{tpu_custom_call.1} parent=55 // pred_region
          %412 = dma.done [#allocation10], 32
        $region76: #{tpu_custom_call.1} parent=55 // pred_fallthru
          _
        // Predicated region
        $region77: #{tpu_custom_call.1} parent=55 // pred_check
          %p413 = pneg %p156
        $region78: #{tpu_custom_call.1} parent=55 // pred_check_branch
          %415 = sbr.rel (%p413) target = $region80
        $region79: #{tpu_custom_call.1} parent=55 // pred_region
          %416 = dma.done [#allocation13], 32768
        $region80: #{tpu_custom_call.1} parent=55 // pred_fallthru
          _
        // Predicated region
        $region81: #{tpu_custom_call.1} parent=55 // pred_check
          %p417 = pneg %p177
        $region82: #{tpu_custom_call.1} parent=55 // pred_check_branch
          %419 = sbr.rel (%p417) target = $region84
        $region83: #{tpu_custom_call.1} parent=55 // pred_region
          %420 = dma.done [#allocation13], 128
        $region84: #{tpu_custom_call.1} parent=55 // pred_fallthru
          _
        // Predicated region
        $region85: #{tpu_custom_call.1} parent=55 // pred_check
          %p421 = pneg %p198
        $region86: #{tpu_custom_call.1} parent=55 // pred_check_branch
          %423 = sbr.rel (%p421) target = $region88
        $region87: #{tpu_custom_call.1} parent=55 // pred_region
          %424 = dma.done [#allocation16], 32768
        $region88: #{tpu_custom_call.1} parent=55 // pred_fallthru
          _
        // Predicated region
        $region89: #{tpu_custom_call.1} parent=55 // pred_check
          %p425 = pneg %p219
        $region90: #{tpu_custom_call.1} parent=55 // pred_check_branch
          %427 = sbr.rel (%p425) target = $region92
        $region91: #{tpu_custom_call.1} parent=55 // pred_region
          %428 = dma.done [#allocation16], 32
        $region92: #{tpu_custom_call.1} parent=55 // pred_fallthru
          _
        %s429 = sand.u32 %s38, 1
        %s430 = scalar_lea.sflag [#allocation4], %s429
        %s431 = sand.u32 %s38, 1
        %s432 = smul.addr %s431, 64
        %s433 = scalar_lea.vmem [#allocation3], %s432
        %p434 = pneg %p51
        %p435 = pneg %p48
        %p436 = pneg %p72
        %p437 = pneg %p69
        %p438 = pneg %p93
        %p439 = pneg %p90
        %p440 = pneg %p114
        %p441 = pneg %p111
        %p442 = pneg %p135
        %p443 = pneg %p132
        %p444 = pneg %p156
        %p445 = pneg %p153
        %p446 = pneg %p177
        %p447 = pneg %p174
        %p448 = pneg %p198
        %p449 = pneg %p195
        %p450 = pneg %p219
        %p451 = pneg %p216
        %p452 = pneg %p245
        %p453 = pneg %p242
        %s454 = sand.u32 %s232, 1
        %s455 = scalar_lea.sflag [#allocation5], %s454
        %s456 = sand.u32 %s232, 1
        %s457 = smul.addr %s456, 64
        %s458 = scalar_lea.vmem [#allocation18], %s457
        %v459 = vld [vmem:[%s392] sm:$0xff]
        %v460 = vld [vmem:[%s392 + $0x8] sm:$0xff]
        %v461 = vld [vmem:[%s392 + $0x10] sm:$0xff]
        %v462 = vld [vmem:[%s392 + $0x18] sm:$0xff]
        %v463 = vld [vmem:[%s392 + $0x20] sm:$0xff]
        %v464 = vld [vmem:[%s392 + $0x28] sm:$0xff]
        %v465 = vld [vmem:[%s392 + $0x30] sm:$0xff]
        %v466 = vld [vmem:[%s392 + $0x38] sm:$0xff]
        %v467 = vld [vmem:[#allocation6] sm:$0xff]
        %v468 = vld [vmem:[#allocation6 + $0x8] sm:$0xff]
        %v469 = vld [vmem:[#allocation6 + $0x10] sm:$0xff]
        %v470 = vld [vmem:[#allocation6 + $0x18] sm:$0xff]
        %v471 = vld [vmem:[#allocation6 + $0x20] sm:$0xff]
        %v472 = vld [vmem:[#allocation6 + $0x28] sm:$0xff]
        %v473 = vld [vmem:[#allocation6 + $0x30] sm:$0xff]
        %v474 = vld [vmem:[#allocation6 + $0x38] sm:$0xff]
        %v475 = vld [vmem:[#allocation6 + $0x40] sm:$0xff]
        %v476 = vld [vmem:[#allocation6 + $0x48] sm:$0xff]
        %v477 = vld [vmem:[#allocation6 + $0x50] sm:$0xff]
        %v478 = vld [vmem:[#allocation6 + $0x58] sm:$0xff]
        %v479 = vld [vmem:[#allocation6 + $0x60] sm:$0xff]
        %v480 = vld [vmem:[#allocation6 + $0x68] sm:$0xff]
        %v481 = vld [vmem:[#allocation6 + $0x70] sm:$0xff]
        %v482 = vld [vmem:[#allocation6 + $0x78] sm:$0xff]
        %v483 = vld [vmem:[#allocation6 + $0x80] sm:$0xff]
        %v484 = vld [vmem:[#allocation6 + $0x88] sm:$0xff]
        %v485 = vld [vmem:[#allocation6 + $0x90] sm:$0xff]
        %v486 = vld [vmem:[#allocation6 + $0x98] sm:$0xff]
        %v487 = vld [vmem:[#allocation6 + $0xa0] sm:$0xff]
        %v488 = vld [vmem:[#allocation6 + $0xa8] sm:$0xff]
        %v489 = vld [vmem:[#allocation6 + $0xb0] sm:$0xff]
        %v490 = vld [vmem:[#allocation6 + $0xb8] sm:$0xff]
        %v491 = vld [vmem:[#allocation6 + $0xc0] sm:$0xff]
        %v492 = vld [vmem:[#allocation6 + $0xc8] sm:$0xff]
        %v493 = vld [vmem:[#allocation6 + $0xd0] sm:$0xff]
        %v494 = vld [vmem:[#allocation6 + $0xd8] sm:$0xff]
        %v495 = vld [vmem:[#allocation6 + $0xe0] sm:$0xff]
        %v496 = vld [vmem:[#allocation6 + $0xe8] sm:$0xff]
        %v497 = vld [vmem:[#allocation6 + $0xf0] sm:$0xff]
        %v498 = vld [vmem:[#allocation6 + $0xf8] sm:$0xff]
        %v499 = vld [vmem:[#allocation6 + $0x100] sm:$0xff]
        %v500 = vld [vmem:[#allocation6 + $0x108] sm:$0xff]
        %v501 = vld [vmem:[#allocation6 + $0x110] sm:$0xff]
        %v502 = vld [vmem:[#allocation6 + $0x118] sm:$0xff]
        %v503 = vld [vmem:[#allocation6 + $0x120] sm:$0xff]
        %v504 = vld [vmem:[#allocation6 + $0x128] sm:$0xff]
        %v505 = vld [vmem:[#allocation6 + $0x130] sm:$0xff]
        %v506 = vld [vmem:[#allocation6 + $0x138] sm:$0xff]
        %v507 = vld [vmem:[#allocation6 + $0x140] sm:$0xff]
        %v508 = vld [vmem:[#allocation6 + $0x148] sm:$0xff]
        %v509 = vld [vmem:[#allocation6 + $0x150] sm:$0xff]
        %v510 = vld [vmem:[#allocation6 + $0x158] sm:$0xff]
        %v511 = vld [vmem:[#allocation6 + $0x160] sm:$0xff]
        %v512 = vld [vmem:[#allocation6 + $0x168] sm:$0xff]
        %v513 = vld [vmem:[#allocation6 + $0x170] sm:$0xff]
        %v514 = vld [vmem:[#allocation6 + $0x178] sm:$0xff]
        %v515 = vld [vmem:[#allocation6 + $0x180] sm:$0xff]
        %v516 = vld [vmem:[#allocation6 + $0x188] sm:$0xff]
        %v517 = vld [vmem:[#allocation6 + $0x190] sm:$0xff]
        %v518 = vld [vmem:[#allocation6 + $0x198] sm:$0xff]
        %v519 = vld [vmem:[#allocation6 + $0x1a0] sm:$0xff]
        %v520 = vld [vmem:[#allocation6 + $0x1a8] sm:$0xff]
        %v521 = vld [vmem:[#allocation6 + $0x1b0] sm:$0xff]
        %v522 = vld [vmem:[#allocation6 + $0x1b8] sm:$0xff]
        %v523 = vld [vmem:[#allocation6 + $0x1c0] sm:$0xff]
        %v524 = vld [vmem:[#allocation6 + $0x1c8] sm:$0xff]
        %v525 = vld [vmem:[#allocation6 + $0x1d0] sm:$0xff]
        %v526 = vld [vmem:[#allocation6 + $0x1d8] sm:$0xff]
        %v527 = vld [vmem:[#allocation6 + $0x1e0] sm:$0xff]
        %v528 = vld [vmem:[#allocation6 + $0x1e8] sm:$0xff]
        %v529 = vld [vmem:[#allocation6 + $0x1f0] sm:$0xff]
        %v530 = vld [vmem:[#allocation6 + $0x1f8] sm:$0xff]
        %v531 = vld [vmem:[#allocation8] sm:$0x3]
        %v533 = vlaneseq
        %v534 = vshrl.u32 %v533, 7
        %v535 = vsub.s32 0, %v534
        %v536 = vrot.slane %v531, %v535
        %v537 = vlaneseq
        %v538 = vshrl.u32 %v537, 7
        %v539 = vsub.s32 1, %v538
        %v540 = vrot.slane %v531, %v539
        %543 = vmatprep.subr.mxu0 %v468
        %544 = vmatpush1.msra.mxu0 %v467
        %545 = vmatprep.subr.mxu0 %v470
        %546 = vmatpush1.msra.mxu0 %v469
        %547 = vmatprep.subr.mxu0 %v472
        %548 = vmatpush1.msra.mxu0 %v471
        %549 = vmatprep.subr.mxu0 %v474
        %550 = vmatpush1.msra.mxu0 %v473
        %551 = vmatprep.subr.mxu0 %v476
        %552 = vmatpush1.msra.mxu0 %v475
        %553 = vmatprep.subr.mxu0 %v478
        %554 = vmatpush1.msra.mxu0 %v477
        %555 = vmatprep.subr.mxu0 %v480
        %556 = vmatpush1.msra.mxu0 %v479
        %557 = vmatprep.subr.mxu0 %v482
        %558 = vmatpush1.msra.mxu0 %v481
        %559 = vmatprep.subr.mxu0 %v484
        %560 = vmatpush1.msra.mxu0 %v483
        %561 = vmatprep.subr.mxu0 %v486
        %562 = vmatpush1.msra.mxu0 %v485
        %563 = vmatprep.subr.mxu0 %v488
        %564 = vmatpush1.msra.mxu0 %v487
        %565 = vmatprep.subr.mxu0 %v490
        %566 = vmatpush1.msra.mxu0 %v489
        %567 = vmatprep.subr.mxu0 %v492
        %568 = vmatpush1.msra.mxu0 %v491
        %569 = vmatprep.subr.mxu0 %v494
        %570 = vmatpush1.msra.mxu0 %v493
        %571 = vmatprep.subr.mxu0 %v496
        %572 = vmatpush1.msra.mxu0 %v495
        %573 = vmatprep.subr.mxu0 %v498
        %574 = vmatpush1.msra.mxu0 %v497
        %575 = vmatprep.subr.mxu0 %v500
        %576 = vmatpush1.msra.mxu0 %v499
        %577 = vmatprep.subr.mxu0 %v502
        %578 = vmatpush1.msra.mxu0 %v501
        %579 = vmatprep.subr.mxu0 %v504
        %580 = vmatpush1.msra.mxu0 %v503
        %581 = vmatprep.subr.mxu0 %v506
        %582 = vmatpush1.msra.mxu0 %v505
        %583 = vmatprep.subr.mxu0 %v508
        %584 = vmatpush1.msra.mxu0 %v507
        %585 = vmatprep.subr.mxu0 %v510
        %586 = vmatpush1.msra.mxu0 %v509
        %587 = vmatprep.subr.mxu0 %v512
        %588 = vmatpush1.msra.mxu0 %v511
        %589 = vmatprep.subr.mxu0 %v514
        %590 = vmatpush1.msra.mxu0 %v513
        %591 = vmatprep.subr.mxu0 %v516
        %592 = vmatpush1.msra.mxu0 %v515
        %593 = vmatprep.subr.mxu0 %v518
        %594 = vmatpush1.msra.mxu0 %v517
        %595 = vmatprep.subr.mxu0 %v520
        %596 = vmatpush1.msra.mxu0 %v519
        %597 = vmatprep.subr.mxu0 %v522
        %598 = vmatpush1.msra.mxu0 %v521
        %599 = vmatprep.subr.mxu0 %v524
        %600 = vmatpush1.msra.mxu0 %v523
        %601 = vmatprep.subr.mxu0 %v526
        %602 = vmatpush1.msra.mxu0 %v525
        %603 = vmatprep.subr.mxu0 %v528
        %604 = vmatpush1.msra.mxu0 %v527
        %605 = vmatprep.subr.mxu0 %v530
        %606 = vmatpush1.msra.mxu0 %v529
        %607 = vmatprep.mubr.f32.mxu0 %v460
        %608 = vmatmul.mubr.f32.gmra.mrb[0].mxu0 %v459
        %v609 = vpop.f32.mrb[0].mxu0
        %v610 = vadd.f32 %v536, %v609
        %v611 = vpop.f32.mrb[0].mxu0
        %v612 = vadd.f32 %v540, %v611
        %613 = vmatprep.mubr.f32.mxu0 %v462
        %614 = vmatmul.mubr.f32.gmra.mrb[0].mxu0 %v461
        %v615 = vpop.f32.mrb[0].mxu0
        %v616 = vadd.f32 %v536, %v615
        %v617 = vpop.f32.mrb[0].mxu0
        %v618 = vadd.f32 %v540, %v617
        %619 = vmatprep.mubr.f32.mxu0 %v464
        %620 = vmatmul.mubr.f32.gmra.mrb[0].mxu0 %v463
        %v621 = vpop.f32.mrb[0].mxu0
        %v622 = vadd.f32 %v536, %v621
        %v623 = vpop.f32.mrb[0].mxu0
        %v624 = vadd.f32 %v540, %v623
        %625 = vmatprep.mubr.f32.mxu0 %v466
        %626 = vmatmul.mubr.f32.gmra.mrb[0].mxu0 %v465
        %v627 = vpop.f32.mrb[0].mxu0
        %v628 = vadd.f32 %v536, %v627
        %v629 = vpop.f32.mrb[0].mxu0
        %v630 = vadd.f32 %v540, %v629
        %631 = vdwg.mxu0
        %632 = vst [vmem:[#allocation2] sm:$0xff] 0.0
        %633 = vst [vmem:[#allocation2 + $0x8] sm:$0xff] 0.0
        %634 = vst [vmem:[#allocation2 + $0x10] sm:$0x3] 0.0
        %635 = vst [vmem:[#allocation2 + $0x18] sm:$0x3] 0.0
        %636 = vst [vmem:[#allocation2 + $0x20] sm:$0xff] 0.0
        %637 = vst [vmem:[#allocation2 + $0x28] sm:$0xff] 0.0
        %638 = vst [vmem:[#allocation2 + $0x30] sm:$0x3] 0.0
        %639 = vst [vmem:[#allocation2 + $0x38] sm:$0x3] 0.0
        %640 = vst [vmem:[#allocation2 + $0x40] sm:$0xff] 0.0
        %641 = vst [vmem:[#allocation2 + $0x48] sm:$0xff] 0.0
        %642 = vst [vmem:[#allocation2 + $0x50] sm:$0x3] 0.0
        %643 = vst [vmem:[#allocation2 + $0x58] sm:$0x3] 0.0
        %644 = vst [vmem:[#allocation2 + $0x60] sm:$0xff] 0.0
        %645 = vst [vmem:[#allocation2 + $0x68] sm:$0xff] 0.0
        %646 = vst [vmem:[#allocation2 + $0x70] sm:$0x3] 0.0
        %647 = vst [vmem:[#allocation2 + $0x78] sm:$0x3] 0.0
        %648 = vst [vmem:[#allocation2 + $0x80] sm:$0xff] 0.0
        %649 = vst [vmem:[#allocation2 + $0x88] sm:$0xff] 0.0
        %650 = vst [vmem:[#allocation2 + $0x90] sm:$0x3] 0.0
        %651 = vst [vmem:[#allocation2 + $0x98] sm:$0x3] 0.0
        %652 = vst [vmem:[#allocation2 + $0xa0] sm:$0xff] 0.0
        %653 = vst [vmem:[#allocation2 + $0xa8] sm:$0xff] 0.0
        %654 = vst [vmem:[#allocation2 + $0xb0] sm:$0x3] 0.0
        %655 = vst [vmem:[#allocation2 + $0xb8] sm:$0x3] 0.0
        %v664 = vrot.slane %v610, 7
        %v665 = vrot.slane %v612, 7
        %v666 = vrot.slane %v616, 7
        %v667 = vrot.slane %v618, 7
        %v668 = vrot.slane %v622, 7
        %v669 = vrot.slane %v624, 7
        %v670 = vrot.slane %v628, 7
        %v671 = vrot.slane %v630, 7
        %s680 = scalar_lea.vmem [#allocation2], 32
        %681 = vst [vmem:[%s680] sm:$0xfe] %v664
        %682 = vst [vmem:[%s680 + $0x8] sm:$0xfe] %v665
        %683 = vst [vmem:[%s680 + $0x10] sm:$0x1] %v664
        %684 = vst [vmem:[%s680 + $0x18] sm:$0x1] %v665
        %685 = vst [vmem:[%s680 + $0x20] sm:$0xfe] %v666
        %686 = vst [vmem:[%s680 + $0x28] sm:$0xfe] %v667
        %687 = vst [vmem:[%s680 + $0x30] sm:$0x1] %v666
        %688 = vst [vmem:[%s680 + $0x38] sm:$0x1] %v667
        %689 = vst [vmem:[%s680 + $0x40] sm:$0xfe] %v668
        %690 = vst [vmem:[%s680 + $0x48] sm:$0xfe] %v669
        %691 = vst [vmem:[%s680 + $0x50] sm:$0x1] %v668
        %692 = vst [vmem:[%s680 + $0x58] sm:$0x1] %v669
        %693 = vst [vmem:[%s680 + $0x60] sm:$0xfe] %v670
        %694 = vst [vmem:[%s680 + $0x68] sm:$0xfe] %v671
        %695 = vst [vmem:[%s680 + $0x70] sm:$0x1] %v670
        %696 = vst [vmem:[%s680 + $0x78] sm:$0x1] %v671
        %v697 = vld [vmem:[#allocation2] sm:$0xff]
        %v698 = vld [vmem:[#allocation2 + $0x8] sm:$0xff]
        %v699 = vld [vmem:[#allocation2 + $0x20] sm:$0xff]
        %v700 = vld [vmem:[#allocation2 + $0x28] sm:$0xff]
        %v701 = vld [vmem:[#allocation2 + $0x40] sm:$0xff]
        %v702 = vld [vmem:[#allocation2 + $0x48] sm:$0xff]
        %v703 = vld [vmem:[#allocation2 + $0x60] sm:$0xff]
        %v704 = vld [vmem:[#allocation2 + $0x68] sm:$0xff]
        %v705 = vld [vmem:[#allocation9] sm:$0xff]
        %v706 = vld [vmem:[#allocation9 + $0x8] sm:$0xff]
        %v707 = vld [vmem:[#allocation9 + $0x10] sm:$0xff]
        %v708 = vld [vmem:[#allocation9 + $0x18] sm:$0xff]
        %v709 = vld [vmem:[#allocation9 + $0x20] sm:$0xff]
        %v710 = vld [vmem:[#allocation9 + $0x28] sm:$0xff]
        %v711 = vld [vmem:[#allocation9 + $0x30] sm:$0xff]
        %v712 = vld [vmem:[#allocation9 + $0x38] sm:$0xff]
        %v713 = vld [vmem:[#allocation9 + $0x40] sm:$0xff]
        %v714 = vld [vmem:[#allocation9 + $0x48] sm:$0xff]
        %v715 = vld [vmem:[#allocation9 + $0x50] sm:$0xff]
        %v716 = vld [vmem:[#allocation9 + $0x58] sm:$0xff]
        %v717 = vld [vmem:[#allocation9 + $0x60] sm:$0xff]
        %v718 = vld [vmem:[#allocation9 + $0x68] sm:$0xff]
        %v719 = vld [vmem:[#allocation9 + $0x70] sm:$0xff]
        %v720 = vld [vmem:[#allocation9 + $0x78] sm:$0xff]
        %v721 = vld [vmem:[#allocation9 + $0x80] sm:$0xff]
        %v722 = vld [vmem:[#allocation9 + $0x88] sm:$0xff]
        %v723 = vld [vmem:[#allocation9 + $0x90] sm:$0xff]
        %v724 = vld [vmem:[#allocation9 + $0x98] sm:$0xff]
        %v725 = vld [vmem:[#allocation9 + $0xa0] sm:$0xff]
        %v726 = vld [vmem:[#allocation9 + $0xa8] sm:$0xff]
        %v727 = vld [vmem:[#allocation9 + $0xb0] sm:$0xff]
        %v728 = vld [vmem:[#allocation9 + $0xb8] sm:$0xff]
        %v729 = vld [vmem:[#allocation9 + $0xc0] sm:$0xff]
        %v730 = vld [vmem:[#allocation9 + $0xc8] sm:$0xff]
        %v731 = vld [vmem:[#allocation9 + $0xd0] sm:$0xff]
        %v732 = vld [vmem:[#allocation9 + $0xd8] sm:$0xff]
        %v733 = vld [vmem:[#allocation9 + $0xe0] sm:$0xff]
        %v734 = vld [vmem:[#allocation9 + $0xe8] sm:$0xff]
        %v735 = vld [vmem:[#allocation9 + $0xf0] sm:$0xff]
        %v736 = vld [vmem:[#allocation9 + $0xf8] sm:$0xff]
        %v737 = vld [vmem:[#allocation9 + $0x100] sm:$0xff]
        %v738 = vld [vmem:[#allocation9 + $0x108] sm:$0xff]
        %v739 = vld [vmem:[#allocation9 + $0x110] sm:$0xff]
        %v740 = vld [vmem:[#allocation9 + $0x118] sm:$0xff]
        %v741 = vld [vmem:[#allocation9 + $0x120] sm:$0xff]
        %v742 = vld [vmem:[#allocation9 + $0x128] sm:$0xff]
        %v743 = vld [vmem:[#allocation9 + $0x130] sm:$0xff]
        %v744 = vld [vmem:[#allocation9 + $0x138] sm:$0xff]
        %v745 = vld [vmem:[#allocation9 + $0x140] sm:$0xff]
        %v746 = vld [vmem:[#allocation9 + $0x148] sm:$0xff]
        %v747 = vld [vmem:[#allocation9 + $0x150] sm:$0xff]
        %v748 = vld [vmem:[#allocation9 + $0x158] sm:$0xff]
        %v749 = vld [vmem:[#allocation9 + $0x160] sm:$0xff]
        %v750 = vld [vmem:[#allocation9 + $0x168] sm:$0xff]
        %v751 = vld [vmem:[#allocation9 + $0x170] sm:$0xff]
        %v752 = vld [vmem:[#allocation9 + $0x178] sm:$0xff]
        %v753 = vld [vmem:[#allocation9 + $0x180] sm:$0xff]
        %v754 = vld [vmem:[#allocation9 + $0x188] sm:$0xff]
        %v755 = vld [vmem:[#allocation9 + $0x190] sm:$0xff]
        %v756 = vld [vmem:[#allocation9 + $0x198] sm:$0xff]
        %v757 = vld [vmem:[#allocation9 + $0x1a0] sm:$0xff]
        %v758 = vld [vmem:[#allocation9 + $0x1a8] sm:$0xff]
        %v759 = vld [vmem:[#allocation9 + $0x1b0] sm:$0xff]
        %v760 = vld [vmem:[#allocation9 + $0x1b8] sm:$0xff]
        %v761 = vld [vmem:[#allocation9 + $0x1c0] sm:$0xff]
        %v762 = vld [vmem:[#allocation9 + $0x1c8] sm:$0xff]
        %v763 = vld [vmem:[#allocation9 + $0x1d0] sm:$0xff]
        %v764 = vld [vmem:[#allocation9 + $0x1d8] sm:$0xff]
        %v765 = vld [vmem:[#allocation9 + $0x1e0] sm:$0xff]
        %v766 = vld [vmem:[#allocation9 + $0x1e8] sm:$0xff]
        %v767 = vld [vmem:[#allocation9 + $0x1f0] sm:$0xff]
        %v768 = vld [vmem:[#allocation9 + $0x1f8] sm:$0xff]
        %v769 = vld [vmem:[#allocation2] sm:$0xfe]
        %v770 = vld [vmem:[#allocation2 + $0x8] sm:$0xfe]
        %v771 = vld [vmem:[#allocation2 + $0x10] sm:$0x1]
        %v772 = vld [vmem:[#allocation2 + $0x18] sm:$0x1]
        %v773 = vld [vmem:[#allocation2 + $0x20] sm:$0xfe]
        %v774 = vld [vmem:[#allocation2 + $0x28] sm:$0xfe]
        %v775 = vld [vmem:[#allocation2 + $0x30] sm:$0x1]
        %v776 = vld [vmem:[#allocation2 + $0x38] sm:$0x1]
        %v777 = vld [vmem:[#allocation2 + $0x40] sm:$0xfe]
        %v778 = vld [vmem:[#allocation2 + $0x48] sm:$0xfe]
        %v779 = vld [vmem:[#allocation2 + $0x50] sm:$0x1]
        %v780 = vld [vmem:[#allocation2 + $0x58] sm:$0x1]
        %v781 = vld [vmem:[#allocation2 + $0x60] sm:$0xfe]
        %v782 = vld [vmem:[#allocation2 + $0x68] sm:$0xfe]
        %v783 = vld [vmem:[#allocation2 + $0x70] sm:$0x1]
        %v784 = vld [vmem:[#allocation2 + $0x78] sm:$0x1]
        %vm801 = vcmask 1046528
        %v802 = vrot.slane %v769, 1
        %v803 = vrot.slane %v771, 1
        %v804 = vsel %vm801, %v802, %v803
        %v805 = vrot.slane %v770, 1
        %v806 = vrot.slane %v772, 1
        %v807 = vsel %vm801, %v805, %v806
        %v808 = vrot.slane %v773, 1
        %v809 = vrot.slane %v775, 1
        %v810 = vsel %vm801, %v808, %v809
        %v811 = vrot.slane %v774, 1
        %v812 = vrot.slane %v776, 1
        %v813 = vsel %vm801, %v811, %v812
        %v814 = vrot.slane %v777, 1
        %v815 = vrot.slane %v779, 1
        %v816 = vsel %vm801, %v814, %v815
        %v817 = vrot.slane %v778, 1
        %v818 = vrot.slane %v780, 1
        %v819 = vsel %vm801, %v817, %v818
        %v820 = vrot.slane %v781, 1
        %v821 = vrot.slane %v783, 1
        %v822 = vsel %vm801, %v820, %v821
        %v823 = vrot.slane %v782, 1
        %v824 = vrot.slane %v784, 1
        %v825 = vsel %vm801, %v823, %v824
        %s834 = scalar_lea.vmem [#allocation9], 512
        %v835 = vld [vmem:[%s834] sm:$0xff]
        %v836 = vld [vmem:[%s834 + $0x8] sm:$0xff]
        %v837 = vld [vmem:[%s834 + $0x10] sm:$0xff]
        %v838 = vld [vmem:[%s834 + $0x18] sm:$0xff]
        %v839 = vld [vmem:[%s834 + $0x20] sm:$0xff]
        %v840 = vld [vmem:[%s834 + $0x28] sm:$0xff]
        %v841 = vld [vmem:[%s834 + $0x30] sm:$0xff]
        %v842 = vld [vmem:[%s834 + $0x38] sm:$0xff]
        %v843 = vld [vmem:[%s834 + $0x40] sm:$0xff]
        %v844 = vld [vmem:[%s834 + $0x48] sm:$0xff]
        %v845 = vld [vmem:[%s834 + $0x50] sm:$0xff]
        %v846 = vld [vmem:[%s834 + $0x58] sm:$0xff]
        %v847 = vld [vmem:[%s834 + $0x60] sm:$0xff]
        %v848 = vld [vmem:[%s834 + $0x68] sm:$0xff]
        %v849 = vld [vmem:[%s834 + $0x70] sm:$0xff]
        %v850 = vld [vmem:[%s834 + $0x78] sm:$0xff]
        %v851 = vld [vmem:[%s834 + $0x80] sm:$0xff]
        %v852 = vld [vmem:[%s834 + $0x88] sm:$0xff]
        %v853 = vld [vmem:[%s834 + $0x90] sm:$0xff]
        %v854 = vld [vmem:[%s834 + $0x98] sm:$0xff]
        %v855 = vld [vmem:[%s834 + $0xa0] sm:$0xff]
        %v856 = vld [vmem:[%s834 + $0xa8] sm:$0xff]
        %v857 = vld [vmem:[%s834 + $0xb0] sm:$0xff]
        %v858 = vld [vmem:[%s834 + $0xb8] sm:$0xff]
        %v859 = vld [vmem:[%s834 + $0xc0] sm:$0xff]
        %v860 = vld [vmem:[%s834 + $0xc8] sm:$0xff]
        %v861 = vld [vmem:[%s834 + $0xd0] sm:$0xff]
        %v862 = vld [vmem:[%s834 + $0xd8] sm:$0xff]
        %v863 = vld [vmem:[%s834 + $0xe0] sm:$0xff]
        %v864 = vld [vmem:[%s834 + $0xe8] sm:$0xff]
        %v865 = vld [vmem:[%s834 + $0xf0] sm:$0xff]
        %v866 = vld [vmem:[%s834 + $0xf8] sm:$0xff]
        %v867 = vld [vmem:[%s834 + $0x100] sm:$0xff]
        %v868 = vld [vmem:[%s834 + $0x108] sm:$0xff]
        %v869 = vld [vmem:[%s834 + $0x110] sm:$0xff]
        %v870 = vld [vmem:[%s834 + $0x118] sm:$0xff]
        %v871 = vld [vmem:[%s834 + $0x120] sm:$0xff]
        %v872 = vld [vmem:[%s834 + $0x128] sm:$0xff]
        %v873 = vld [vmem:[%s834 + $0x130] sm:$0xff]
        %v874 = vld [vmem:[%s834 + $0x138] sm:$0xff]
        %v875 = vld [vmem:[%s834 + $0x140] sm:$0xff]
        %v876 = vld [vmem:[%s834 + $0x148] sm:$0xff]
        %v877 = vld [vmem:[%s834 + $0x150] sm:$0xff]
        %v878 = vld [vmem:[%s834 + $0x158] sm:$0xff]
        %v879 = vld [vmem:[%s834 + $0x160] sm:$0xff]
        %v880 = vld [vmem:[%s834 + $0x168] sm:$0xff]
        %v881 = vld [vmem:[%s834 + $0x170] sm:$0xff]
        %v882 = vld [vmem:[%s834 + $0x178] sm:$0xff]
        %v883 = vld [vmem:[%s834 + $0x180] sm:$0xff]
        %v884 = vld [vmem:[%s834 + $0x188] sm:$0xff]
        %v885 = vld [vmem:[%s834 + $0x190] sm:$0xff]
        %v886 = vld [vmem:[%s834 + $0x198] sm:$0xff]
        %v887 = vld [vmem:[%s834 + $0x1a0] sm:$0xff]
        %v888 = vld [vmem:[%s834 + $0x1a8] sm:$0xff]
        %v889 = vld [vmem:[%s834 + $0x1b0] sm:$0xff]
        %v890 = vld [vmem:[%s834 + $0x1b8] sm:$0xff]
        %v891 = vld [vmem:[%s834 + $0x1c0] sm:$0xff]
        %v892 = vld [vmem:[%s834 + $0x1c8] sm:$0xff]
        %v893 = vld [vmem:[%s834 + $0x1d0] sm:$0xff]
        %v894 = vld [vmem:[%s834 + $0x1d8] sm:$0xff]
        %v895 = vld [vmem:[%s834 + $0x1e0] sm:$0xff]
        %v896 = vld [vmem:[%s834 + $0x1e8] sm:$0xff]
        %v897 = vld [vmem:[%s834 + $0x1f0] sm:$0xff]
        %v898 = vld [vmem:[%s834 + $0x1f8] sm:$0xff]
        %899 = vmatprep.subr.mxu0 %v836
        %900 = vmatpush1.msra.mxu0 %v835
        %901 = vmatprep.subr.mxu0 %v838
        %902 = vmatpush1.msra.mxu0 %v837
        %903 = vmatprep.subr.mxu0 %v840
        %904 = vmatpush1.msra.mxu0 %v839
        %905 = vmatprep.subr.mxu0 %v842
        %906 = vmatpush1.msra.mxu0 %v841
        %907 = vmatprep.subr.mxu0 %v844
        %908 = vmatpush1.msra.mxu0 %v843
        %909 = vmatprep.subr.mxu0 %v846
        %910 = vmatpush1.msra.mxu0 %v845
        %911 = vmatprep.subr.mxu0 %v848
        %912 = vmatpush1.msra.mxu0 %v847
        %913 = vmatprep.subr.mxu0 %v850
        %914 = vmatpush1.msra.mxu0 %v849
        %915 = vmatprep.subr.mxu0 %v852
        %916 = vmatpush1.msra.mxu0 %v851
        %917 = vmatprep.subr.mxu0 %v854
        %918 = vmatpush1.msra.mxu0 %v853
        %919 = vmatprep.subr.mxu0 %v856
        %920 = vmatpush1.msra.mxu0 %v855
        %921 = vmatprep.subr.mxu0 %v858
        %922 = vmatpush1.msra.mxu0 %v857
        %923 = vmatprep.subr.mxu0 %v860
        %924 = vmatpush1.msra.mxu0 %v859
        %925 = vmatprep.subr.mxu0 %v862
        %926 = vmatpush1.msra.mxu0 %v861
        %927 = vmatprep.subr.mxu0 %v864
        %928 = vmatpush1.msra.mxu0 %v863
        %929 = vmatprep.subr.mxu0 %v866
        %930 = vmatpush1.msra.mxu0 %v865
        %931 = vmatprep.subr.mxu0 %v868
        %932 = vmatpush1.msra.mxu0 %v867
        %933 = vmatprep.subr.mxu0 %v870
        %934 = vmatpush1.msra.mxu0 %v869
        %935 = vmatprep.subr.mxu0 %v872
        %936 = vmatpush1.msra.mxu0 %v871
        %937 = vmatprep.subr.mxu0 %v874
        %938 = vmatpush1.msra.mxu0 %v873
        %939 = vmatprep.subr.mxu0 %v876
        %940 = vmatpush1.msra.mxu0 %v875
        %941 = vmatprep.subr.mxu0 %v878
        %942 = vmatpush1.msra.mxu0 %v877
        %943 = vmatprep.subr.mxu0 %v880
        %944 = vmatpush1.msra.mxu0 %v879
        %945 = vmatprep.subr.mxu0 %v882
        %946 = vmatpush1.msra.mxu0 %v881
        %947 = vmatprep.subr.mxu0 %v884
        %948 = vmatpush1.msra.mxu0 %v883
        %949 = vmatprep.subr.mxu0 %v886
        %950 = vmatpush1.msra.mxu0 %v885
        %951 = vmatprep.subr.mxu0 %v888
        %952 = vmatpush1.msra.mxu0 %v887
        %953 = vmatprep.subr.mxu0 %v890
        %954 = vmatpush1.msra.mxu0 %v889
        %955 = vmatprep.subr.mxu0 %v892
        %956 = vmatpush1.msra.mxu0 %v891
        %957 = vmatprep.subr.mxu0 %v894
        %958 = vmatpush1.msra.mxu0 %v893
        %959 = vmatprep.subr.mxu0 %v896
        %960 = vmatpush1.msra.mxu0 %v895
        %961 = vmatprep.subr.mxu0 %v898
        %962 = vmatpush1.msra.mxu0 %v897
        %963 = vmatprep.mubr.f32.mxu0 %v807
        %964 = vmatmul.mubr.f32.gmra.mrb[0].mxu0 %v804
        %v965 = vpop.f32.mrb[0].mxu0
        %v966 = vadd.f32 0.0, %v965
        %v967 = vpop.f32.mrb[0].mxu0
        %v968 = vadd.f32 0.0, %v967
        %969 = vmatprep.mubr.f32.mxu0 %v813
        %970 = vmatmul.mubr.f32.gmra.mrb[0].mxu0 %v810
        %v971 = vpop.f32.mrb[0].mxu0
        %v972 = vadd.f32 0.0, %v971
        %v973 = vpop.f32.mrb[0].mxu0
        %v974 = vadd.f32 0.0, %v973
        %975 = vmatprep.mubr.f32.mxu0 %v819
        %976 = vmatmul.mubr.f32.gmra.mrb[0].mxu0 %v816
        %v977 = vpop.f32.mrb[0].mxu0
        %v978 = vadd.f32 0.0, %v977
        %v979 = vpop.f32.mrb[0].mxu0
        %v980 = vadd.f32 0.0, %v979
        %981 = vmatprep.mubr.f32.mxu0 %v825
        %982 = vmatmul.mubr.f32.gmra.mrb[0].mxu0 %v822
        %v983 = vpop.f32.mrb[0].mxu0
        %v984 = vadd.f32 0.0, %v983
        %v985 = vpop.f32.mrb[0].mxu0
        %v986 = vadd.f32 0.0, %v985
        %987 = vdwg.mxu0
        %988 = vmatprep.subr.mxu0 %v706
        %989 = vmatpush1.msra.mxu0 %v705
        %990 = vmatprep.subr.mxu0 %v708
        %991 = vmatpush1.msra.mxu0 %v707
        %992 = vmatprep.subr.mxu0 %v710
        %993 = vmatpush1.msra.mxu0 %v709
        %994 = vmatprep.subr.mxu0 %v712
        %995 = vmatpush1.msra.mxu0 %v711
        %996 = vmatprep.subr.mxu0 %v714
        %997 = vmatpush1.msra.mxu0 %v713
        %998 = vmatprep.subr.mxu0 %v716
        %999 = vmatpush1.msra.mxu0 %v715
        %1000 = vmatprep.subr.mxu0 %v718
        %1001 = vmatpush1.msra.mxu0 %v717
        %1002 = vmatprep.subr.mxu0 %v720
        %1003 = vmatpush1.msra.mxu0 %v719
        %1004 = vmatprep.subr.mxu0 %v722
        %1005 = vmatpush1.msra.mxu0 %v721
        %1006 = vmatprep.subr.mxu0 %v724
        %1007 = vmatpush1.msra.mxu0 %v723
        %1008 = vmatprep.subr.mxu0 %v726
        %1009 = vmatpush1.msra.mxu0 %v725
        %1010 = vmatprep.subr.mxu0 %v728
        %1011 = vmatpush1.msra.mxu0 %v727
        %1012 = vmatprep.subr.mxu0 %v730
        %1013 = vmatpush1.msra.mxu0 %v729
        %1014 = vmatprep.subr.mxu0 %v732
        %1015 = vmatpush1.msra.mxu0 %v731
        %1016 = vmatprep.subr.mxu0 %v734
        %1017 = vmatpush1.msra.mxu0 %v733
        %1018 = vmatprep.subr.mxu0 %v736
        %1019 = vmatpush1.msra.mxu0 %v735
        %1020 = vmatprep.subr.mxu0 %v738
        %1021 = vmatpush1.msra.mxu0 %v737
        %1022 = vmatprep.subr.mxu0 %v740
        %1023 = vmatpush1.msra.mxu0 %v739
        %1024 = vmatprep.subr.mxu0 %v742
        %1025 = vmatpush1.msra.mxu0 %v741
        %1026 = vmatprep.subr.mxu0 %v744
        %1027 = vmatpush1.msra.mxu0 %v743
        %1028 = vmatprep.subr.mxu0 %v746
        %1029 = vmatpush1.msra.mxu0 %v745
        %1030 = vmatprep.subr.mxu0 %v748
        %1031 = vmatpush1.msra.mxu0 %v747
        %1032 = vmatprep.subr.mxu0 %v750
        %1033 = vmatpush1.msra.mxu0 %v749
        %1034 = vmatprep.subr.mxu0 %v752
        %1035 = vmatpush1.msra.mxu0 %v751
        %1036 = vmatprep.subr.mxu0 %v754
        %1037 = vmatpush1.msra.mxu0 %v753
        %1038 = vmatprep.subr.mxu0 %v756
        %1039 = vmatpush1.msra.mxu0 %v755
        %1040 = vmatprep.subr.mxu0 %v758
        %1041 = vmatpush1.msra.mxu0 %v757
        %1042 = vmatprep.subr.mxu0 %v760
        %1043 = vmatpush1.msra.mxu0 %v759
        %1044 = vmatprep.subr.mxu0 %v762
        %1045 = vmatpush1.msra.mxu0 %v761
        %1046 = vmatprep.subr.mxu0 %v764
        %1047 = vmatpush1.msra.mxu0 %v763
        %1048 = vmatprep.subr.mxu0 %v766
        %1049 = vmatpush1.msra.mxu0 %v765
        %1050 = vmatprep.subr.mxu0 %v768
        %1051 = vmatpush1.msra.mxu0 %v767
        %1052 = vmatprep.mubr.f32.mxu0 %v698
        %1053 = vmatmul.mubr.f32.gmra.mrb[0].mxu0 %v697
        %v1054 = vpop.f32.mrb[0].mxu0
        %v1055 = vadd.f32 %v966, %v1054
        %v1056 = vpop.f32.mrb[0].mxu0
        %v1057 = vadd.f32 %v968, %v1056
        %1058 = vmatprep.mubr.f32.mxu0 %v700
        %1059 = vmatmul.mubr.f32.gmra.mrb[0].mxu0 %v699
        %v1060 = vpop.f32.mrb[0].mxu0
        %v1061 = vadd.f32 %v972, %v1060
        %v1062 = vpop.f32.mrb[0].mxu0
        %v1063 = vadd.f32 %v974, %v1062
        %1064 = vmatprep.mubr.f32.mxu0 %v702
        %1065 = vmatmul.mubr.f32.gmra.mrb[0].mxu0 %v701
        %v1066 = vpop.f32.mrb[0].mxu0
        %v1067 = vadd.f32 %v978, %v1066
        %v1068 = vpop.f32.mrb[0].mxu0
        %v1069 = vadd.f32 %v980, %v1068
        %1070 = vmatprep.mubr.f32.mxu0 %v704
        %1071 = vmatmul.mubr.f32.gmra.mrb[0].mxu0 %v703
        %v1072 = vpop.f32.mrb[0].mxu0
        %v1073 = vadd.f32 %v984, %v1072
        %v1074 = vpop.f32.mrb[0].mxu0
        %v1075 = vadd.f32 %v986, %v1074
        %1076 = vdwg.mxu0
        %v1077 = vld [vmem:[#allocation2] sm:$0xfc]
        %v1078 = vld [vmem:[#allocation2 + $0x8] sm:$0xfc]
        %v1079 = vld [vmem:[#allocation2 + $0x10] sm:$0x3]
        %v1080 = vld [vmem:[#allocation2 + $0x18] sm:$0x3]
        %v1081 = vld [vmem:[#allocation2 + $0x20] sm:$0xfc]
        %v1082 = vld [vmem:[#allocation2 + $0x28] sm:$0xfc]
        %v1083 = vld [vmem:[#allocation2 + $0x30] sm:$0x3]
        %v1084 = vld [vmem:[#allocation2 + $0x38] sm:$0x3]
        %v1085 = vld [vmem:[#allocation2 + $0x40] sm:$0xfc]
        %v1086 = vld [vmem:[#allocation2 + $0x48] sm:$0xfc]
        %v1087 = vld [vmem:[#allocation2 + $0x50] sm:$0x3]
        %v1088 = vld [vmem:[#allocation2 + $0x58] sm:$0x3]
        %v1089 = vld [vmem:[#allocation2 + $0x60] sm:$0xfc]
        %v1090 = vld [vmem:[#allocation2 + $0x68] sm:$0xfc]
        %v1091 = vld [vmem:[#allocation2 + $0x70] sm:$0x3]
        %v1092 = vld [vmem:[#allocation2 + $0x78] sm:$0x3]
        %vm1109 = vcmask 1045504
        %v1110 = vrot.slane %v1077, 2
        %v1111 = vrot.slane %v1079, 2
        %v1112 = vsel %vm1109, %v1110, %v1111
        %v1113 = vrot.slane %v1078, 2
        %v1114 = vrot.slane %v1080, 2
        %v1115 = vsel %vm1109, %v1113, %v1114
        %v1116 = vrot.slane %v1081, 2
        %v1117 = vrot.slane %v1083, 2
        %v1118 = vsel %vm1109, %v1116, %v1117
        %v1119 = vrot.slane %v1082, 2
        %v1120 = vrot.slane %v1084, 2
        %v1121 = vsel %vm1109, %v1119, %v1120
        %v1122 = vrot.slane %v1085, 2
        %v1123 = vrot.slane %v1087, 2
        %v1124 = vsel %vm1109, %v1122, %v1123
        %v1125 = vrot.slane %v1086, 2
        %v1126 = vrot.slane %v1088, 2
        %v1127 = vsel %vm1109, %v1125, %v1126
        %v1128 = vrot.slane %v1089, 2
        %v1129 = vrot.slane %v1091, 2
        %v1130 = vsel %vm1109, %v1128, %v1129
        %v1131 = vrot.slane %v1090, 2
        %v1132 = vrot.slane %v1092, 2
        %v1133 = vsel %vm1109, %v1131, %v1132
        %s1142 = scalar_lea.vmem [#allocation9], 1024
        %v1143 = vld [vmem:[%s1142] sm:$0xff]
        %v1144 = vld [vmem:[%s1142 + $0x8] sm:$0xff]
        %v1145 = vld [vmem:[%s1142 + $0x10] sm:$0xff]
        %v1146 = vld [vmem:[%s1142 + $0x18] sm:$0xff]
        %v1147 = vld [vmem:[%s1142 + $0x20] sm:$0xff]
        %v1148 = vld [vmem:[%s1142 + $0x28] sm:$0xff]
        %v1149 = vld [vmem:[%s1142 + $0x30] sm:$0xff]
        %v1150 = vld [vmem:[%s1142 + $0x38] sm:$0xff]
        %v1151 = vld [vmem:[%s1142 + $0x40] sm:$0xff]
        %v1152 = vld [vmem:[%s1142 + $0x48] sm:$0xff]
        %v1153 = vld [vmem:[%s1142 + $0x50] sm:$0xff]
        %v1154 = vld [vmem:[%s1142 + $0x58] sm:$0xff]
        %v1155 = vld [vmem:[%s1142 + $0x60] sm:$0xff]
        %v1156 = vld [vmem:[%s1142 + $0x68] sm:$0xff]
        %v1157 = vld [vmem:[%s1142 + $0x70] sm:$0xff]
        %v1158 = vld [vmem:[%s1142 + $0x78] sm:$0xff]
        %v1159 = vld [vmem:[%s1142 + $0x80] sm:$0xff]
        %v1160 = vld [vmem:[%s1142 + $0x88] sm:$0xff]
        %v1161 = vld [vmem:[%s1142 + $0x90] sm:$0xff]
        %v1162 = vld [vmem:[%s1142 + $0x98] sm:$0xff]
        %v1163 = vld [vmem:[%s1142 + $0xa0] sm:$0xff]
        %v1164 = vld [vmem:[%s1142 + $0xa8] sm:$0xff]
        %v1165 = vld [vmem:[%s1142 + $0xb0] sm:$0xff]
        %v1166 = vld [vmem:[%s1142 + $0xb8] sm:$0xff]
        %v1167 = vld [vmem:[%s1142 + $0xc0] sm:$0xff]
        %v1168 = vld [vmem:[%s1142 + $0xc8] sm:$0xff]
        %v1169 = vld [vmem:[%s1142 + $0xd0] sm:$0xff]
        %v1170 = vld [vmem:[%s1142 + $0xd8] sm:$0xff]
        %v1171 = vld [vmem:[%s1142 + $0xe0] sm:$0xff]
        %v1172 = vld [vmem:[%s1142 + $0xe8] sm:$0xff]
        %v1173 = vld [vmem:[%s1142 + $0xf0] sm:$0xff]
        %v1174 = vld [vmem:[%s1142 + $0xf8] sm:$0xff]
        %v1175 = vld [vmem:[%s1142 + $0x100] sm:$0xff]
        %v1176 = vld [vmem:[%s1142 + $0x108] sm:$0xff]
        %v1177 = vld [vmem:[%s1142 + $0x110] sm:$0xff]
        %v1178 = vld [vmem:[%s1142 + $0x118] sm:$0xff]
        %v1179 = vld [vmem:[%s1142 + $0x120] sm:$0xff]
        %v1180 = vld [vmem:[%s1142 + $0x128] sm:$0xff]
        %v1181 = vld [vmem:[%s1142 + $0x130] sm:$0xff]
        %v1182 = vld [vmem:[%s1142 + $0x138] sm:$0xff]
        %v1183 = vld [vmem:[%s1142 + $0x140] sm:$0xff]
        %v1184 = vld [vmem:[%s1142 + $0x148] sm:$0xff]
        %v1185 = vld [vmem:[%s1142 + $0x150] sm:$0xff]
        %v1186 = vld [vmem:[%s1142 + $0x158] sm:$0xff]
        %v1187 = vld [vmem:[%s1142 + $0x160] sm:$0xff]
        %v1188 = vld [vmem:[%s1142 + $0x168] sm:$0xff]
        %v1189 = vld [vmem:[%s1142 + $0x170] sm:$0xff]
        %v1190 = vld [vmem:[%s1142 + $0x178] sm:$0xff]
        %v1191 = vld [vmem:[%s1142 + $0x180] sm:$0xff]
        %v1192 = vld [vmem:[%s1142 + $0x188] sm:$0xff]
        %v1193 = vld [vmem:[%s1142 + $0x190] sm:$0xff]
        %v1194 = vld [vmem:[%s1142 + $0x198] sm:$0xff]
        %v1195 = vld [vmem:[%s1142 + $0x1a0] sm:$0xff]
        %v1196 = vld [vmem:[%s1142 + $0x1a8] sm:$0xff]
        %v1197 = vld [vmem:[%s1142 + $0x1b0] sm:$0xff]
        %v1198 = vld [vmem:[%s1142 + $0x1b8] sm:$0xff]
        %v1199 = vld [vmem:[%s1142 + $0x1c0] sm:$0xff]
        %v1200 = vld [vmem:[%s1142 + $0x1c8] sm:$0xff]
        %v1201 = vld [vmem:[%s1142 + $0x1d0] sm:$0xff]
        %v1202 = vld [vmem:[%s1142 + $0x1d8] sm:$0xff]
        %v1203 = vld [vmem:[%s1142 + $0x1e0] sm:$0xff]
        %v1204 = vld [vmem:[%s1142 + $0x1e8] sm:$0xff]
        %v1205 = vld [vmem:[%s1142 + $0x1f0] sm:$0xff]
        %v1206 = vld [vmem:[%s1142 + $0x1f8] sm:$0xff]
        %1207 = vmatprep.subr.mxu0 %v1144
        %1208 = vmatpush1.msra.mxu0 %v1143
        %1209 = vmatprep.subr.mxu0 %v1146
        %1210 = vmatpush1.msra.mxu0 %v1145
        %1211 = vmatprep.subr.mxu0 %v1148
        %1212 = vmatpush1.msra.mxu0 %v1147
        %1213 = vmatprep.subr.mxu0 %v1150
        %1214 = vmatpush1.msra.mxu0 %v1149
        %1215 = vmatprep.subr.mxu0 %v1152
        %1216 = vmatpush1.msra.mxu0 %v1151
        %1217 = vmatprep.subr.mxu0 %v1154
        %1218 = vmatpush1.msra.mxu0 %v1153
        %1219 = vmatprep.subr.mxu0 %v1156
        %1220 = vmatpush1.msra.mxu0 %v1155
        %1221 = vmatprep.subr.mxu0 %v1158
        %1222 = vmatpush1.msra.mxu0 %v1157
        %1223 = vmatprep.subr.mxu0 %v1160
        %1224 = vmatpush1.msra.mxu0 %v1159
        %1225 = vmatprep.subr.mxu0 %v1162
        %1226 = vmatpush1.msra.mxu0 %v1161
        %1227 = vmatprep.subr.mxu0 %v1164
        %1228 = vmatpush1.msra.mxu0 %v1163
        %1229 = vmatprep.subr.mxu0 %v1166
        %1230 = vmatpush1.msra.mxu0 %v1165
        %1231 = vmatprep.subr.mxu0 %v1168
        %1232 = vmatpush1.msra.mxu0 %v1167
        %1233 = vmatprep.subr.mxu0 %v1170
        %1234 = vmatpush1.msra.mxu0 %v1169
        %1235 = vmatprep.subr.mxu0 %v1172
        %1236 = vmatpush1.msra.mxu0 %v1171
        %1237 = vmatprep.subr.mxu0 %v1174
        %1238 = vmatpush1.msra.mxu0 %v1173
        %1239 = vmatprep.subr.mxu0 %v1176
        %1240 = vmatpush1.msra.mxu0 %v1175
        %1241 = vmatprep.subr.mxu0 %v1178
        %1242 = vmatpush1.msra.mxu0 %v1177
        %1243 = vmatprep.subr.mxu0 %v1180
        %1244 = vmatpush1.msra.mxu0 %v1179
        %1245 = vmatprep.subr.mxu0 %v1182
        %1246 = vmatpush1.msra.mxu0 %v1181
        %1247 = vmatprep.subr.mxu0 %v1184
        %1248 = vmatpush1.msra.mxu0 %v1183
        %1249 = vmatprep.subr.mxu0 %v1186
        %1250 = vmatpush1.msra.mxu0 %v1185
        %1251 = vmatprep.subr.mxu0 %v1188
        %1252 = vmatpush1.msra.mxu0 %v1187
        %1253 = vmatprep.subr.mxu0 %v1190
        %1254 = vmatpush1.msra.mxu0 %v1189
        %1255 = vmatprep.subr.mxu0 %v1192
        %1256 = vmatpush1.msra.mxu0 %v1191
        %1257 = vmatprep.subr.mxu0 %v1194
        %1258 = vmatpush1.msra.mxu0 %v1193
        %1259 = vmatprep.subr.mxu0 %v1196
        %1260 = vmatpush1.msra.mxu0 %v1195
        %1261 = vmatprep.subr.mxu0 %v1198
        %1262 = vmatpush1.msra.mxu0 %v1197
        %1263 = vmatprep.subr.mxu0 %v1200
        %1264 = vmatpush1.msra.mxu0 %v1199
        %1265 = vmatprep.subr.mxu0 %v1202
        %1266 = vmatpush1.msra.mxu0 %v1201
        %1267 = vmatprep.subr.mxu0 %v1204
        %1268 = vmatpush1.msra.mxu0 %v1203
        %1269 = vmatprep.subr.mxu0 %v1206
        %1270 = vmatpush1.msra.mxu0 %v1205
        %1271 = vmatprep.mubr.f32.mxu0 %v1115
        %1272 = vmatmul.mubr.f32.gmra.mrb[0].mxu0 %v1112
        %v1273 = vpop.f32.mrb[0].mxu0
        %v1274 = vadd.f32 0.0, %v1273
        %v1275 = vpop.f32.mrb[0].mxu0
        %v1276 = vadd.f32 0.0, %v1275
        %1277 = vmatprep.mubr.f32.mxu0 %v1121
        %1278 = vmatmul.mubr.f32.gmra.mrb[0].mxu0 %v1118
        %v1279 = vpop.f32.mrb[0].mxu0
        %v1280 = vadd.f32 0.0, %v1279
        %v1281 = vpop.f32.mrb[0].mxu0
        %v1282 = vadd.f32 0.0, %v1281
        %1283 = vmatprep.mubr.f32.mxu0 %v1127
        %1284 = vmatmul.mubr.f32.gmra.mrb[0].mxu0 %v1124
        %v1285 = vpop.f32.mrb[0].mxu0
        %v1286 = vadd.f32 0.0, %v1285
        %v1287 = vpop.f32.mrb[0].mxu0
        %v1288 = vadd.f32 0.0, %v1287
        %1289 = vmatprep.mubr.f32.mxu0 %v1133
        %1290 = vmatmul.mubr.f32.gmra.mrb[0].mxu0 %v1130
        %v1291 = vpop.f32.mrb[0].mxu0
        %v1292 = vadd.f32 0.0, %v1291
        %v1293 = vpop.f32.mrb[0].mxu0
        %v1294 = vadd.f32 0.0, %v1293
        %1295 = vdwg.mxu0
        %v1296 = vadd.f32 %v1055, %v1274
        %v1297 = vadd.f32 %v1057, %v1276
        %v1298 = vadd.f32 %v1061, %v1280
        %v1299 = vadd.f32 %v1063, %v1282
        %v1300 = vadd.f32 %v1067, %v1286
        %v1301 = vadd.f32 %v1069, %v1288
        %v1302 = vadd.f32 %v1073, %v1292
        %v1303 = vadd.f32 %v1075, %v1294
        %v1304 = vld [vmem:[%s680] sm:$0xff]
        %v1305 = vld [vmem:[%s680 + $0x8] sm:$0xff]
        %v1306 = vld [vmem:[%s680 + $0x20] sm:$0xff]
        %v1307 = vld [vmem:[%s680 + $0x28] sm:$0xff]
        %v1308 = vld [vmem:[%s680 + $0x40] sm:$0xff]
        %v1309 = vld [vmem:[%s680 + $0x48] sm:$0xff]
        %v1310 = vld [vmem:[%s680 + $0x60] sm:$0xff]
        %v1311 = vld [vmem:[%s680 + $0x68] sm:$0xff]
        %s1312 = scalar_lea.vmem [#allocation9], 1536
        %v1313 = vld [vmem:[%s1312] sm:$0xff]
        %v1314 = vld [vmem:[%s1312 + $0x8] sm:$0xff]
        %v1315 = vld [vmem:[%s1312 + $0x10] sm:$0xff]
        %v1316 = vld [vmem:[%s1312 + $0x18] sm:$0xff]
        %v1317 = vld [vmem:[%s1312 + $0x20] sm:$0xff]
        %v1318 = vld [vmem:[%s1312 + $0x28] sm:$0xff]
        %v1319 = vld [vmem:[%s1312 + $0x30] sm:$0xff]
        %v1320 = vld [vmem:[%s1312 + $0x38] sm:$0xff]
        %v1321 = vld [vmem:[%s1312 + $0x40] sm:$0xff]
        %v1322 = vld [vmem:[%s1312 + $0x48] sm:$0xff]
        %v1323 = vld [vmem:[%s1312 + $0x50] sm:$0xff]
        %v1324 = vld [vmem:[%s1312 + $0x58] sm:$0xff]
        %v1325 = vld [vmem:[%s1312 + $0x60] sm:$0xff]
        %v1326 = vld [vmem:[%s1312 + $0x68] sm:$0xff]
        %v1327 = vld [vmem:[%s1312 + $0x70] sm:$0xff]
        %v1328 = vld [vmem:[%s1312 + $0x78] sm:$0xff]
        %v1329 = vld [vmem:[%s1312 + $0x80] sm:$0xff]
        %v1330 = vld [vmem:[%s1312 + $0x88] sm:$0xff]
        %v1331 = vld [vmem:[%s1312 + $0x90] sm:$0xff]
        %v1332 = vld [vmem:[%s1312 + $0x98] sm:$0xff]
        %v1333 = vld [vmem:[%s1312 + $0xa0] sm:$0xff]
        %v1334 = vld [vmem:[%s1312 + $0xa8] sm:$0xff]
        %v1335 = vld [vmem:[%s1312 + $0xb0] sm:$0xff]
        %v1336 = vld [vmem:[%s1312 + $0xb8] sm:$0xff]
        %v1337 = vld [vmem:[%s1312 + $0xc0] sm:$0xff]
        %v1338 = vld [vmem:[%s1312 + $0xc8] sm:$0xff]
        %v1339 = vld [vmem:[%s1312 + $0xd0] sm:$0xff]
        %v1340 = vld [vmem:[%s1312 + $0xd8] sm:$0xff]
        %v1341 = vld [vmem:[%s1312 + $0xe0] sm:$0xff]
        %v1342 = vld [vmem:[%s1312 + $0xe8] sm:$0xff]
        %v1343 = vld [vmem:[%s1312 + $0xf0] sm:$0xff]
        %v1344 = vld [vmem:[%s1312 + $0xf8] sm:$0xff]
        %v1345 = vld [vmem:[%s1312 + $0x100] sm:$0xff]
        %v1346 = vld [vmem:[%s1312 + $0x108] sm:$0xff]
        %v1347 = vld [vmem:[%s1312 + $0x110] sm:$0xff]
        %v1348 = vld [vmem:[%s1312 + $0x118] sm:$0xff]
        %v1349 = vld [vmem:[%s1312 + $0x120] sm:$0xff]
        %v1350 = vld [vmem:[%s1312 + $0x128] sm:$0xff]
        %v1351 = vld [vmem:[%s1312 + $0x130] sm:$0xff]
        %v1352 = vld [vmem:[%s1312 + $0x138] sm:$0xff]
        %v1353 = vld [vmem:[%s1312 + $0x140] sm:$0xff]
        %v1354 = vld [vmem:[%s1312 + $0x148] sm:$0xff]
        %v1355 = vld [vmem:[%s1312 + $0x150] sm:$0xff]
        %v1356 = vld [vmem:[%s1312 + $0x158] sm:$0xff]
        %v1357 = vld [vmem:[%s1312 + $0x160] sm:$0xff]
        %v1358 = vld [vmem:[%s1312 + $0x168] sm:$0xff]
        %v1359 = vld [vmem:[%s1312 + $0x170] sm:$0xff]
        %v1360 = vld [vmem:[%s1312 + $0x178] sm:$0xff]
        %v1361 = vld [vmem:[%s1312 + $0x180] sm:$0xff]
        %v1362 = vld [vmem:[%s1312 + $0x188] sm:$0xff]
        %v1363 = vld [vmem:[%s1312 + $0x190] sm:$0xff]
        %v1364 = vld [vmem:[%s1312 + $0x198] sm:$0xff]
        %v1365 = vld [vmem:[%s1312 + $0x1a0] sm:$0xff]
        %v1366 = vld [vmem:[%s1312 + $0x1a8] sm:$0xff]
        %v1367 = vld [vmem:[%s1312 + $0x1b0] sm:$0xff]
        %v1368 = vld [vmem:[%s1312 + $0x1b8] sm:$0xff]
        %v1369 = vld [vmem:[%s1312 + $0x1c0] sm:$0xff]
        %v1370 = vld [vmem:[%s1312 + $0x1c8] sm:$0xff]
        %v1371 = vld [vmem:[%s1312 + $0x1d0] sm:$0xff]
        %v1372 = vld [vmem:[%s1312 + $0x1d8] sm:$0xff]
        %v1373 = vld [vmem:[%s1312 + $0x1e0] sm:$0xff]
        %v1374 = vld [vmem:[%s1312 + $0x1e8] sm:$0xff]
        %v1375 = vld [vmem:[%s1312 + $0x1f0] sm:$0xff]
        %v1376 = vld [vmem:[%s1312 + $0x1f8] sm:$0xff]
        %1377 = vmatprep.subr.mxu0 %v1314
        %1378 = vmatpush1.msra.mxu0 %v1313
        %1379 = vmatprep.subr.mxu0 %v1316
        %1380 = vmatpush1.msra.mxu0 %v1315
        %1381 = vmatprep.subr.mxu0 %v1318
        %1382 = vmatpush1.msra.mxu0 %v1317
        %1383 = vmatprep.subr.mxu0 %v1320
        %1384 = vmatpush1.msra.mxu0 %v1319
        %1385 = vmatprep.subr.mxu0 %v1322
        %1386 = vmatpush1.msra.mxu0 %v1321
        %1387 = vmatprep.subr.mxu0 %v1324
        %1388 = vmatpush1.msra.mxu0 %v1323
        %1389 = vmatprep.subr.mxu0 %v1326
        %1390 = vmatpush1.msra.mxu0 %v1325
        %1391 = vmatprep.subr.mxu0 %v1328
        %1392 = vmatpush1.msra.mxu0 %v1327
        %1393 = vmatprep.subr.mxu0 %v1330
        %1394 = vmatpush1.msra.mxu0 %v1329
        %1395 = vmatprep.subr.mxu0 %v1332
        %1396 = vmatpush1.msra.mxu0 %v1331
        %1397 = vmatprep.subr.mxu0 %v1334
        %1398 = vmatpush1.msra.mxu0 %v1333
        %1399 = vmatprep.subr.mxu0 %v1336
        %1400 = vmatpush1.msra.mxu0 %v1335
        %1401 = vmatprep.subr.mxu0 %v1338
        %1402 = vmatpush1.msra.mxu0 %v1337
        %1403 = vmatprep.subr.mxu0 %v1340
        %1404 = vmatpush1.msra.mxu0 %v1339
        %1405 = vmatprep.subr.mxu0 %v1342
        %1406 = vmatpush1.msra.mxu0 %v1341
        %1407 = vmatprep.subr.mxu0 %v1344
        %1408 = vmatpush1.msra.mxu0 %v1343
        %1409 = vmatprep.subr.mxu0 %v1346
        %1410 = vmatpush1.msra.mxu0 %v1345
        %1411 = vmatprep.subr.mxu0 %v1348
        %1412 = vmatpush1.msra.mxu0 %v1347
        %1413 = vmatprep.subr.mxu0 %v1350
        %1414 = vmatpush1.msra.mxu0 %v1349
        %1415 = vmatprep.subr.mxu0 %v1352
        %1416 = vmatpush1.msra.mxu0 %v1351
        %1417 = vmatprep.subr.mxu0 %v1354
        %1418 = vmatpush1.msra.mxu0 %v1353
        %1419 = vmatprep.subr.mxu0 %v1356
        %1420 = vmatpush1.msra.mxu0 %v1355
        %1421 = vmatprep.subr.mxu0 %v1358
        %1422 = vmatpush1.msra.mxu0 %v1357
        %1423 = vmatprep.subr.mxu0 %v1360
        %1424 = vmatpush1.msra.mxu0 %v1359
        %1425 = vmatprep.subr.mxu0 %v1362
        %1426 = vmatpush1.msra.mxu0 %v1361
        %1427 = vmatprep.subr.mxu0 %v1364
        %1428 = vmatpush1.msra.mxu0 %v1363
        %1429 = vmatprep.subr.mxu0 %v1366
        %1430 = vmatpush1.msra.mxu0 %v1365
        %1431 = vmatprep.subr.mxu0 %v1368
        %1432 = vmatpush1.msra.mxu0 %v1367
        %1433 = vmatprep.subr.mxu0 %v1370
        %1434 = vmatpush1.msra.mxu0 %v1369
        %1435 = vmatprep.subr.mxu0 %v1372
        %1436 = vmatpush1.msra.mxu0 %v1371
        %1437 = vmatprep.subr.mxu0 %v1374
        %1438 = vmatpush1.msra.mxu0 %v1373
        %1439 = vmatprep.subr.mxu0 %v1376
        %1440 = vmatpush1.msra.mxu0 %v1375
        %1441 = vmatprep.mubr.f32.mxu0 %v1305
        %1442 = vmatmul.mubr.f32.gmra.mrb[0].mxu0 %v1304
        %v1443 = vpop.f32.mrb[0].mxu0
        %v1444 = vadd.f32 0.0, %v1443
        %v1445 = vpop.f32.mrb[0].mxu0
        %v1446 = vadd.f32 0.0, %v1445
        %1447 = vmatprep.mubr.f32.mxu0 %v1307
        %1448 = vmatmul.mubr.f32.gmra.mrb[0].mxu0 %v1306
        %v1449 = vpop.f32.mrb[0].mxu0
        %v1450 = vadd.f32 0.0, %v1449
        %v1451 = vpop.f32.mrb[0].mxu0
        %v1452 = vadd.f32 0.0, %v1451
        %1453 = vmatprep.mubr.f32.mxu0 %v1309
        %1454 = vmatmul.mubr.f32.gmra.mrb[0].mxu0 %v1308
        %v1455 = vpop.f32.mrb[0].mxu0
        %v1456 = vadd.f32 0.0, %v1455
        %v1457 = vpop.f32.mrb[0].mxu0
        %v1458 = vadd.f32 0.0, %v1457
        %1459 = vmatprep.mubr.f32.mxu0 %v1311
        %1460 = vmatmul.mubr.f32.gmra.mrb[0].mxu0 %v1310
        %v1461 = vpop.f32.mrb[0].mxu0
        %v1462 = vadd.f32 0.0, %v1461
        %v1463 = vpop.f32.mrb[0].mxu0
        %v1464 = vadd.f32 0.0, %v1463
        %1465 = vdwg.mxu0
        %v1466 = vadd.f32 %v1296, %v1444
        %v1467 = vadd.f32 %v1297, %v1446
        %v1468 = vadd.f32 %v1298, %v1450
        %v1469 = vadd.f32 %v1299, %v1452
        %v1470 = vadd.f32 %v1300, %v1456
        %v1471 = vadd.f32 %v1301, %v1458
        %v1472 = vadd.f32 %v1302, %v1462
        %v1473 = vadd.f32 %v1303, %v1464
        %v1474 = vld [vmem:[%s680] sm:$0xfe]
        %v1475 = vld [vmem:[%s680 + $0x8] sm:$0xfe]
        %v1476 = vld [vmem:[%s680 + $0x10] sm:$0x1]
        %v1477 = vld [vmem:[%s680 + $0x18] sm:$0x1]
        %v1478 = vld [vmem:[%s680 + $0x20] sm:$0xfe]
        %v1479 = vld [vmem:[%s680 + $0x28] sm:$0xfe]
        %v1480 = vld [vmem:[%s680 + $0x30] sm:$0x1]
        %v1481 = vld [vmem:[%s680 + $0x38] sm:$0x1]
        %v1482 = vld [vmem:[%s680 + $0x40] sm:$0xfe]
        %v1483 = vld [vmem:[%s680 + $0x48] sm:$0xfe]
        %v1484 = vld [vmem:[%s680 + $0x50] sm:$0x1]
        %v1485 = vld [vmem:[%s680 + $0x58] sm:$0x1]
        %v1486 = vld [vmem:[%s680 + $0x60] sm:$0xfe]
        %v1487 = vld [vmem:[%s680 + $0x68] sm:$0xfe]
        %v1488 = vld [vmem:[%s680 + $0x70] sm:$0x1]
        %v1489 = vld [vmem:[%s680 + $0x78] sm:$0x1]
        %v1506 = vrot.slane %v1474, 1
        %v1507 = vrot.slane %v1476, 1
        %v1508 = vsel %vm801, %v1506, %v1507
        %v1509 = vrot.slane %v1475, 1
        %v1510 = vrot.slane %v1477, 1
        %v1511 = vsel %vm801, %v1509, %v1510
        %v1512 = vrot.slane %v1478, 1
        %v1513 = vrot.slane %v1480, 1
        %v1514 = vsel %vm801, %v1512, %v1513
        %v1515 = vrot.slane %v1479, 1
        %v1516 = vrot.slane %v1481, 1
        %v1517 = vsel %vm801, %v1515, %v1516
        %v1518 = vrot.slane %v1482, 1
        %v1519 = vrot.slane %v1484, 1
        %v1520 = vsel %vm801, %v1518, %v1519
        %v1521 = vrot.slane %v1483, 1
        %v1522 = vrot.slane %v1485, 1
        %v1523 = vsel %vm801, %v1521, %v1522
        %v1524 = vrot.slane %v1486, 1
        %v1525 = vrot.slane %v1488, 1
        %v1526 = vsel %vm801, %v1524, %v1525
        %v1527 = vrot.slane %v1487, 1
        %v1528 = vrot.slane %v1489, 1
        %v1529 = vsel %vm801, %v1527, %v1528
        %s1538 = scalar_lea.vmem [#allocation9], 2048
        %v1539 = vld [vmem:[%s1538] sm:$0xff]
        %v1540 = vld [vmem:[%s1538 + $0x8] sm:$0xff]
        %v1541 = vld [vmem:[%s1538 + $0x10] sm:$0xff]
        %v1542 = vld [vmem:[%s1538 + $0x18] sm:$0xff]
        %v1543 = vld [vmem:[%s1538 + $0x20] sm:$0xff]
        %v1544 = vld [vmem:[%s1538 + $0x28] sm:$0xff]
        %v1545 = vld [vmem:[%s1538 + $0x30] sm:$0xff]
        %v1546 = vld [vmem:[%s1538 + $0x38] sm:$0xff]
        %v1547 = vld [vmem:[%s1538 + $0x40] sm:$0xff]
        %v1548 = vld [vmem:[%s1538 + $0x48] sm:$0xff]
        %v1549 = vld [vmem:[%s1538 + $0x50] sm:$0xff]
        %v1550 = vld [vmem:[%s1538 + $0x58] sm:$0xff]
        %v1551 = vld [vmem:[%s1538 + $0x60] sm:$0xff]
        %v1552 = vld [vmem:[%s1538 + $0x68] sm:$0xff]
        %v1553 = vld [vmem:[%s1538 + $0x70] sm:$0xff]
        %v1554 = vld [vmem:[%s1538 + $0x78] sm:$0xff]
        %v1555 = vld [vmem:[%s1538 + $0x80] sm:$0xff]
        %v1556 = vld [vmem:[%s1538 + $0x88] sm:$0xff]
        %v1557 = vld [vmem:[%s1538 + $0x90] sm:$0xff]
        %v1558 = vld [vmem:[%s1538 + $0x98] sm:$0xff]
        %v1559 = vld [vmem:[%s1538 + $0xa0] sm:$0xff]
        %v1560 = vld [vmem:[%s1538 + $0xa8] sm:$0xff]
        %v1561 = vld [vmem:[%s1538 + $0xb0] sm:$0xff]
        %v1562 = vld [vmem:[%s1538 + $0xb8] sm:$0xff]
        %v1563 = vld [vmem:[%s1538 + $0xc0] sm:$0xff]
        %v1564 = vld [vmem:[%s1538 + $0xc8] sm:$0xff]
        %v1565 = vld [vmem:[%s1538 + $0xd0] sm:$0xff]
        %v1566 = vld [vmem:[%s1538 + $0xd8] sm:$0xff]
        %v1567 = vld [vmem:[%s1538 + $0xe0] sm:$0xff]
        %v1568 = vld [vmem:[%s1538 + $0xe8] sm:$0xff]
        %v1569 = vld [vmem:[%s1538 + $0xf0] sm:$0xff]
        %v1570 = vld [vmem:[%s1538 + $0xf8] sm:$0xff]
        %v1571 = vld [vmem:[%s1538 + $0x100] sm:$0xff]
        %v1572 = vld [vmem:[%s1538 + $0x108] sm:$0xff]
        %v1573 = vld [vmem:[%s1538 + $0x110] sm:$0xff]
        %v1574 = vld [vmem:[%s1538 + $0x118] sm:$0xff]
        %v1575 = vld [vmem:[%s1538 + $0x120] sm:$0xff]
        %v1576 = vld [vmem:[%s1538 + $0x128] sm:$0xff]
        %v1577 = vld [vmem:[%s1538 + $0x130] sm:$0xff]
        %v1578 = vld [vmem:[%s1538 + $0x138] sm:$0xff]
        %v1579 = vld [vmem:[%s1538 + $0x140] sm:$0xff]
        %v1580 = vld [vmem:[%s1538 + $0x148] sm:$0xff]
        %v1581 = vld [vmem:[%s1538 + $0x150] sm:$0xff]
        %v1582 = vld [vmem:[%s1538 + $0x158] sm:$0xff]
        %v1583 = vld [vmem:[%s1538 + $0x160] sm:$0xff]
        %v1584 = vld [vmem:[%s1538 + $0x168] sm:$0xff]
        %v1585 = vld [vmem:[%s1538 + $0x170] sm:$0xff]
        %v1586 = vld [vmem:[%s1538 + $0x178] sm:$0xff]
        %v1587 = vld [vmem:[%s1538 + $0x180] sm:$0xff]
        %v1588 = vld [vmem:[%s1538 + $0x188] sm:$0xff]
        %v1589 = vld [vmem:[%s1538 + $0x190] sm:$0xff]
        %v1590 = vld [vmem:[%s1538 + $0x198] sm:$0xff]
        %v1591 = vld [vmem:[%s1538 + $0x1a0] sm:$0xff]
        %v1592 = vld [vmem:[%s1538 + $0x1a8] sm:$0xff]
        %v1593 = vld [vmem:[%s1538 + $0x1b0] sm:$0xff]
        %v1594 = vld [vmem:[%s1538 + $0x1b8] sm:$0xff]
        %v1595 = vld [vmem:[%s1538 + $0x1c0] sm:$0xff]
        %v1596 = vld [vmem:[%s1538 + $0x1c8] sm:$0xff]
        %v1597 = vld [vmem:[%s1538 + $0x1d0] sm:$0xff]
        %v1598 = vld [vmem:[%s1538 + $0x1d8] sm:$0xff]
        %v1599 = vld [vmem:[%s1538 + $0x1e0] sm:$0xff]
        %v1600 = vld [vmem:[%s1538 + $0x1e8] sm:$0xff]
        %v1601 = vld [vmem:[%s1538 + $0x1f0] sm:$0xff]
        %v1602 = vld [vmem:[%s1538 + $0x1f8] sm:$0xff]
        %1603 = vmatprep.subr.mxu0 %v1540
        %1604 = vmatpush1.msra.mxu0 %v1539
        %1605 = vmatprep.subr.mxu0 %v1542
        %1606 = vmatpush1.msra.mxu0 %v1541
        %1607 = vmatprep.subr.mxu0 %v1544
        %1608 = vmatpush1.msra.mxu0 %v1543
        %1609 = vmatprep.subr.mxu0 %v1546
        %1610 = vmatpush1.msra.mxu0 %v1545
        %1611 = vmatprep.subr.mxu0 %v1548
        %1612 = vmatpush1.msra.mxu0 %v1547
        %1613 = vmatprep.subr.mxu0 %v1550
        %1614 = vmatpush1.msra.mxu0 %v1549
        %1615 = vmatprep.subr.mxu0 %v1552
        %1616 = vmatpush1.msra.mxu0 %v1551
        %1617 = vmatprep.subr.mxu0 %v1554
        %1618 = vmatpush1.msra.mxu0 %v1553
        %1619 = vmatprep.subr.mxu0 %v1556
        %1620 = vmatpush1.msra.mxu0 %v1555
        %1621 = vmatprep.subr.mxu0 %v1558
        %1622 = vmatpush1.msra.mxu0 %v1557
        %1623 = vmatprep.subr.mxu0 %v1560
        %1624 = vmatpush1.msra.mxu0 %v1559
        %1625 = vmatprep.subr.mxu0 %v1562
        %1626 = vmatpush1.msra.mxu0 %v1561
        %1627 = vmatprep.subr.mxu0 %v1564
        %1628 = vmatpush1.msra.mxu0 %v1563
        %1629 = vmatprep.subr.mxu0 %v1566
        %1630 = vmatpush1.msra.mxu0 %v1565
        %1631 = vmatprep.subr.mxu0 %v1568
        %1632 = vmatpush1.msra.mxu0 %v1567
        %1633 = vmatprep.subr.mxu0 %v1570
        %1634 = vmatpush1.msra.mxu0 %v1569
        %1635 = vmatprep.subr.mxu0 %v1572
        %1636 = vmatpush1.msra.mxu0 %v1571
        %1637 = vmatprep.subr.mxu0 %v1574
        %1638 = vmatpush1.msra.mxu0 %v1573
        %1639 = vmatprep.subr.mxu0 %v1576
        %1640 = vmatpush1.msra.mxu0 %v1575
        %1641 = vmatprep.subr.mxu0 %v1578
        %1642 = vmatpush1.msra.mxu0 %v1577
        %1643 = vmatprep.subr.mxu0 %v1580
        %1644 = vmatpush1.msra.mxu0 %v1579
        %1645 = vmatprep.subr.mxu0 %v1582
        %1646 = vmatpush1.msra.mxu0 %v1581
        %1647 = vmatprep.subr.mxu0 %v1584
        %1648 = vmatpush1.msra.mxu0 %v1583
        %1649 = vmatprep.subr.mxu0 %v1586
        %1650 = vmatpush1.msra.mxu0 %v1585
        %1651 = vmatprep.subr.mxu0 %v1588
        %1652 = vmatpush1.msra.mxu0 %v1587
        %1653 = vmatprep.subr.mxu0 %v1590
        %1654 = vmatpush1.msra.mxu0 %v1589
        %1655 = vmatprep.subr.mxu0 %v1592
        %1656 = vmatpush1.msra.mxu0 %v1591
        %1657 = vmatprep.subr.mxu0 %v1594
        %1658 = vmatpush1.msra.mxu0 %v1593
        %1659 = vmatprep.subr.mxu0 %v1596
        %1660 = vmatpush1.msra.mxu0 %v1595
        %1661 = vmatprep.subr.mxu0 %v1598
        %1662 = vmatpush1.msra.mxu0 %v1597
        %1663 = vmatprep.subr.mxu0 %v1600
        %1664 = vmatpush1.msra.mxu0 %v1599
        %1665 = vmatprep.subr.mxu0 %v1602
        %1666 = vmatpush1.msra.mxu0 %v1601
        %1667 = vmatprep.mubr.f32.mxu0 %v1511
        %1668 = vmatmul.mubr.f32.gmra.mrb[0].mxu0 %v1508
        %v1669 = vpop.f32.mrb[0].mxu0
        %v1670 = vadd.f32 0.0, %v1669
        %v1671 = vpop.f32.mrb[0].mxu0
        %v1672 = vadd.f32 0.0, %v1671
        %1673 = vmatprep.mubr.f32.mxu0 %v1517
        %1674 = vmatmul.mubr.f32.gmra.mrb[0].mxu0 %v1514
        %v1675 = vpop.f32.mrb[0].mxu0
        %v1676 = vadd.f32 0.0, %v1675
        %v1677 = vpop.f32.mrb[0].mxu0
        %v1678 = vadd.f32 0.0, %v1677
        %1679 = vmatprep.mubr.f32.mxu0 %v1523
        %1680 = vmatmul.mubr.f32.gmra.mrb[0].mxu0 %v1520
        %v1681 = vpop.f32.mrb[0].mxu0
        %v1682 = vadd.f32 0.0, %v1681
        %v1683 = vpop.f32.mrb[0].mxu0
        %v1684 = vadd.f32 0.0, %v1683
        %1685 = vmatprep.mubr.f32.mxu0 %v1529
        %1686 = vmatmul.mubr.f32.gmra.mrb[0].mxu0 %v1526
        %v1687 = vpop.f32.mrb[0].mxu0
        %v1688 = vadd.f32 0.0, %v1687
        %v1689 = vpop.f32.mrb[0].mxu0
        %v1690 = vadd.f32 0.0, %v1689
        %1691 = vdwg.mxu0
        %v1692 = vadd.f32 %v1466, %v1670
        %v1693 = vadd.f32 %v1467, %v1672
        %v1694 = vadd.f32 %v1468, %v1676
        %v1695 = vadd.f32 %v1469, %v1678
        %v1696 = vadd.f32 %v1470, %v1682
        %v1697 = vadd.f32 %v1471, %v1684
        %v1698 = vadd.f32 %v1472, %v1688
        %v1699 = vadd.f32 %v1473, %v1690
        %v1700 = vld [vmem:[%s680] sm:$0xfc]
        %v1701 = vld [vmem:[%s680 + $0x8] sm:$0xfc]
        %v1702 = vld [vmem:[%s680 + $0x10] sm:$0x3]
        %v1703 = vld [vmem:[%s680 + $0x18] sm:$0x3]
        %v1704 = vld [vmem:[%s680 + $0x20] sm:$0xfc]
        %v1705 = vld [vmem:[%s680 + $0x28] sm:$0xfc]
        %v1706 = vld [vmem:[%s680 + $0x30] sm:$0x3]
        %v1707 = vld [vmem:[%s680 + $0x38] sm:$0x3]
        %v1708 = vld [vmem:[%s680 + $0x40] sm:$0xfc]
        %v1709 = vld [vmem:[%s680 + $0x48] sm:$0xfc]
        %v1710 = vld [vmem:[%s680 + $0x50] sm:$0x3]
        %v1711 = vld [vmem:[%s680 + $0x58] sm:$0x3]
        %v1712 = vld [vmem:[%s680 + $0x60] sm:$0xfc]
        %v1713 = vld [vmem:[%s680 + $0x68] sm:$0xfc]
        %v1714 = vld [vmem:[%s680 + $0x70] sm:$0x3]
        %v1715 = vld [vmem:[%s680 + $0x78] sm:$0x3]
        %v1732 = vrot.slane %v1700, 2
        %v1733 = vrot.slane %v1702, 2
        %v1734 = vsel %vm1109, %v1732, %v1733
        %v1735 = vrot.slane %v1701, 2
        %v1736 = vrot.slane %v1703, 2
        %v1737 = vsel %vm1109, %v1735, %v1736
        %v1738 = vrot.slane %v1704, 2
        %v1739 = vrot.slane %v1706, 2
        %v1740 = vsel %vm1109, %v1738, %v1739
        %v1741 = vrot.slane %v1705, 2
        %v1742 = vrot.slane %v1707, 2
        %v1743 = vsel %vm1109, %v1741, %v1742
        %v1744 = vrot.slane %v1708, 2
        %v1745 = vrot.slane %v1710, 2
        %v1746 = vsel %vm1109, %v1744, %v1745
        %v1747 = vrot.slane %v1709, 2
        %v1748 = vrot.slane %v1711, 2
        %v1749 = vsel %vm1109, %v1747, %v1748
        %v1750 = vrot.slane %v1712, 2
        %v1751 = vrot.slane %v1714, 2
        %v1752 = vsel %vm1109, %v1750, %v1751
        %v1753 = vrot.slane %v1713, 2
        %v1754 = vrot.slane %v1715, 2
        %v1755 = vsel %vm1109, %v1753, %v1754
        %s1764 = scalar_lea.vmem [#allocation9], 2560
        %v1765 = vld [vmem:[%s1764] sm:$0xff]
        %v1766 = vld [vmem:[%s1764 + $0x8] sm:$0xff]
        %v1767 = vld [vmem:[%s1764 + $0x10] sm:$0xff]
        %v1768 = vld [vmem:[%s1764 + $0x18] sm:$0xff]
        %v1769 = vld [vmem:[%s1764 + $0x20] sm:$0xff]
        %v1770 = vld [vmem:[%s1764 + $0x28] sm:$0xff]
        %v1771 = vld [vmem:[%s1764 + $0x30] sm:$0xff]
        %v1772 = vld [vmem:[%s1764 + $0x38] sm:$0xff]
        %v1773 = vld [vmem:[%s1764 + $0x40] sm:$0xff]
        %v1774 = vld [vmem:[%s1764 + $0x48] sm:$0xff]
        %v1775 = vld [vmem:[%s1764 + $0x50] sm:$0xff]
        %v1776 = vld [vmem:[%s1764 + $0x58] sm:$0xff]
        %v1777 = vld [vmem:[%s1764 + $0x60] sm:$0xff]
        %v1778 = vld [vmem:[%s1764 + $0x68] sm:$0xff]
        %v1779 = vld [vmem:[%s1764 + $0x70] sm:$0xff]
        %v1780 = vld [vmem:[%s1764 + $0x78] sm:$0xff]
        %v1781 = vld [vmem:[%s1764 + $0x80] sm:$0xff]
        %v1782 = vld [vmem:[%s1764 + $0x88] sm:$0xff]
        %v1783 = vld [vmem:[%s1764 + $0x90] sm:$0xff]
        %v1784 = vld [vmem:[%s1764 + $0x98] sm:$0xff]
        %v1785 = vld [vmem:[%s1764 + $0xa0] sm:$0xff]
        %v1786 = vld [vmem:[%s1764 + $0xa8] sm:$0xff]
        %v1787 = vld [vmem:[%s1764 + $0xb0] sm:$0xff]
        %v1788 = vld [vmem:[%s1764 + $0xb8] sm:$0xff]
        %v1789 = vld [vmem:[%s1764 + $0xc0] sm:$0xff]
        %v1790 = vld [vmem:[%s1764 + $0xc8] sm:$0xff]
        %v1791 = vld [vmem:[%s1764 + $0xd0] sm:$0xff]
        %v1792 = vld [vmem:[%s1764 + $0xd8] sm:$0xff]
        %v1793 = vld [vmem:[%s1764 + $0xe0] sm:$0xff]
        %v1794 = vld [vmem:[%s1764 + $0xe8] sm:$0xff]
        %v1795 = vld [vmem:[%s1764 + $0xf0] sm:$0xff]
        %v1796 = vld [vmem:[%s1764 + $0xf8] sm:$0xff]
        %v1797 = vld [vmem:[%s1764 + $0x100] sm:$0xff]
        %v1798 = vld [vmem:[%s1764 + $0x108] sm:$0xff]
        %v1799 = vld [vmem:[%s1764 + $0x110] sm:$0xff]
        %v1800 = vld [vmem:[%s1764 + $0x118] sm:$0xff]
        %v1801 = vld [vmem:[%s1764 + $0x120] sm:$0xff]
        %v1802 = vld [vmem:[%s1764 + $0x128] sm:$0xff]
        %v1803 = vld [vmem:[%s1764 + $0x130] sm:$0xff]
        %v1804 = vld [vmem:[%s1764 + $0x138] sm:$0xff]
        %v1805 = vld [vmem:[%s1764 + $0x140] sm:$0xff]
        %v1806 = vld [vmem:[%s1764 + $0x148] sm:$0xff]
        %v1807 = vld [vmem:[%s1764 + $0x150] sm:$0xff]
        %v1808 = vld [vmem:[%s1764 + $0x158] sm:$0xff]
        %v1809 = vld [vmem:[%s1764 + $0x160] sm:$0xff]
        %v1810 = vld [vmem:[%s1764 + $0x168] sm:$0xff]
        %v1811 = vld [vmem:[%s1764 + $0x170] sm:$0xff]
        %v1812 = vld [vmem:[%s1764 + $0x178] sm:$0xff]
        %v1813 = vld [vmem:[%s1764 + $0x180] sm:$0xff]
        %v1814 = vld [vmem:[%s1764 + $0x188] sm:$0xff]
        %v1815 = vld [vmem:[%s1764 + $0x190] sm:$0xff]
        %v1816 = vld [vmem:[%s1764 + $0x198] sm:$0xff]
        %v1817 = vld [vmem:[%s1764 + $0x1a0] sm:$0xff]
        %v1818 = vld [vmem:[%s1764 + $0x1a8] sm:$0xff]
        %v1819 = vld [vmem:[%s1764 + $0x1b0] sm:$0xff]
        %v1820 = vld [vmem:[%s1764 + $0x1b8] sm:$0xff]
        %v1821 = vld [vmem:[%s1764 + $0x1c0] sm:$0xff]
        %v1822 = vld [vmem:[%s1764 + $0x1c8] sm:$0xff]
        %v1823 = vld [vmem:[%s1764 + $0x1d0] sm:$0xff]
        %v1824 = vld [vmem:[%s1764 + $0x1d8] sm:$0xff]
        %v1825 = vld [vmem:[%s1764 + $0x1e0] sm:$0xff]
        %v1826 = vld [vmem:[%s1764 + $0x1e8] sm:$0xff]
        %v1827 = vld [vmem:[%s1764 + $0x1f0] sm:$0xff]
        %v1828 = vld [vmem:[%s1764 + $0x1f8] sm:$0xff]
        %1829 = vmatprep.subr.mxu0 %v1766
        %1830 = vmatpush1.msra.mxu0 %v1765
        %1831 = vmatprep.subr.mxu0 %v1768
        %1832 = vmatpush1.msra.mxu0 %v1767
        %1833 = vmatprep.subr.mxu0 %v1770
        %1834 = vmatpush1.msra.mxu0 %v1769
        %1835 = vmatprep.subr.mxu0 %v1772
        %1836 = vmatpush1.msra.mxu0 %v1771
        %1837 = vmatprep.subr.mxu0 %v1774
        %1838 = vmatpush1.msra.mxu0 %v1773
        %1839 = vmatprep.subr.mxu0 %v1776
        %1840 = vmatpush1.msra.mxu0 %v1775
        %1841 = vmatprep.subr.mxu0 %v1778
        %1842 = vmatpush1.msra.mxu0 %v1777
        %1843 = vmatprep.subr.mxu0 %v1780
        %1844 = vmatpush1.msra.mxu0 %v1779
        %1845 = vmatprep.subr.mxu0 %v1782
        %1846 = vmatpush1.msra.mxu0 %v1781
        %1847 = vmatprep.subr.mxu0 %v1784
        %1848 = vmatpush1.msra.mxu0 %v1783
        %1849 = vmatprep.subr.mxu0 %v1786
        %1850 = vmatpush1.msra.mxu0 %v1785
        %1851 = vmatprep.subr.mxu0 %v1788
        %1852 = vmatpush1.msra.mxu0 %v1787
        %1853 = vmatprep.subr.mxu0 %v1790
        %1854 = vmatpush1.msra.mxu0 %v1789
        %1855 = vmatprep.subr.mxu0 %v1792
        %1856 = vmatpush1.msra.mxu0 %v1791
        %1857 = vmatprep.subr.mxu0 %v1794
        %1858 = vmatpush1.msra.mxu0 %v1793
        %1859 = vmatprep.subr.mxu0 %v1796
        %1860 = vmatpush1.msra.mxu0 %v1795
        %1861 = vmatprep.subr.mxu0 %v1798
        %1862 = vmatpush1.msra.mxu0 %v1797
        %1863 = vmatprep.subr.mxu0 %v1800
        %1864 = vmatpush1.msra.mxu0 %v1799
        %1865 = vmatprep.subr.mxu0 %v1802
        %1866 = vmatpush1.msra.mxu0 %v1801
        %1867 = vmatprep.subr.mxu0 %v1804
        %1868 = vmatpush1.msra.mxu0 %v1803
        %1869 = vmatprep.subr.mxu0 %v1806
        %1870 = vmatpush1.msra.mxu0 %v1805
        %1871 = vmatprep.subr.mxu0 %v1808
        %1872 = vmatpush1.msra.mxu0 %v1807
        %1873 = vmatprep.subr.mxu0 %v1810
        %1874 = vmatpush1.msra.mxu0 %v1809
        %1875 = vmatprep.subr.mxu0 %v1812
        %1876 = vmatpush1.msra.mxu0 %v1811
        %1877 = vmatprep.subr.mxu0 %v1814
        %1878 = vmatpush1.msra.mxu0 %v1813
        %1879 = vmatprep.subr.mxu0 %v1816
        %1880 = vmatpush1.msra.mxu0 %v1815
        %1881 = vmatprep.subr.mxu0 %v1818
        %1882 = vmatpush1.msra.mxu0 %v1817
        %1883 = vmatprep.subr.mxu0 %v1820
        %1884 = vmatpush1.msra.mxu0 %v1819
        %1885 = vmatprep.subr.mxu0 %v1822
        %1886 = vmatpush1.msra.mxu0 %v1821
        %1887 = vmatprep.subr.mxu0 %v1824
        %1888 = vmatpush1.msra.mxu0 %v1823
        %1889 = vmatprep.subr.mxu0 %v1826
        %1890 = vmatpush1.msra.mxu0 %v1825
        %1891 = vmatprep.subr.mxu0 %v1828
        %1892 = vmatpush1.msra.mxu0 %v1827
        %1893 = vmatprep.mubr.f32.mxu0 %v1737
        %1894 = vmatmul.mubr.f32.gmra.mrb[0].mxu0 %v1734
        %v1895 = vpop.f32.mrb[0].mxu0
        %v1896 = vadd.f32 0.0, %v1895
        %v1897 = vpop.f32.mrb[0].mxu0
        %v1898 = vadd.f32 0.0, %v1897
        %1899 = vmatprep.mubr.f32.mxu0 %v1743
        %1900 = vmatmul.mubr.f32.gmra.mrb[0].mxu0 %v1740
        %v1901 = vpop.f32.mrb[0].mxu0
        %v1902 = vadd.f32 0.0, %v1901
        %v1903 = vpop.f32.mrb[0].mxu0
        %v1904 = vadd.f32 0.0, %v1903
        %1905 = vmatprep.mubr.f32.mxu0 %v1749
        %1906 = vmatmul.mubr.f32.gmra.mrb[0].mxu0 %v1746
        %v1907 = vpop.f32.mrb[0].mxu0
        %v1908 = vadd.f32 0.0, %v1907
        %v1909 = vpop.f32.mrb[0].mxu0
        %v1910 = vadd.f32 0.0, %v1909
        %1911 = vmatprep.mubr.f32.mxu0 %v1755
        %1912 = vmatmul.mubr.f32.gmra.mrb[0].mxu0 %v1752
        %v1913 = vpop.f32.mrb[0].mxu0
        %v1914 = vadd.f32 0.0, %v1913
        %v1915 = vpop.f32.mrb[0].mxu0
        %v1916 = vadd.f32 0.0, %v1915
        %1917 = vdwg.mxu0
        %v1918 = vadd.f32 %v1692, %v1896
        %v1919 = vadd.f32 %v1693, %v1898
        %v1920 = vadd.f32 %v1694, %v1902
        %v1921 = vadd.f32 %v1695, %v1904
        %v1922 = vadd.f32 %v1696, %v1908
        %v1923 = vadd.f32 %v1697, %v1910
        %v1924 = vadd.f32 %v1698, %v1914
        %v1925 = vadd.f32 %v1699, %v1916
        %s1926 = scalar_lea.vmem [#allocation2], 64
        %v1927 = vld [vmem:[%s1926] sm:$0xff]
        %v1928 = vld [vmem:[%s1926 + $0x8] sm:$0xff]
        %v1929 = vld [vmem:[%s1926 + $0x20] sm:$0xff]
        %v1930 = vld [vmem:[%s1926 + $0x28] sm:$0xff]
        %v1931 = vld [vmem:[%s1926 + $0x40] sm:$0xff]
        %v1932 = vld [vmem:[%s1926 + $0x48] sm:$0xff]
        %v1933 = vld [vmem:[%s1926 + $0x60] sm:$0xff]
        %v1934 = vld [vmem:[%s1926 + $0x68] sm:$0xff]
        %s1935 = scalar_lea.vmem [#allocation9], 3072
        %v1936 = vld [vmem:[%s1935] sm:$0xff]
        %v1937 = vld [vmem:[%s1935 + $0x8] sm:$0xff]
        %v1938 = vld [vmem:[%s1935 + $0x10] sm:$0xff]
        %v1939 = vld [vmem:[%s1935 + $0x18] sm:$0xff]
        %v1940 = vld [vmem:[%s1935 + $0x20] sm:$0xff]
        %v1941 = vld [vmem:[%s1935 + $0x28] sm:$0xff]
        %v1942 = vld [vmem:[%s1935 + $0x30] sm:$0xff]
        %v1943 = vld [vmem:[%s1935 + $0x38] sm:$0xff]
        %v1944 = vld [vmem:[%s1935 + $0x40] sm:$0xff]
        %v1945 = vld [vmem:[%s1935 + $0x48] sm:$0xff]
        %v1946 = vld [vmem:[%s1935 + $0x50] sm:$0xff]
        %v1947 = vld [vmem:[%s1935 + $0x58] sm:$0xff]
        %v1948 = vld [vmem:[%s1935 + $0x60] sm:$0xff]
        %v1949 = vld [vmem:[%s1935 + $0x68] sm:$0xff]
        %v1950 = vld [vmem:[%s1935 + $0x70] sm:$0xff]
        %v1951 = vld [vmem:[%s1935 + $0x78] sm:$0xff]
        %v1952 = vld [vmem:[%s1935 + $0x80] sm:$0xff]
        %v1953 = vld [vmem:[%s1935 + $0x88] sm:$0xff]
        %v1954 = vld [vmem:[%s1935 + $0x90] sm:$0xff]
        %v1955 = vld [vmem:[%s1935 + $0x98] sm:$0xff]
        %v1956 = vld [vmem:[%s1935 + $0xa0] sm:$0xff]
        %v1957 = vld [vmem:[%s1935 + $0xa8] sm:$0xff]
        %v1958 = vld [vmem:[%s1935 + $0xb0] sm:$0xff]
        %v1959 = vld [vmem:[%s1935 + $0xb8] sm:$0xff]
        %v1960 = vld [vmem:[%s1935 + $0xc0] sm:$0xff]
        %v1961 = vld [vmem:[%s1935 + $0xc8] sm:$0xff]
        %v1962 = vld [vmem:[%s1935 + $0xd0] sm:$0xff]
        %v1963 = vld [vmem:[%s1935 + $0xd8] sm:$0xff]
        %v1964 = vld [vmem:[%s1935 + $0xe0] sm:$0xff]
        %v1965 = vld [vmem:[%s1935 + $0xe8] sm:$0xff]
        %v1966 = vld [vmem:[%s1935 + $0xf0] sm:$0xff]
        %v1967 = vld [vmem:[%s1935 + $0xf8] sm:$0xff]
        %v1968 = vld [vmem:[%s1935 + $0x100] sm:$0xff]
        %v1969 = vld [vmem:[%s1935 + $0x108] sm:$0xff]
        %v1970 = vld [vmem:[%s1935 + $0x110] sm:$0xff]
        %v1971 = vld [vmem:[%s1935 + $0x118] sm:$0xff]
        %v1972 = vld [vmem:[%s1935 + $0x120] sm:$0xff]
        %v1973 = vld [vmem:[%s1935 + $0x128] sm:$0xff]
        %v1974 = vld [vmem:[%s1935 + $0x130] sm:$0xff]
        %v1975 = vld [vmem:[%s1935 + $0x138] sm:$0xff]
        %v1976 = vld [vmem:[%s1935 + $0x140] sm:$0xff]
        %v1977 = vld [vmem:[%s1935 + $0x148] sm:$0xff]
        %v1978 = vld [vmem:[%s1935 + $0x150] sm:$0xff]
        %v1979 = vld [vmem:[%s1935 + $0x158] sm:$0xff]
        %v1980 = vld [vmem:[%s1935 + $0x160] sm:$0xff]
        %v1981 = vld [vmem:[%s1935 + $0x168] sm:$0xff]
        %v1982 = vld [vmem:[%s1935 + $0x170] sm:$0xff]
        %v1983 = vld [vmem:[%s1935 + $0x178] sm:$0xff]
        %v1984 = vld [vmem:[%s1935 + $0x180] sm:$0xff]
        %v1985 = vld [vmem:[%s1935 + $0x188] sm:$0xff]
        %v1986 = vld [vmem:[%s1935 + $0x190] sm:$0xff]
        %v1987 = vld [vmem:[%s1935 + $0x198] sm:$0xff]
        %v1988 = vld [vmem:[%s1935 + $0x1a0] sm:$0xff]
        %v1989 = vld [vmem:[%s1935 + $0x1a8] sm:$0xff]
        %v1990 = vld [vmem:[%s1935 + $0x1b0] sm:$0xff]
        %v1991 = vld [vmem:[%s1935 + $0x1b8] sm:$0xff]
        %v1992 = vld [vmem:[%s1935 + $0x1c0] sm:$0xff]
        %v1993 = vld [vmem:[%s1935 + $0x1c8] sm:$0xff]
        %v1994 = vld [vmem:[%s1935 + $0x1d0] sm:$0xff]
        %v1995 = vld [vmem:[%s1935 + $0x1d8] sm:$0xff]
        %v1996 = vld [vmem:[%s1935 + $0x1e0] sm:$0xff]
        %v1997 = vld [vmem:[%s1935 + $0x1e8] sm:$0xff]
        %v1998 = vld [vmem:[%s1935 + $0x1f0] sm:$0xff]
        %v1999 = vld [vmem:[%s1935 + $0x1f8] sm:$0xff]
        %2000 = vmatprep.subr.mxu0 %v1937
        %2001 = vmatpush1.msra.mxu0 %v1936
        %2002 = vmatprep.subr.mxu0 %v1939
        %2003 = vmatpush1.msra.mxu0 %v1938
        %2004 = vmatprep.subr.mxu0 %v1941
        %2005 = vmatpush1.msra.mxu0 %v1940
        %2006 = vmatprep.subr.mxu0 %v1943
        %2007 = vmatpush1.msra.mxu0 %v1942
        %2008 = vmatprep.subr.mxu0 %v1945
        %2009 = vmatpush1.msra.mxu0 %v1944
        %2010 = vmatprep.subr.mxu0 %v1947
        %2011 = vmatpush1.msra.mxu0 %v1946
        %2012 = vmatprep.subr.mxu0 %v1949
        %2013 = vmatpush1.msra.mxu0 %v1948
        %2014 = vmatprep.subr.mxu0 %v1951
        %2015 = vmatpush1.msra.mxu0 %v1950
        %2016 = vmatprep.subr.mxu0 %v1953
        %2017 = vmatpush1.msra.mxu0 %v1952
        %2018 = vmatprep.subr.mxu0 %v1955
        %2019 = vmatpush1.msra.mxu0 %v1954
        %2020 = vmatprep.subr.mxu0 %v1957
        %2021 = vmatpush1.msra.mxu0 %v1956
        %2022 = vmatprep.subr.mxu0 %v1959
        %2023 = vmatpush1.msra.mxu0 %v1958
        %2024 = vmatprep.subr.mxu0 %v1961
        %2025 = vmatpush1.msra.mxu0 %v1960
        %2026 = vmatprep.subr.mxu0 %v1963
        %2027 = vmatpush1.msra.mxu0 %v1962
        %2028 = vmatprep.subr.mxu0 %v1965
        %2029 = vmatpush1.msra.mxu0 %v1964
        %2030 = vmatprep.subr.mxu0 %v1967
        %2031 = vmatpush1.msra.mxu0 %v1966
        %2032 = vmatprep.subr.mxu0 %v1969
        %2033 = vmatpush1.msra.mxu0 %v1968
        %2034 = vmatprep.subr.mxu0 %v1971
        %2035 = vmatpush1.msra.mxu0 %v1970
        %2036 = vmatprep.subr.mxu0 %v1973
        %2037 = vmatpush1.msra.mxu0 %v1972
        %2038 = vmatprep.subr.mxu0 %v1975
        %2039 = vmatpush1.msra.mxu0 %v1974
        %2040 = vmatprep.subr.mxu0 %v1977
        %2041 = vmatpush1.msra.mxu0 %v1976
        %2042 = vmatprep.subr.mxu0 %v1979
        %2043 = vmatpush1.msra.mxu0 %v1978
        %2044 = vmatprep.subr.mxu0 %v1981
        %2045 = vmatpush1.msra.mxu0 %v1980
        %2046 = vmatprep.subr.mxu0 %v1983
        %2047 = vmatpush1.msra.mxu0 %v1982
        %2048 = vmatprep.subr.mxu0 %v1985
        %2049 = vmatpush1.msra.mxu0 %v1984
        %2050 = vmatprep.subr.mxu0 %v1987
        %2051 = vmatpush1.msra.mxu0 %v1986
        %2052 = vmatprep.subr.mxu0 %v1989
        %2053 = vmatpush1.msra.mxu0 %v1988
        %2054 = vmatprep.subr.mxu0 %v1991
        %2055 = vmatpush1.msra.mxu0 %v1990
        %2056 = vmatprep.subr.mxu0 %v1993
        %2057 = vmatpush1.msra.mxu0 %v1992
        %2058 = vmatprep.subr.mxu0 %v1995
        %2059 = vmatpush1.msra.mxu0 %v1994
        %2060 = vmatprep.subr.mxu0 %v1997
        %2061 = vmatpush1.msra.mxu0 %v1996
        %2062 = vmatprep.subr.mxu0 %v1999
        %2063 = vmatpush1.msra.mxu0 %v1998
        %2064 = vmatprep.mubr.f32.mxu0 %v1928
        %2065 = vmatmul.mubr.f32.gmra.mrb[0].mxu0 %v1927
        %v2066 = vpop.f32.mrb[0].mxu0
        %v2067 = vadd.f32 0.0, %v2066
        %v2068 = vpop.f32.mrb[0].mxu0
        %v2069 = vadd.f32 0.0, %v2068
        %2070 = vmatprep.mubr.f32.mxu0 %v1930
        %2071 = vmatmul.mubr.f32.gmra.mrb[0].mxu0 %v1929
        %v2072 = vpop.f32.mrb[0].mxu0
        %v2073 = vadd.f32 0.0, %v2072
        %v2074 = vpop.f32.mrb[0].mxu0
        %v2075 = vadd.f32 0.0, %v2074
        %2076 = vmatprep.mubr.f32.mxu0 %v1932
        %2077 = vmatmul.mubr.f32.gmra.mrb[0].mxu0 %v1931
        %v2078 = vpop.f32.mrb[0].mxu0
        %v2079 = vadd.f32 0.0, %v2078
        %v2080 = vpop.f32.mrb[0].mxu0
        %v2081 = vadd.f32 0.0, %v2080
        %2082 = vmatprep.mubr.f32.mxu0 %v1934
        %2083 = vmatmul.mubr.f32.gmra.mrb[0].mxu0 %v1933
        %v2084 = vpop.f32.mrb[0].mxu0
        %v2085 = vadd.f32 0.0, %v2084
        %v2086 = vpop.f32.mrb[0].mxu0
        %v2087 = vadd.f32 0.0, %v2086
        %2088 = vdwg.mxu0
        %v2089 = vadd.f32 %v1918, %v2067
        %v2090 = vadd.f32 %v1919, %v2069
        %v2091 = vadd.f32 %v1920, %v2073
        %v2092 = vadd.f32 %v1921, %v2075
        %v2093 = vadd.f32 %v1922, %v2079
        %v2094 = vadd.f32 %v1923, %v2081
        %v2095 = vadd.f32 %v1924, %v2085
        %v2096 = vadd.f32 %v1925, %v2087
        %v2097 = vld [vmem:[%s1926] sm:$0xfe]
        %v2098 = vld [vmem:[%s1926 + $0x8] sm:$0xfe]
        %v2099 = vld [vmem:[%s1926 + $0x10] sm:$0x1]
        %v2100 = vld [vmem:[%s1926 + $0x18] sm:$0x1]
        %v2101 = vld [vmem:[%s1926 + $0x20] sm:$0xfe]
        %v2102 = vld [vmem:[%s1926 + $0x28] sm:$0xfe]
        %v2103 = vld [vmem:[%s1926 + $0x30] sm:$0x1]
        %v2104 = vld [vmem:[%s1926 + $0x38] sm:$0x1]
        %v2105 = vld [vmem:[%s1926 + $0x40] sm:$0xfe]
        %v2106 = vld [vmem:[%s1926 + $0x48] sm:$0xfe]
        %v2107 = vld [vmem:[%s1926 + $0x50] sm:$0x1]
        %v2108 = vld [vmem:[%s1926 + $0x58] sm:$0x1]
        %v2109 = vld [vmem:[%s1926 + $0x60] sm:$0xfe]
        %v2110 = vld [vmem:[%s1926 + $0x68] sm:$0xfe]
        %v2111 = vld [vmem:[%s1926 + $0x70] sm:$0x1]
        %v2112 = vld [vmem:[%s1926 + $0x78] sm:$0x1]
        %v2129 = vrot.slane %v2097, 1
        %v2130 = vrot.slane %v2099, 1
        %v2131 = vsel %vm801, %v2129, %v2130
        %v2132 = vrot.slane %v2098, 1
        %v2133 = vrot.slane %v2100, 1
        %v2134 = vsel %vm801, %v2132, %v2133
        %v2135 = vrot.slane %v2101, 1
        %v2136 = vrot.slane %v2103, 1
        %v2137 = vsel %vm801, %v2135, %v2136
        %v2138 = vrot.slane %v2102, 1
        %v2139 = vrot.slane %v2104, 1
        %v2140 = vsel %vm801, %v2138, %v2139
        %v2141 = vrot.slane %v2105, 1
        %v2142 = vrot.slane %v2107, 1
        %v2143 = vsel %vm801, %v2141, %v2142
        %v2144 = vrot.slane %v2106, 1
        %v2145 = vrot.slane %v2108, 1
        %v2146 = vsel %vm801, %v2144, %v2145
        %v2147 = vrot.slane %v2109, 1
        %v2148 = vrot.slane %v2111, 1
        %v2149 = vsel %vm801, %v2147, %v2148
        %v2150 = vrot.slane %v2110, 1
        %v2151 = vrot.slane %v2112, 1
        %v2152 = vsel %vm801, %v2150, %v2151
        %s2161 = scalar_lea.vmem [#allocation9], 3584
        %v2162 = vld [vmem:[%s2161] sm:$0xff]
        %v2163 = vld [vmem:[%s2161 + $0x8] sm:$0xff]
        %v2164 = vld [vmem:[%s2161 + $0x10] sm:$0xff]
        %v2165 = vld [vmem:[%s2161 + $0x18] sm:$0xff]
        %v2166 = vld [vmem:[%s2161 + $0x20] sm:$0xff]
        %v2167 = vld [vmem:[%s2161 + $0x28] sm:$0xff]
        %v2168 = vld [vmem:[%s2161 + $0x30] sm:$0xff]
        %v2169 = vld [vmem:[%s2161 + $0x38] sm:$0xff]
        %v2170 = vld [vmem:[%s2161 + $0x40] sm:$0xff]
        %v2171 = vld [vmem:[%s2161 + $0x48] sm:$0xff]
        %v2172 = vld [vmem:[%s2161 + $0x50] sm:$0xff]
        %v2173 = vld [vmem:[%s2161 + $0x58] sm:$0xff]
        %v2174 = vld [vmem:[%s2161 + $0x60] sm:$0xff]
        %v2175 = vld [vmem:[%s2161 + $0x68] sm:$0xff]
        %v2176 = vld [vmem:[%s2161 + $0x70] sm:$0xff]
        %v2177 = vld [vmem:[%s2161 + $0x78] sm:$0xff]
        %v2178 = vld [vmem:[%s2161 + $0x80] sm:$0xff]
        %v2179 = vld [vmem:[%s2161 + $0x88] sm:$0xff]
        %v2180 = vld [vmem:[%s2161 + $0x90] sm:$0xff]
        %v2181 = vld [vmem:[%s2161 + $0x98] sm:$0xff]
        %v2182 = vld [vmem:[%s2161 + $0xa0] sm:$0xff]
        %v2183 = vld [vmem:[%s2161 + $0xa8] sm:$0xff]
        %v2184 = vld [vmem:[%s2161 + $0xb0] sm:$0xff]
        %v2185 = vld [vmem:[%s2161 + $0xb8] sm:$0xff]
        %v2186 = vld [vmem:[%s2161 + $0xc0] sm:$0xff]
        %v2187 = vld [vmem:[%s2161 + $0xc8] sm:$0xff]
        %v2188 = vld [vmem:[%s2161 + $0xd0] sm:$0xff]
        %v2189 = vld [vmem:[%s2161 + $0xd8] sm:$0xff]
        %v2190 = vld [vmem:[%s2161 + $0xe0] sm:$0xff]
        %v2191 = vld [vmem:[%s2161 + $0xe8] sm:$0xff]
        %v2192 = vld [vmem:[%s2161 + $0xf0] sm:$0xff]
        %v2193 = vld [vmem:[%s2161 + $0xf8] sm:$0xff]
        %v2194 = vld [vmem:[%s2161 + $0x100] sm:$0xff]
        %v2195 = vld [vmem:[%s2161 + $0x108] sm:$0xff]
        %v2196 = vld [vmem:[%s2161 + $0x110] sm:$0xff]
        %v2197 = vld [vmem:[%s2161 + $0x118] sm:$0xff]
        %v2198 = vld [vmem:[%s2161 + $0x120] sm:$0xff]
        %v2199 = vld [vmem:[%s2161 + $0x128] sm:$0xff]
        %v2200 = vld [vmem:[%s2161 + $0x130] sm:$0xff]
        %v2201 = vld [vmem:[%s2161 + $0x138] sm:$0xff]
        %v2202 = vld [vmem:[%s2161 + $0x140] sm:$0xff]
        %v2203 = vld [vmem:[%s2161 + $0x148] sm:$0xff]
        %v2204 = vld [vmem:[%s2161 + $0x150] sm:$0xff]
        %v2205 = vld [vmem:[%s2161 + $0x158] sm:$0xff]
        %v2206 = vld [vmem:[%s2161 + $0x160] sm:$0xff]
        %v2207 = vld [vmem:[%s2161 + $0x168] sm:$0xff]
        %v2208 = vld [vmem:[%s2161 + $0x170] sm:$0xff]
        %v2209 = vld [vmem:[%s2161 + $0x178] sm:$0xff]
        %v2210 = vld [vmem:[%s2161 + $0x180] sm:$0xff]
        %v2211 = vld [vmem:[%s2161 + $0x188] sm:$0xff]
        %v2212 = vld [vmem:[%s2161 + $0x190] sm:$0xff]
        %v2213 = vld [vmem:[%s2161 + $0x198] sm:$0xff]
        %v2214 = vld [vmem:[%s2161 + $0x1a0] sm:$0xff]
        %v2215 = vld [vmem:[%s2161 + $0x1a8] sm:$0xff]
        %v2216 = vld [vmem:[%s2161 + $0x1b0] sm:$0xff]
        %v2217 = vld [vmem:[%s2161 + $0x1b8] sm:$0xff]
        %v2218 = vld [vmem:[%s2161 + $0x1c0] sm:$0xff]
        %v2219 = vld [vmem:[%s2161 + $0x1c8] sm:$0xff]
        %v2220 = vld [vmem:[%s2161 + $0x1d0] sm:$0xff]
        %v2221 = vld [vmem:[%s2161 + $0x1d8] sm:$0xff]
        %v2222 = vld [vmem:[%s2161 + $0x1e0] sm:$0xff]
        %v2223 = vld [vmem:[%s2161 + $0x1e8] sm:$0xff]
        %v2224 = vld [vmem:[%s2161 + $0x1f0] sm:$0xff]
        %v2225 = vld [vmem:[%s2161 + $0x1f8] sm:$0xff]
        %2226 = vmatprep.subr.mxu0 %v2163
        %2227 = vmatpush1.msra.mxu0 %v2162
        %2228 = vmatprep.subr.mxu0 %v2165
        %2229 = vmatpush1.msra.mxu0 %v2164
        %2230 = vmatprep.subr.mxu0 %v2167
        %2231 = vmatpush1.msra.mxu0 %v2166
        %2232 = vmatprep.subr.mxu0 %v2169
        %2233 = vmatpush1.msra.mxu0 %v2168
        %2234 = vmatprep.subr.mxu0 %v2171
        %2235 = vmatpush1.msra.mxu0 %v2170
        %2236 = vmatprep.subr.mxu0 %v2173
        %2237 = vmatpush1.msra.mxu0 %v2172
        %2238 = vmatprep.subr.mxu0 %v2175
        %2239 = vmatpush1.msra.mxu0 %v2174
        %2240 = vmatprep.subr.mxu0 %v2177
        %2241 = vmatpush1.msra.mxu0 %v2176
        %2242 = vmatprep.subr.mxu0 %v2179
        %2243 = vmatpush1.msra.mxu0 %v2178
        %2244 = vmatprep.subr.mxu0 %v2181
        %2245 = vmatpush1.msra.mxu0 %v2180
        %2246 = vmatprep.subr.mxu0 %v2183
        %2247 = vmatpush1.msra.mxu0 %v2182
        %2248 = vmatprep.subr.mxu0 %v2185
        %2249 = vmatpush1.msra.mxu0 %v2184
        %2250 = vmatprep.subr.mxu0 %v2187
        %2251 = vmatpush1.msra.mxu0 %v2186
        %2252 = vmatprep.subr.mxu0 %v2189
        %2253 = vmatpush1.msra.mxu0 %v2188
        %2254 = vmatprep.subr.mxu0 %v2191
        %2255 = vmatpush1.msra.mxu0 %v2190
        %2256 = vmatprep.subr.mxu0 %v2193
        %2257 = vmatpush1.msra.mxu0 %v2192
        %2258 = vmatprep.subr.mxu0 %v2195
        %2259 = vmatpush1.msra.mxu0 %v2194
        %2260 = vmatprep.subr.mxu0 %v2197
        %2261 = vmatpush1.msra.mxu0 %v2196
        %2262 = vmatprep.subr.mxu0 %v2199
        %2263 = vmatpush1.msra.mxu0 %v2198
        %2264 = vmatprep.subr.mxu0 %v2201
        %2265 = vmatpush1.msra.mxu0 %v2200
        %2266 = vmatprep.subr.mxu0 %v2203
        %2267 = vmatpush1.msra.mxu0 %v2202
        %2268 = vmatprep.subr.mxu0 %v2205
        %2269 = vmatpush1.msra.mxu0 %v2204
        %2270 = vmatprep.subr.mxu0 %v2207
        %2271 = vmatpush1.msra.mxu0 %v2206
        %2272 = vmatprep.subr.mxu0 %v2209
        %2273 = vmatpush1.msra.mxu0 %v2208
        %2274 = vmatprep.subr.mxu0 %v2211
        %2275 = vmatpush1.msra.mxu0 %v2210
        %2276 = vmatprep.subr.mxu0 %v2213
        %2277 = vmatpush1.msra.mxu0 %v2212
        %2278 = vmatprep.subr.mxu0 %v2215
        %2279 = vmatpush1.msra.mxu0 %v2214
        %2280 = vmatprep.subr.mxu0 %v2217
        %2281 = vmatpush1.msra.mxu0 %v2216
        %2282 = vmatprep.subr.mxu0 %v2219
        %2283 = vmatpush1.msra.mxu0 %v2218
        %2284 = vmatprep.subr.mxu0 %v2221
        %2285 = vmatpush1.msra.mxu0 %v2220
        %2286 = vmatprep.subr.mxu0 %v2223
        %2287 = vmatpush1.msra.mxu0 %v2222
        %2288 = vmatprep.subr.mxu0 %v2225
        %2289 = vmatpush1.msra.mxu0 %v2224
        %2290 = vmatprep.mubr.f32.mxu0 %v2134
        %2291 = vmatmul.mubr.f32.gmra.mrb[0].mxu0 %v2131
        %v2292 = vpop.f32.mrb[0].mxu0
        %v2293 = vadd.f32 0.0, %v2292
        %v2294 = vpop.f32.mrb[0].mxu0
        %v2295 = vadd.f32 0.0, %v2294
        %2296 = vmatprep.mubr.f32.mxu0 %v2140
        %2297 = vmatmul.mubr.f32.gmra.mrb[0].mxu0 %v2137
        %v2298 = vpop.f32.mrb[0].mxu0
        %v2299 = vadd.f32 0.0, %v2298
        %v2300 = vpop.f32.mrb[0].mxu0
        %v2301 = vadd.f32 0.0, %v2300
        %2302 = vmatprep.mubr.f32.mxu0 %v2146
        %2303 = vmatmul.mubr.f32.gmra.mrb[0].mxu0 %v2143
        %v2304 = vpop.f32.mrb[0].mxu0
        %v2305 = vadd.f32 0.0, %v2304
        %v2306 = vpop.f32.mrb[0].mxu0
        %v2307 = vadd.f32 0.0, %v2306
        %2308 = vmatprep.mubr.f32.mxu0 %v2152
        %2309 = vmatmul.mubr.f32.gmra.mrb[0].mxu0 %v2149
        %v2310 = vpop.f32.mrb[0].mxu0
        %v2311 = vadd.f32 0.0, %v2310
        %v2312 = vpop.f32.mrb[0].mxu0
        %v2313 = vadd.f32 0.0, %v2312
        %2314 = vdwg.mxu0
        %v2315 = vadd.f32 %v2089, %v2293
        %v2316 = vadd.f32 %v2090, %v2295
        %v2317 = vadd.f32 %v2091, %v2299
        %v2318 = vadd.f32 %v2092, %v2301
        %v2319 = vadd.f32 %v2093, %v2305
        %v2320 = vadd.f32 %v2094, %v2307
        %v2321 = vadd.f32 %v2095, %v2311
        %v2322 = vadd.f32 %v2096, %v2313
        %v2323 = vld [vmem:[%s1926] sm:$0xfc]
        %v2324 = vld [vmem:[%s1926 + $0x8] sm:$0xfc]
        %v2325 = vld [vmem:[%s1926 + $0x10] sm:$0x3]
        %v2326 = vld [vmem:[%s1926 + $0x18] sm:$0x3]
        %v2327 = vld [vmem:[%s1926 + $0x20] sm:$0xfc]
        %v2328 = vld [vmem:[%s1926 + $0x28] sm:$0xfc]
        %v2329 = vld [vmem:[%s1926 + $0x30] sm:$0x3]
        %v2330 = vld [vmem:[%s1926 + $0x38] sm:$0x3]
        %v2331 = vld [vmem:[%s1926 + $0x40] sm:$0xfc]
        %v2332 = vld [vmem:[%s1926 + $0x48] sm:$0xfc]
        %v2333 = vld [vmem:[%s1926 + $0x50] sm:$0x3]
        %v2334 = vld [vmem:[%s1926 + $0x58] sm:$0x3]
        %v2335 = vld [vmem:[%s1926 + $0x60] sm:$0xfc]
        %v2336 = vld [vmem:[%s1926 + $0x68] sm:$0xfc]
        %v2337 = vld [vmem:[%s1926 + $0x70] sm:$0x3]
        %v2338 = vld [vmem:[%s1926 + $0x78] sm:$0x3]
        %v2355 = vrot.slane %v2323, 2
        %v2356 = vrot.slane %v2325, 2
        %v2357 = vsel %vm1109, %v2355, %v2356
        %v2358 = vrot.slane %v2324, 2
        %v2359 = vrot.slane %v2326, 2
        %v2360 = vsel %vm1109, %v2358, %v2359
        %v2361 = vrot.slane %v2327, 2
        %v2362 = vrot.slane %v2329, 2
        %v2363 = vsel %vm1109, %v2361, %v2362
        %v2364 = vrot.slane %v2328, 2
        %v2365 = vrot.slane %v2330, 2
        %v2366 = vsel %vm1109, %v2364, %v2365
        %v2367 = vrot.slane %v2331, 2
        %v2368 = vrot.slane %v2333, 2
        %v2369 = vsel %vm1109, %v2367, %v2368
        %v2370 = vrot.slane %v2332, 2
        %v2371 = vrot.slane %v2334, 2
        %v2372 = vsel %vm1109, %v2370, %v2371
        %v2373 = vrot.slane %v2335, 2
        %v2374 = vrot.slane %v2337, 2
        %v2375 = vsel %vm1109, %v2373, %v2374
        %v2376 = vrot.slane %v2336, 2
        %v2377 = vrot.slane %v2338, 2
        %v2378 = vsel %vm1109, %v2376, %v2377
        %s2387 = scalar_lea.vmem [#allocation9], 4096
        %v2388 = vld [vmem:[%s2387] sm:$0xff]
        %v2389 = vld [vmem:[%s2387 + $0x8] sm:$0xff]
        %v2390 = vld [vmem:[%s2387 + $0x10] sm:$0xff]
        %v2391 = vld [vmem:[%s2387 + $0x18] sm:$0xff]
        %v2392 = vld [vmem:[%s2387 + $0x20] sm:$0xff]
        %v2393 = vld [vmem:[%s2387 + $0x28] sm:$0xff]
        %v2394 = vld [vmem:[%s2387 + $0x30] sm:$0xff]
        %v2395 = vld [vmem:[%s2387 + $0x38] sm:$0xff]
        %v2396 = vld [vmem:[%s2387 + $0x40] sm:$0xff]
        %v2397 = vld [vmem:[%s2387 + $0x48] sm:$0xff]
        %v2398 = vld [vmem:[%s2387 + $0x50] sm:$0xff]
        %v2399 = vld [vmem:[%s2387 + $0x58] sm:$0xff]
        %v2400 = vld [vmem:[%s2387 + $0x60] sm:$0xff]
        %v2401 = vld [vmem:[%s2387 + $0x68] sm:$0xff]
        %v2402 = vld [vmem:[%s2387 + $0x70] sm:$0xff]
        %v2403 = vld [vmem:[%s2387 + $0x78] sm:$0xff]
        %v2404 = vld [vmem:[%s2387 + $0x80] sm:$0xff]
        %v2405 = vld [vmem:[%s2387 + $0x88] sm:$0xff]
        %v2406 = vld [vmem:[%s2387 + $0x90] sm:$0xff]
        %v2407 = vld [vmem:[%s2387 + $0x98] sm:$0xff]
        %v2408 = vld [vmem:[%s2387 + $0xa0] sm:$0xff]
        %v2409 = vld [vmem:[%s2387 + $0xa8] sm:$0xff]
        %v2410 = vld [vmem:[%s2387 + $0xb0] sm:$0xff]
        %v2411 = vld [vmem:[%s2387 + $0xb8] sm:$0xff]
        %v2412 = vld [vmem:[%s2387 + $0xc0] sm:$0xff]
        %v2413 = vld [vmem:[%s2387 + $0xc8] sm:$0xff]
        %v2414 = vld [vmem:[%s2387 + $0xd0] sm:$0xff]
        %v2415 = vld [vmem:[%s2387 + $0xd8] sm:$0xff]
        %v2416 = vld [vmem:[%s2387 + $0xe0] sm:$0xff]
        %v2417 = vld [vmem:[%s2387 + $0xe8] sm:$0xff]
        %v2418 = vld [vmem:[%s2387 + $0xf0] sm:$0xff]
        %v2419 = vld [vmem:[%s2387 + $0xf8] sm:$0xff]
        %v2420 = vld [vmem:[%s2387 + $0x100] sm:$0xff]
        %v2421 = vld [vmem:[%s2387 + $0x108] sm:$0xff]
        %v2422 = vld [vmem:[%s2387 + $0x110] sm:$0xff]
        %v2423 = vld [vmem:[%s2387 + $0x118] sm:$0xff]
        %v2424 = vld [vmem:[%s2387 + $0x120] sm:$0xff]
        %v2425 = vld [vmem:[%s2387 + $0x128] sm:$0xff]
        %v2426 = vld [vmem:[%s2387 + $0x130] sm:$0xff]
        %v2427 = vld [vmem:[%s2387 + $0x138] sm:$0xff]
        %v2428 = vld [vmem:[%s2387 + $0x140] sm:$0xff]
        %v2429 = vld [vmem:[%s2387 + $0x148] sm:$0xff]
        %v2430 = vld [vmem:[%s2387 + $0x150] sm:$0xff]
        %v2431 = vld [vmem:[%s2387 + $0x158] sm:$0xff]
        %v2432 = vld [vmem:[%s2387 + $0x160] sm:$0xff]
        %v2433 = vld [vmem:[%s2387 + $0x168] sm:$0xff]
        %v2434 = vld [vmem:[%s2387 + $0x170] sm:$0xff]
        %v2435 = vld [vmem:[%s2387 + $0x178] sm:$0xff]
        %v2436 = vld [vmem:[%s2387 + $0x180] sm:$0xff]
        %v2437 = vld [vmem:[%s2387 + $0x188] sm:$0xff]
        %v2438 = vld [vmem:[%s2387 + $0x190] sm:$0xff]
        %v2439 = vld [vmem:[%s2387 + $0x198] sm:$0xff]
        %v2440 = vld [vmem:[%s2387 + $0x1a0] sm:$0xff]
        %v2441 = vld [vmem:[%s2387 + $0x1a8] sm:$0xff]
        %v2442 = vld [vmem:[%s2387 + $0x1b0] sm:$0xff]
        %v2443 = vld [vmem:[%s2387 + $0x1b8] sm:$0xff]
        %v2444 = vld [vmem:[%s2387 + $0x1c0] sm:$0xff]
        %v2445 = vld [vmem:[%s2387 + $0x1c8] sm:$0xff]
        %v2446 = vld [vmem:[%s2387 + $0x1d0] sm:$0xff]
        %v2447 = vld [vmem:[%s2387 + $0x1d8] sm:$0xff]
        %v2448 = vld [vmem:[%s2387 + $0x1e0] sm:$0xff]
        %v2449 = vld [vmem:[%s2387 + $0x1e8] sm:$0xff]
        %v2450 = vld [vmem:[%s2387 + $0x1f0] sm:$0xff]
        %v2451 = vld [vmem:[%s2387 + $0x1f8] sm:$0xff]
        %2452 = vmatprep.subr.mxu0 %v2389
        %2453 = vmatpush1.msra.mxu0 %v2388
        %2454 = vmatprep.subr.mxu0 %v2391
        %2455 = vmatpush1.msra.mxu0 %v2390
        %2456 = vmatprep.subr.mxu0 %v2393
        %2457 = vmatpush1.msra.mxu0 %v2392
        %2458 = vmatprep.subr.mxu0 %v2395
        %2459 = vmatpush1.msra.mxu0 %v2394
        %2460 = vmatprep.subr.mxu0 %v2397
        %2461 = vmatpush1.msra.mxu0 %v2396
        %2462 = vmatprep.subr.mxu0 %v2399
        %2463 = vmatpush1.msra.mxu0 %v2398
        %2464 = vmatprep.subr.mxu0 %v2401
        %2465 = vmatpush1.msra.mxu0 %v2400
        %2466 = vmatprep.subr.mxu0 %v2403
        %2467 = vmatpush1.msra.mxu0 %v2402
        %2468 = vmatprep.subr.mxu0 %v2405
        %2469 = vmatpush1.msra.mxu0 %v2404
        %2470 = vmatprep.subr.mxu0 %v2407
        %2471 = vmatpush1.msra.mxu0 %v2406
        %2472 = vmatprep.subr.mxu0 %v2409
        %2473 = vmatpush1.msra.mxu0 %v2408
        %2474 = vmatprep.subr.mxu0 %v2411
        %2475 = vmatpush1.msra.mxu0 %v2410
        %2476 = vmatprep.subr.mxu0 %v2413
        %2477 = vmatpush1.msra.mxu0 %v2412
        %2478 = vmatprep.subr.mxu0 %v2415
        %2479 = vmatpush1.msra.mxu0 %v2414
        %2480 = vmatprep.subr.mxu0 %v2417
        %2481 = vmatpush1.msra.mxu0 %v2416
        %2482 = vmatprep.subr.mxu0 %v2419
        %2483 = vmatpush1.msra.mxu0 %v2418
        %2484 = vmatprep.subr.mxu0 %v2421
        %2485 = vmatpush1.msra.mxu0 %v2420
        %2486 = vmatprep.subr.mxu0 %v2423
        %2487 = vmatpush1.msra.mxu0 %v2422
        %2488 = vmatprep.subr.mxu0 %v2425
        %2489 = vmatpush1.msra.mxu0 %v2424
        %2490 = vmatprep.subr.mxu0 %v2427
        %2491 = vmatpush1.msra.mxu0 %v2426
        %2492 = vmatprep.subr.mxu0 %v2429
        %2493 = vmatpush1.msra.mxu0 %v2428
        %2494 = vmatprep.subr.mxu0 %v2431
        %2495 = vmatpush1.msra.mxu0 %v2430
        %2496 = vmatprep.subr.mxu0 %v2433
        %2497 = vmatpush1.msra.mxu0 %v2432
        %2498 = vmatprep.subr.mxu0 %v2435
        %2499 = vmatpush1.msra.mxu0 %v2434
        %2500 = vmatprep.subr.mxu0 %v2437
        %2501 = vmatpush1.msra.mxu0 %v2436
        %2502 = vmatprep.subr.mxu0 %v2439
        %2503 = vmatpush1.msra.mxu0 %v2438
        %2504 = vmatprep.subr.mxu0 %v2441
        %2505 = vmatpush1.msra.mxu0 %v2440
        %2506 = vmatprep.subr.mxu0 %v2443
        %2507 = vmatpush1.msra.mxu0 %v2442
        %2508 = vmatprep.subr.mxu0 %v2445
        %2509 = vmatpush1.msra.mxu0 %v2444
        %2510 = vmatprep.subr.mxu0 %v2447
        %2511 = vmatpush1.msra.mxu0 %v2446
        %2512 = vmatprep.subr.mxu0 %v2449
        %2513 = vmatpush1.msra.mxu0 %v2448
        %2514 = vmatprep.subr.mxu0 %v2451
        %2515 = vmatpush1.msra.mxu0 %v2450
        %2516 = vmatprep.mubr.f32.mxu0 %v2360
        %2517 = vmatmul.mubr.f32.gmra.mrb[0].mxu0 %v2357
        %v2518 = vpop.f32.mrb[0].mxu0
        %v2519 = vadd.f32 0.0, %v2518
        %v2520 = vpop.f32.mrb[0].mxu0
        %v2521 = vadd.f32 0.0, %v2520
        %2522 = vmatprep.mubr.f32.mxu0 %v2366
        %2523 = vmatmul.mubr.f32.gmra.mrb[0].mxu0 %v2363
        %v2524 = vpop.f32.mrb[0].mxu0
        %v2525 = vadd.f32 0.0, %v2524
        %v2526 = vpop.f32.mrb[0].mxu0
        %v2527 = vadd.f32 0.0, %v2526
        %2528 = vmatprep.mubr.f32.mxu0 %v2372
        %2529 = vmatmul.mubr.f32.gmra.mrb[0].mxu0 %v2369
        %v2530 = vpop.f32.mrb[0].mxu0
        %v2531 = vadd.f32 0.0, %v2530
        %v2532 = vpop.f32.mrb[0].mxu0
        %v2533 = vadd.f32 0.0, %v2532
        %2534 = vmatprep.mubr.f32.mxu0 %v2378
        %2535 = vmatmul.mubr.f32.gmra.mrb[0].mxu0 %v2375
        %v2536 = vpop.f32.mrb[0].mxu0
        %v2537 = vadd.f32 0.0, %v2536
        %v2538 = vpop.f32.mrb[0].mxu0
        %v2539 = vadd.f32 0.0, %v2538
        %2540 = vdwg.mxu0
        %v2541 = vadd.f32 %v2315, %v2519
        %v2542 = vadd.f32 %v2316, %v2521
        %v2543 = vadd.f32 %v2317, %v2525
        %v2544 = vadd.f32 %v2318, %v2527
        %v2545 = vadd.f32 %v2319, %v2531
        %v2546 = vadd.f32 %v2320, %v2533
        %v2547 = vadd.f32 %v2321, %v2537
        %v2548 = vadd.f32 %v2322, %v2539
        %v2549 = vadd.f32 %v459, %v2541
        %v2550 = vadd.f32 %v460, %v2542
        %v2551 = vadd.f32 %v461, %v2543
        %v2552 = vadd.f32 %v462, %v2544
        %v2553 = vadd.f32 %v463, %v2545
        %v2554 = vadd.f32 %v464, %v2546
        %v2555 = vadd.f32 %v465, %v2547
        %v2556 = vadd.f32 %v466, %v2548
        %v2557 = vld [vmem:[#allocation11] sm:$0x3]
        %v2559 = vlaneseq
        %v2560 = vshrl.u32 %v2559, 7
        %v2561 = vsub.s32 0, %v2560
        %v2562 = vrot.slane %v2557, %v2561
        %v2563 = vlaneseq
        %v2564 = vshrl.u32 %v2563, 7
        %v2565 = vsub.s32 1, %v2564
        %v2566 = vrot.slane %v2557, %v2565
        %v2569 = vadd.f32 %v2549, %v2562
        %v2570 = vadd.f32 %v2550, %v2566
        %v2571 = vadd.f32 %v2551, %v2562
        %v2572 = vadd.f32 %v2552, %v2566
        %v2573 = vadd.f32 %v2553, %v2562
        %v2574 = vadd.f32 %v2554, %v2566
        %v2575 = vadd.f32 %v2555, %v2562
        %v2576 = vadd.f32 %v2556, %v2566
        %v2577 = vld [vmem:[#allocation12] sm:$0xff]
        %v2578 = vld [vmem:[#allocation12 + $0x8] sm:$0xff]
        %v2579 = vld [vmem:[#allocation12 + $0x10] sm:$0xff]
        %v2580 = vld [vmem:[#allocation12 + $0x18] sm:$0xff]
        %v2581 = vld [vmem:[#allocation12 + $0x20] sm:$0xff]
        %v2582 = vld [vmem:[#allocation12 + $0x28] sm:$0xff]
        %v2583 = vld [vmem:[#allocation12 + $0x30] sm:$0xff]
        %v2584 = vld [vmem:[#allocation12 + $0x38] sm:$0xff]
        %v2585 = vld [vmem:[#allocation12 + $0x40] sm:$0xff]
        %v2586 = vld [vmem:[#allocation12 + $0x48] sm:$0xff]
        %v2587 = vld [vmem:[#allocation12 + $0x50] sm:$0xff]
        %v2588 = vld [vmem:[#allocation12 + $0x58] sm:$0xff]
        %v2589 = vld [vmem:[#allocation12 + $0x60] sm:$0xff]
        %v2590 = vld [vmem:[#allocation12 + $0x68] sm:$0xff]
        %v2591 = vld [vmem:[#allocation12 + $0x70] sm:$0xff]
        %v2592 = vld [vmem:[#allocation12 + $0x78] sm:$0xff]
        %v2593 = vld [vmem:[#allocation12 + $0x80] sm:$0xff]
        %v2594 = vld [vmem:[#allocation12 + $0x88] sm:$0xff]
        %v2595 = vld [vmem:[#allocation12 + $0x90] sm:$0xff]
        %v2596 = vld [vmem:[#allocation12 + $0x98] sm:$0xff]
        %v2597 = vld [vmem:[#allocation12 + $0xa0] sm:$0xff]
        %v2598 = vld [vmem:[#allocation12 + $0xa8] sm:$0xff]
        %v2599 = vld [vmem:[#allocation12 + $0xb0] sm:$0xff]
        %v2600 = vld [vmem:[#allocation12 + $0xb8] sm:$0xff]
        %v2601 = vld [vmem:[#allocation12 + $0xc0] sm:$0xff]
        %v2602 = vld [vmem:[#allocation12 + $0xc8] sm:$0xff]
        %v2603 = vld [vmem:[#allocation12 + $0xd0] sm:$0xff]
        %v2604 = vld [vmem:[#allocation12 + $0xd8] sm:$0xff]
        %v2605 = vld [vmem:[#allocation12 + $0xe0] sm:$0xff]
        %v2606 = vld [vmem:[#allocation12 + $0xe8] sm:$0xff]
        %v2607 = vld [vmem:[#allocation12 + $0xf0] sm:$0xff]
        %v2608 = vld [vmem:[#allocation12 + $0xf8] sm:$0xff]
        %v2609 = vld [vmem:[#allocation12 + $0x100] sm:$0xff]
        %v2610 = vld [vmem:[#allocation12 + $0x108] sm:$0xff]
        %v2611 = vld [vmem:[#allocation12 + $0x110] sm:$0xff]
        %v2612 = vld [vmem:[#allocation12 + $0x118] sm:$0xff]
        %v2613 = vld [vmem:[#allocation12 + $0x120] sm:$0xff]
        %v2614 = vld [vmem:[#allocation12 + $0x128] sm:$0xff]
        %v2615 = vld [vmem:[#allocation12 + $0x130] sm:$0xff]
        %v2616 = vld [vmem:[#allocation12 + $0x138] sm:$0xff]
        %v2617 = vld [vmem:[#allocation12 + $0x140] sm:$0xff]
        %v2618 = vld [vmem:[#allocation12 + $0x148] sm:$0xff]
        %v2619 = vld [vmem:[#allocation12 + $0x150] sm:$0xff]
        %v2620 = vld [vmem:[#allocation12 + $0x158] sm:$0xff]
        %v2621 = vld [vmem:[#allocation12 + $0x160] sm:$0xff]
        %v2622 = vld [vmem:[#allocation12 + $0x168] sm:$0xff]
        %v2623 = vld [vmem:[#allocation12 + $0x170] sm:$0xff]
        %v2624 = vld [vmem:[#allocation12 + $0x178] sm:$0xff]
        %v2625 = vld [vmem:[#allocation12 + $0x180] sm:$0xff]
        %v2626 = vld [vmem:[#allocation12 + $0x188] sm:$0xff]
        %v2627 = vld [vmem:[#allocation12 + $0x190] sm:$0xff]
        %v2628 = vld [vmem:[#allocation12 + $0x198] sm:$0xff]
        %v2629 = vld [vmem:[#allocation12 + $0x1a0] sm:$0xff]
        %v2630 = vld [vmem:[#allocation12 + $0x1a8] sm:$0xff]
        %v2631 = vld [vmem:[#allocation12 + $0x1b0] sm:$0xff]
        %v2632 = vld [vmem:[#allocation12 + $0x1b8] sm:$0xff]
        %v2633 = vld [vmem:[#allocation12 + $0x1c0] sm:$0xff]
        %v2634 = vld [vmem:[#allocation12 + $0x1c8] sm:$0xff]
        %v2635 = vld [vmem:[#allocation12 + $0x1d0] sm:$0xff]
        %v2636 = vld [vmem:[#allocation12 + $0x1d8] sm:$0xff]
        %v2637 = vld [vmem:[#allocation12 + $0x1e0] sm:$0xff]
        %v2638 = vld [vmem:[#allocation12 + $0x1e8] sm:$0xff]
        %v2639 = vld [vmem:[#allocation12 + $0x1f0] sm:$0xff]
        %v2640 = vld [vmem:[#allocation12 + $0x1f8] sm:$0xff]
        %v2641 = vld [vmem:[#allocation12 + $0x200] sm:$0xff]
        %v2642 = vld [vmem:[#allocation12 + $0x208] sm:$0xff]
        %v2643 = vld [vmem:[#allocation12 + $0x210] sm:$0xff]
        %v2644 = vld [vmem:[#allocation12 + $0x218] sm:$0xff]
        %v2645 = vld [vmem:[#allocation12 + $0x220] sm:$0xff]
        %v2646 = vld [vmem:[#allocation12 + $0x228] sm:$0xff]
        %v2647 = vld [vmem:[#allocation12 + $0x230] sm:$0xff]
        %v2648 = vld [vmem:[#allocation12 + $0x238] sm:$0xff]
        %v2649 = vld [vmem:[#allocation12 + $0x240] sm:$0xff]
        %v2650 = vld [vmem:[#allocation12 + $0x248] sm:$0xff]
        %v2651 = vld [vmem:[#allocation12 + $0x250] sm:$0xff]
        %v2652 = vld [vmem:[#allocation12 + $0x258] sm:$0xff]
        %v2653 = vld [vmem:[#allocation12 + $0x260] sm:$0xff]
        %v2654 = vld [vmem:[#allocation12 + $0x268] sm:$0xff]
        %v2655 = vld [vmem:[#allocation12 + $0x270] sm:$0xff]
        %v2656 = vld [vmem:[#allocation12 + $0x278] sm:$0xff]
        %v2657 = vld [vmem:[#allocation12 + $0x280] sm:$0xff]
        %v2658 = vld [vmem:[#allocation12 + $0x288] sm:$0xff]
        %v2659 = vld [vmem:[#allocation12 + $0x290] sm:$0xff]
        %v2660 = vld [vmem:[#allocation12 + $0x298] sm:$0xff]
        %v2661 = vld [vmem:[#allocation12 + $0x2a0] sm:$0xff]
        %v2662 = vld [vmem:[#allocation12 + $0x2a8] sm:$0xff]
        %v2663 = vld [vmem:[#allocation12 + $0x2b0] sm:$0xff]
        %v2664 = vld [vmem:[#allocation12 + $0x2b8] sm:$0xff]
        %v2665 = vld [vmem:[#allocation12 + $0x2c0] sm:$0xff]
        %v2666 = vld [vmem:[#allocation12 + $0x2c8] sm:$0xff]
        %v2667 = vld [vmem:[#allocation12 + $0x2d0] sm:$0xff]
        %v2668 = vld [vmem:[#allocation12 + $0x2d8] sm:$0xff]
        %v2669 = vld [vmem:[#allocation12 + $0x2e0] sm:$0xff]
        %v2670 = vld [vmem:[#allocation12 + $0x2e8] sm:$0xff]
        %v2671 = vld [vmem:[#allocation12 + $0x2f0] sm:$0xff]
        %v2672 = vld [vmem:[#allocation12 + $0x2f8] sm:$0xff]
        %v2673 = vld [vmem:[#allocation12 + $0x300] sm:$0xff]
        %v2674 = vld [vmem:[#allocation12 + $0x308] sm:$0xff]
        %v2675 = vld [vmem:[#allocation12 + $0x310] sm:$0xff]
        %v2676 = vld [vmem:[#allocation12 + $0x318] sm:$0xff]
        %v2677 = vld [vmem:[#allocation12 + $0x320] sm:$0xff]
        %v2678 = vld [vmem:[#allocation12 + $0x328] sm:$0xff]
        %v2679 = vld [vmem:[#allocation12 + $0x330] sm:$0xff]
        %v2680 = vld [vmem:[#allocation12 + $0x338] sm:$0xff]
        %v2681 = vld [vmem:[#allocation12 + $0x340] sm:$0xff]
        %v2682 = vld [vmem:[#allocation12 + $0x348] sm:$0xff]
        %v2683 = vld [vmem:[#allocation12 + $0x350] sm:$0xff]
        %v2684 = vld [vmem:[#allocation12 + $0x358] sm:$0xff]
        %v2685 = vld [vmem:[#allocation12 + $0x360] sm:$0xff]
        %v2686 = vld [vmem:[#allocation12 + $0x368] sm:$0xff]
        %v2687 = vld [vmem:[#allocation12 + $0x370] sm:$0xff]
        %v2688 = vld [vmem:[#allocation12 + $0x378] sm:$0xff]
        %v2689 = vld [vmem:[#allocation12 + $0x380] sm:$0xff]
        %v2690 = vld [vmem:[#allocation12 + $0x388] sm:$0xff]
        %v2691 = vld [vmem:[#allocation12 + $0x390] sm:$0xff]
        %v2692 = vld [vmem:[#allocation12 + $0x398] sm:$0xff]
        %v2693 = vld [vmem:[#allocation12 + $0x3a0] sm:$0xff]
        %v2694 = vld [vmem:[#allocation12 + $0x3a8] sm:$0xff]
        %v2695 = vld [vmem:[#allocation12 + $0x3b0] sm:$0xff]
        %v2696 = vld [vmem:[#allocation12 + $0x3b8] sm:$0xff]
        %v2697 = vld [vmem:[#allocation12 + $0x3c0] sm:$0xff]
        %v2698 = vld [vmem:[#allocation12 + $0x3c8] sm:$0xff]
        %v2699 = vld [vmem:[#allocation12 + $0x3d0] sm:$0xff]
        %v2700 = vld [vmem:[#allocation12 + $0x3d8] sm:$0xff]
        %v2701 = vld [vmem:[#allocation12 + $0x3e0] sm:$0xff]
        %v2702 = vld [vmem:[#allocation12 + $0x3e8] sm:$0xff]
        %v2703 = vld [vmem:[#allocation12 + $0x3f0] sm:$0xff]
        %v2704 = vld [vmem:[#allocation12 + $0x3f8] sm:$0xff]
        %v2705 = vld [vmem:[#allocation12 + $0x400] sm:$0xff]
        %v2706 = vld [vmem:[#allocation12 + $0x408] sm:$0xff]
        %v2707 = vld [vmem:[#allocation12 + $0x410] sm:$0xff]
        %v2708 = vld [vmem:[#allocation12 + $0x418] sm:$0xff]
        %v2709 = vld [vmem:[#allocation12 + $0x420] sm:$0xff]
        %v2710 = vld [vmem:[#allocation12 + $0x428] sm:$0xff]
        %v2711 = vld [vmem:[#allocation12 + $0x430] sm:$0xff]
        %v2712 = vld [vmem:[#allocation12 + $0x438] sm:$0xff]
        %v2713 = vld [vmem:[#allocation12 + $0x440] sm:$0xff]
        %v2714 = vld [vmem:[#allocation12 + $0x448] sm:$0xff]
        %v2715 = vld [vmem:[#allocation12 + $0x450] sm:$0xff]
        %v2716 = vld [vmem:[#allocation12 + $0x458] sm:$0xff]
        %v2717 = vld [vmem:[#allocation12 + $0x460] sm:$0xff]
        %v2718 = vld [vmem:[#allocation12 + $0x468] sm:$0xff]
        %v2719 = vld [vmem:[#allocation12 + $0x470] sm:$0xff]
        %v2720 = vld [vmem:[#allocation12 + $0x478] sm:$0xff]
        %v2721 = vld [vmem:[#allocation12 + $0x480] sm:$0xff]
        %v2722 = vld [vmem:[#allocation12 + $0x488] sm:$0xff]
        %v2723 = vld [vmem:[#allocation12 + $0x490] sm:$0xff]
        %v2724 = vld [vmem:[#allocation12 + $0x498] sm:$0xff]
        %v2725 = vld [vmem:[#allocation12 + $0x4a0] sm:$0xff]
        %v2726 = vld [vmem:[#allocation12 + $0x4a8] sm:$0xff]
        %v2727 = vld [vmem:[#allocation12 + $0x4b0] sm:$0xff]
        %v2728 = vld [vmem:[#allocation12 + $0x4b8] sm:$0xff]
        %v2729 = vld [vmem:[#allocation12 + $0x4c0] sm:$0xff]
        %v2730 = vld [vmem:[#allocation12 + $0x4c8] sm:$0xff]
        %v2731 = vld [vmem:[#allocation12 + $0x4d0] sm:$0xff]
        %v2732 = vld [vmem:[#allocation12 + $0x4d8] sm:$0xff]
        %v2733 = vld [vmem:[#allocation12 + $0x4e0] sm:$0xff]
        %v2734 = vld [vmem:[#allocation12 + $0x4e8] sm:$0xff]
        %v2735 = vld [vmem:[#allocation12 + $0x4f0] sm:$0xff]
        %v2736 = vld [vmem:[#allocation12 + $0x4f8] sm:$0xff]
        %v2737 = vld [vmem:[#allocation12 + $0x500] sm:$0xff]
        %v2738 = vld [vmem:[#allocation12 + $0x508] sm:$0xff]
        %v2739 = vld [vmem:[#allocation12 + $0x510] sm:$0xff]
        %v2740 = vld [vmem:[#allocation12 + $0x518] sm:$0xff]
        %v2741 = vld [vmem:[#allocation12 + $0x520] sm:$0xff]
        %v2742 = vld [vmem:[#allocation12 + $0x528] sm:$0xff]
        %v2743 = vld [vmem:[#allocation12 + $0x530] sm:$0xff]
        %v2744 = vld [vmem:[#allocation12 + $0x538] sm:$0xff]
        %v2745 = vld [vmem:[#allocation12 + $0x540] sm:$0xff]
        %v2746 = vld [vmem:[#allocation12 + $0x548] sm:$0xff]
        %v2747 = vld [vmem:[#allocation12 + $0x550] sm:$0xff]
        %v2748 = vld [vmem:[#allocation12 + $0x558] sm:$0xff]
        %v2749 = vld [vmem:[#allocation12 + $0x560] sm:$0xff]
        %v2750 = vld [vmem:[#allocation12 + $0x568] sm:$0xff]
        %v2751 = vld [vmem:[#allocation12 + $0x570] sm:$0xff]
        %v2752 = vld [vmem:[#allocation12 + $0x578] sm:$0xff]
        %v2753 = vld [vmem:[#allocation12 + $0x580] sm:$0xff]
        %v2754 = vld [vmem:[#allocation12 + $0x588] sm:$0xff]
        %v2755 = vld [vmem:[#allocation12 + $0x590] sm:$0xff]
        %v2756 = vld [vmem:[#allocation12 + $0x598] sm:$0xff]
        %v2757 = vld [vmem:[#allocation12 + $0x5a0] sm:$0xff]
        %v2758 = vld [vmem:[#allocation12 + $0x5a8] sm:$0xff]
        %v2759 = vld [vmem:[#allocation12 + $0x5b0] sm:$0xff]
        %v2760 = vld [vmem:[#allocation12 + $0x5b8] sm:$0xff]
        %v2761 = vld [vmem:[#allocation12 + $0x5c0] sm:$0xff]
        %v2762 = vld [vmem:[#allocation12 + $0x5c8] sm:$0xff]
        %v2763 = vld [vmem:[#allocation12 + $0x5d0] sm:$0xff]
        %v2764 = vld [vmem:[#allocation12 + $0x5d8] sm:$0xff]
        %v2765 = vld [vmem:[#allocation12 + $0x5e0] sm:$0xff]
        %v2766 = vld [vmem:[#allocation12 + $0x5e8] sm:$0xff]
        %v2767 = vld [vmem:[#allocation12 + $0x5f0] sm:$0xff]
        %v2768 = vld [vmem:[#allocation12 + $0x5f8] sm:$0xff]
        %v2769 = vld [vmem:[#allocation12 + $0x600] sm:$0xff]
        %v2770 = vld [vmem:[#allocation12 + $0x608] sm:$0xff]
        %v2771 = vld [vmem:[#allocation12 + $0x610] sm:$0xff]
        %v2772 = vld [vmem:[#allocation12 + $0x618] sm:$0xff]
        %v2773 = vld [vmem:[#allocation12 + $0x620] sm:$0xff]
        %v2774 = vld [vmem:[#allocation12 + $0x628] sm:$0xff]
        %v2775 = vld [vmem:[#allocation12 + $0x630] sm:$0xff]
        %v2776 = vld [vmem:[#allocation12 + $0x638] sm:$0xff]
        %v2777 = vld [vmem:[#allocation12 + $0x640] sm:$0xff]
        %v2778 = vld [vmem:[#allocation12 + $0x648] sm:$0xff]
        %v2779 = vld [vmem:[#allocation12 + $0x650] sm:$0xff]
        %v2780 = vld [vmem:[#allocation12 + $0x658] sm:$0xff]
        %v2781 = vld [vmem:[#allocation12 + $0x660] sm:$0xff]
        %v2782 = vld [vmem:[#allocation12 + $0x668] sm:$0xff]
        %v2783 = vld [vmem:[#allocation12 + $0x670] sm:$0xff]
        %v2784 = vld [vmem:[#allocation12 + $0x678] sm:$0xff]
        %v2785 = vld [vmem:[#allocation12 + $0x680] sm:$0xff]
        %v2786 = vld [vmem:[#allocation12 + $0x688] sm:$0xff]
        %v2787 = vld [vmem:[#allocation12 + $0x690] sm:$0xff]
        %v2788 = vld [vmem:[#allocation12 + $0x698] sm:$0xff]
        %v2789 = vld [vmem:[#allocation12 + $0x6a0] sm:$0xff]
        %v2790 = vld [vmem:[#allocation12 + $0x6a8] sm:$0xff]
        %v2791 = vld [vmem:[#allocation12 + $0x6b0] sm:$0xff]
        %v2792 = vld [vmem:[#allocation12 + $0x6b8] sm:$0xff]
        %v2793 = vld [vmem:[#allocation12 + $0x6c0] sm:$0xff]
        %v2794 = vld [vmem:[#allocation12 + $0x6c8] sm:$0xff]
        %v2795 = vld [vmem:[#allocation12 + $0x6d0] sm:$0xff]
        %v2796 = vld [vmem:[#allocation12 + $0x6d8] sm:$0xff]
        %v2797 = vld [vmem:[#allocation12 + $0x6e0] sm:$0xff]
        %v2798 = vld [vmem:[#allocation12 + $0x6e8] sm:$0xff]
        %v2799 = vld [vmem:[#allocation12 + $0x6f0] sm:$0xff]
        %v2800 = vld [vmem:[#allocation12 + $0x6f8] sm:$0xff]
        %v2801 = vld [vmem:[#allocation12 + $0x700] sm:$0xff]
        %v2802 = vld [vmem:[#allocation12 + $0x708] sm:$0xff]
        %v2803 = vld [vmem:[#allocation12 + $0x710] sm:$0xff]
        %v2804 = vld [vmem:[#allocation12 + $0x718] sm:$0xff]
        %v2805 = vld [vmem:[#allocation12 + $0x720] sm:$0xff]
        %v2806 = vld [vmem:[#allocation12 + $0x728] sm:$0xff]
        %v2807 = vld [vmem:[#allocation12 + $0x730] sm:$0xff]
        %v2808 = vld [vmem:[#allocation12 + $0x738] sm:$0xff]
        %v2809 = vld [vmem:[#allocation12 + $0x740] sm:$0xff]
        %v2810 = vld [vmem:[#allocation12 + $0x748] sm:$0xff]
        %v2811 = vld [vmem:[#allocation12 + $0x750] sm:$0xff]
        %v2812 = vld [vmem:[#allocation12 + $0x758] sm:$0xff]
        %v2813 = vld [vmem:[#allocation12 + $0x760] sm:$0xff]
        %v2814 = vld [vmem:[#allocation12 + $0x768] sm:$0xff]
        %v2815 = vld [vmem:[#allocation12 + $0x770] sm:$0xff]
        %v2816 = vld [vmem:[#allocation12 + $0x778] sm:$0xff]
        %v2817 = vld [vmem:[#allocation12 + $0x780] sm:$0xff]
        %v2818 = vld [vmem:[#allocation12 + $0x788] sm:$0xff]
        %v2819 = vld [vmem:[#allocation12 + $0x790] sm:$0xff]
        %v2820 = vld [vmem:[#allocation12 + $0x798] sm:$0xff]
        %v2821 = vld [vmem:[#allocation12 + $0x7a0] sm:$0xff]
        %v2822 = vld [vmem:[#allocation12 + $0x7a8] sm:$0xff]
        %v2823 = vld [vmem:[#allocation12 + $0x7b0] sm:$0xff]
        %v2824 = vld [vmem:[#allocation12 + $0x7b8] sm:$0xff]
        %v2825 = vld [vmem:[#allocation12 + $0x7c0] sm:$0xff]
        %v2826 = vld [vmem:[#allocation12 + $0x7c8] sm:$0xff]
        %v2827 = vld [vmem:[#allocation12 + $0x7d0] sm:$0xff]
        %v2828 = vld [vmem:[#allocation12 + $0x7d8] sm:$0xff]
        %v2829 = vld [vmem:[#allocation12 + $0x7e0] sm:$0xff]
        %v2830 = vld [vmem:[#allocation12 + $0x7e8] sm:$0xff]
        %v2831 = vld [vmem:[#allocation12 + $0x7f0] sm:$0xff]
        %v2832 = vld [vmem:[#allocation12 + $0x7f8] sm:$0xff]
        %v2833 = vld [vmem:[#allocation14] sm:$0xff]
        %v2835 = vlaneseq
        %v2836 = vshrl.u32 %v2835, 7
        %v2837 = vsub.s32 0, %v2836
        %v2838 = vrot.slane %v2833, %v2837
        %v2839 = vlaneseq
        %v2840 = vshrl.u32 %v2839, 7
        %v2841 = vsub.s32 1, %v2840
        %v2842 = vrot.slane %v2833, %v2841
        %v2843 = vlaneseq
        %v2844 = vshrl.u32 %v2843, 7
        %v2845 = vsub.s32 2, %v2844
        %v2846 = vrot.slane %v2833, %v2845
        %v2847 = vlaneseq
        %v2848 = vshrl.u32 %v2847, 7
        %v2849 = vsub.s32 3, %v2848
        %v2850 = vrot.slane %v2833, %v2849
        %v2851 = vlaneseq
        %v2852 = vshrl.u32 %v2851, 7
        %v2853 = vsub.s32 4, %v2852
        %v2854 = vrot.slane %v2833, %v2853
        %v2855 = vlaneseq
        %v2856 = vshrl.u32 %v2855, 7
        %v2857 = vsub.s32 5, %v2856
        %v2858 = vrot.slane %v2833, %v2857
        %v2859 = vlaneseq
        %v2860 = vshrl.u32 %v2859, 7
        %v2861 = vsub.s32 6, %v2860
        %v2862 = vrot.slane %v2833, %v2861
        %v2863 = vlaneseq
        %v2864 = vshrl.u32 %v2863, 7
        %v2865 = vsub.s32 7, %v2864
        %v2866 = vrot.slane %v2833, %v2865
        %2875 = vmatprep.subr.mxu0 %v2578
        %2876 = vmatpush1.msra.mxu0 %v2577
        %2877 = vmatprep.subr.mxu0 %v2586
        %2878 = vmatpush1.msra.mxu0 %v2585
        %2879 = vmatprep.subr.mxu0 %v2594
        %2880 = vmatpush1.msra.mxu0 %v2593
        %2881 = vmatprep.subr.mxu0 %v2602
        %2882 = vmatpush1.msra.mxu0 %v2601
        %2883 = vmatprep.subr.mxu0 %v2610
        %2884 = vmatpush1.msra.mxu0 %v2609
        %2885 = vmatprep.subr.mxu0 %v2618
        %2886 = vmatpush1.msra.mxu0 %v2617
        %2887 = vmatprep.subr.mxu0 %v2626
        %2888 = vmatpush1.msra.mxu0 %v2625
        %2889 = vmatprep.subr.mxu0 %v2634
        %2890 = vmatpush1.msra.mxu0 %v2633
        %2891 = vmatprep.subr.mxu0 %v2642
        %2892 = vmatpush1.msra.mxu0 %v2641
        %2893 = vmatprep.subr.mxu0 %v2650
        %2894 = vmatpush1.msra.mxu0 %v2649
        %2895 = vmatprep.subr.mxu0 %v2658
        %2896 = vmatpush1.msra.mxu0 %v2657
        %2897 = vmatprep.subr.mxu0 %v2666
        %2898 = vmatpush1.msra.mxu0 %v2665
        %2899 = vmatprep.subr.mxu0 %v2674
        %2900 = vmatpush1.msra.mxu0 %v2673
        %2901 = vmatprep.subr.mxu0 %v2682
        %2902 = vmatpush1.msra.mxu0 %v2681
        %2903 = vmatprep.subr.mxu0 %v2690
        %2904 = vmatpush1.msra.mxu0 %v2689
        %2905 = vmatprep.subr.mxu0 %v2698
        %2906 = vmatpush1.msra.mxu0 %v2697
        %2907 = vmatprep.subr.mxu0 %v2706
        %2908 = vmatpush1.msra.mxu0 %v2705
        %2909 = vmatprep.subr.mxu0 %v2714
        %2910 = vmatpush1.msra.mxu0 %v2713
        %2911 = vmatprep.subr.mxu0 %v2722
        %2912 = vmatpush1.msra.mxu0 %v2721
        %2913 = vmatprep.subr.mxu0 %v2730
        %2914 = vmatpush1.msra.mxu0 %v2729
        %2915 = vmatprep.subr.mxu0 %v2738
        %2916 = vmatpush1.msra.mxu0 %v2737
        %2917 = vmatprep.subr.mxu0 %v2746
        %2918 = vmatpush1.msra.mxu0 %v2745
        %2919 = vmatprep.subr.mxu0 %v2754
        %2920 = vmatpush1.msra.mxu0 %v2753
        %2921 = vmatprep.subr.mxu0 %v2762
        %2922 = vmatpush1.msra.mxu0 %v2761
        %2923 = vmatprep.subr.mxu0 %v2770
        %2924 = vmatpush1.msra.mxu0 %v2769
        %2925 = vmatprep.subr.mxu0 %v2778
        %2926 = vmatpush1.msra.mxu0 %v2777
        %2927 = vmatprep.subr.mxu0 %v2786
        %2928 = vmatpush1.msra.mxu0 %v2785
        %2929 = vmatprep.subr.mxu0 %v2794
        %2930 = vmatpush1.msra.mxu0 %v2793
        %2931 = vmatprep.subr.mxu0 %v2802
        %2932 = vmatpush1.msra.mxu0 %v2801
        %2933 = vmatprep.subr.mxu0 %v2810
        %2934 = vmatpush1.msra.mxu0 %v2809
        %2935 = vmatprep.subr.mxu0 %v2818
        %2936 = vmatpush1.msra.mxu0 %v2817
        %2937 = vmatprep.subr.mxu0 %v2826
        %2938 = vmatpush1.msra.mxu0 %v2825
        %2939 = vmatprep.mubr.f32.mxu0 %v2570
        %2940 = vmatmul.mubr.f32.gmra.mrb[0].mxu0 %v2569
        %v2941 = vpop.f32.mrb[0].mxu0
        %v2942 = vadd.f32 %v2838, %v2941
        %v2943 = vpop.f32.mrb[0].mxu0
        %v2944 = vadd.f32 %v2842, %v2943
        %2945 = vmatprep.mubr.f32.mxu0 %v2572
        %2946 = vmatmul.mubr.f32.gmra.mrb[0].mxu0 %v2571
        %v2947 = vpop.f32.mrb[0].mxu0
        %v2948 = vadd.f32 %v2838, %v2947
        %v2949 = vpop.f32.mrb[0].mxu0
        %v2950 = vadd.f32 %v2842, %v2949
        %2951 = vmatprep.mubr.f32.mxu0 %v2574
        %2952 = vmatmul.mubr.f32.gmra.mrb[0].mxu0 %v2573
        %v2953 = vpop.f32.mrb[0].mxu0
        %v2954 = vadd.f32 %v2838, %v2953
        %v2955 = vpop.f32.mrb[0].mxu0
        %v2956 = vadd.f32 %v2842, %v2955
        %2957 = vmatprep.mubr.f32.mxu0 %v2576
        %2958 = vmatmul.mubr.f32.gmra.mrb[0].mxu0 %v2575
        %v2959 = vpop.f32.mrb[0].mxu0
        %v2960 = vadd.f32 %v2838, %v2959
        %v2961 = vpop.f32.mrb[0].mxu0
        %v2962 = vadd.f32 %v2842, %v2961
        %2963 = vdwg.mxu0
        %2964 = vmatprep.subr.mxu0 %v2580
        %2965 = vmatpush1.msra.mxu0 %v2579
        %2966 = vmatprep.subr.mxu0 %v2588
        %2967 = vmatpush1.msra.mxu0 %v2587
        %2968 = vmatprep.subr.mxu0 %v2596
        %2969 = vmatpush1.msra.mxu0 %v2595
        %2970 = vmatprep.subr.mxu0 %v2604
        %2971 = vmatpush1.msra.mxu0 %v2603
        %2972 = vmatprep.subr.mxu0 %v2612
        %2973 = vmatpush1.msra.mxu0 %v2611
        %2974 = vmatprep.subr.mxu0 %v2620
        %2975 = vmatpush1.msra.mxu0 %v2619
        %2976 = vmatprep.subr.mxu0 %v2628
        %2977 = vmatpush1.msra.mxu0 %v2627
        %2978 = vmatprep.subr.mxu0 %v2636
        %2979 = vmatpush1.msra.mxu0 %v2635
        %2980 = vmatprep.subr.mxu0 %v2644
        %2981 = vmatpush1.msra.mxu0 %v2643
        %2982 = vmatprep.subr.mxu0 %v2652
        %2983 = vmatpush1.msra.mxu0 %v2651
        %2984 = vmatprep.subr.mxu0 %v2660
        %2985 = vmatpush1.msra.mxu0 %v2659
        %2986 = vmatprep.subr.mxu0 %v2668
        %2987 = vmatpush1.msra.mxu0 %v2667
        %2988 = vmatprep.subr.mxu0 %v2676
        %2989 = vmatpush1.msra.mxu0 %v2675
        %2990 = vmatprep.subr.mxu0 %v2684
        %2991 = vmatpush1.msra.mxu0 %v2683
        %2992 = vmatprep.subr.mxu0 %v2692
        %2993 = vmatpush1.msra.mxu0 %v2691
        %2994 = vmatprep.subr.mxu0 %v2700
        %2995 = vmatpush1.msra.mxu0 %v2699
        %2996 = vmatprep.subr.mxu0 %v2708
        %2997 = vmatpush1.msra.mxu0 %v2707
        %2998 = vmatprep.subr.mxu0 %v2716
        %2999 = vmatpush1.msra.mxu0 %v2715
        %3000 = vmatprep.subr.mxu0 %v2724
        %3001 = vmatpush1.msra.mxu0 %v2723
        %3002 = vmatprep.subr.mxu0 %v2732
        %3003 = vmatpush1.msra.mxu0 %v2731
        %3004 = vmatprep.subr.mxu0 %v2740
        %3005 = vmatpush1.msra.mxu0 %v2739
        %3006 = vmatprep.subr.mxu0 %v2748
        %3007 = vmatpush1.msra.mxu0 %v2747
        %3008 = vmatprep.subr.mxu0 %v2756
        %3009 = vmatpush1.msra.mxu0 %v2755
        %3010 = vmatprep.subr.mxu0 %v2764
        %3011 = vmatpush1.msra.mxu0 %v2763
        %3012 = vmatprep.subr.mxu0 %v2772
        %3013 = vmatpush1.msra.mxu0 %v2771
        %3014 = vmatprep.subr.mxu0 %v2780
        %3015 = vmatpush1.msra.mxu0 %v2779
        %3016 = vmatprep.subr.mxu0 %v2788
        %3017 = vmatpush1.msra.mxu0 %v2787
        %3018 = vmatprep.subr.mxu0 %v2796
        %3019 = vmatpush1.msra.mxu0 %v2795
        %3020 = vmatprep.subr.mxu0 %v2804
        %3021 = vmatpush1.msra.mxu0 %v2803
        %3022 = vmatprep.subr.mxu0 %v2812
        %3023 = vmatpush1.msra.mxu0 %v2811
        %3024 = vmatprep.subr.mxu0 %v2820
        %3025 = vmatpush1.msra.mxu0 %v2819
        %3026 = vmatprep.subr.mxu0 %v2828
        %3027 = vmatpush1.msra.mxu0 %v2827
        %3028 = vmatprep.mubr.f32.mxu0 %v2570
        %3029 = vmatmul.mubr.f32.gmra.mrb[0].mxu0 %v2569
        %v3030 = vpop.f32.mrb[0].mxu0
        %v3031 = vadd.f32 %v2846, %v3030
        %v3032 = vpop.f32.mrb[0].mxu0
        %v3033 = vadd.f32 %v2850, %v3032
        %3034 = vmatprep.mubr.f32.mxu0 %v2572
        %3035 = vmatmul.mubr.f32.gmra.mrb[0].mxu0 %v2571
        %v3036 = vpop.f32.mrb[0].mxu0
        %v3037 = vadd.f32 %v2846, %v3036
        %v3038 = vpop.f32.mrb[0].mxu0
        %v3039 = vadd.f32 %v2850, %v3038
        %3040 = vmatprep.mubr.f32.mxu0 %v2574
        %3041 = vmatmul.mubr.f32.gmra.mrb[0].mxu0 %v2573
        %v3042 = vpop.f32.mrb[0].mxu0
        %v3043 = vadd.f32 %v2846, %v3042
        %v3044 = vpop.f32.mrb[0].mxu0
        %v3045 = vadd.f32 %v2850, %v3044
        %3046 = vmatprep.mubr.f32.mxu0 %v2576
        %3047 = vmatmul.mubr.f32.gmra.mrb[0].mxu0 %v2575
        %v3048 = vpop.f32.mrb[0].mxu0
        %v3049 = vadd.f32 %v2846, %v3048
        %v3050 = vpop.f32.mrb[0].mxu0
        %v3051 = vadd.f32 %v2850, %v3050
        %3052 = vdwg.mxu0
        %3053 = vmatprep.subr.mxu0 %v2582
        %3054 = vmatpush1.msra.mxu0 %v2581
        %3055 = vmatprep.subr.mxu0 %v2590
        %3056 = vmatpush1.msra.mxu0 %v2589
        %3057 = vmatprep.subr.mxu0 %v2598
        %3058 = vmatpush1.msra.mxu0 %v2597
        %3059 = vmatprep.subr.mxu0 %v2606
        %3060 = vmatpush1.msra.mxu0 %v2605
        %3061 = vmatprep.subr.mxu0 %v2614
        %3062 = vmatpush1.msra.mxu0 %v2613
        %3063 = vmatprep.subr.mxu0 %v2622
        %3064 = vmatpush1.msra.mxu0 %v2621
        %3065 = vmatprep.subr.mxu0 %v2630
        %3066 = vmatpush1.msra.mxu0 %v2629
        %3067 = vmatprep.subr.mxu0 %v2638
        %3068 = vmatpush1.msra.mxu0 %v2637
        %3069 = vmatprep.subr.mxu0 %v2646
        %3070 = vmatpush1.msra.mxu0 %v2645
        %3071 = vmatprep.subr.mxu0 %v2654
        %3072 = vmatpush1.msra.mxu0 %v2653
        %3073 = vmatprep.subr.mxu0 %v2662
        %3074 = vmatpush1.msra.mxu0 %v2661
        %3075 = vmatprep.subr.mxu0 %v2670
        %3076 = vmatpush1.msra.mxu0 %v2669
        %3077 = vmatprep.subr.mxu0 %v2678
        %3078 = vmatpush1.msra.mxu0 %v2677
        %3079 = vmatprep.subr.mxu0 %v2686
        %3080 = vmatpush1.msra.mxu0 %v2685
        %3081 = vmatprep.subr.mxu0 %v2694
        %3082 = vmatpush1.msra.mxu0 %v2693
        %3083 = vmatprep.subr.mxu0 %v2702
        %3084 = vmatpush1.msra.mxu0 %v2701
        %3085 = vmatprep.subr.mxu0 %v2710
        %3086 = vmatpush1.msra.mxu0 %v2709
        %3087 = vmatprep.subr.mxu0 %v2718
        %3088 = vmatpush1.msra.mxu0 %v2717
        %3089 = vmatprep.subr.mxu0 %v2726
        %3090 = vmatpush1.msra.mxu0 %v2725
        %3091 = vmatprep.subr.mxu0 %v2734
        %3092 = vmatpush1.msra.mxu0 %v2733
        %3093 = vmatprep.subr.mxu0 %v2742
        %3094 = vmatpush1.msra.mxu0 %v2741
        %3095 = vmatprep.subr.mxu0 %v2750
        %3096 = vmatpush1.msra.mxu0 %v2749
        %3097 = vmatprep.subr.mxu0 %v2758
        %3098 = vmatpush1.msra.mxu0 %v2757
        %3099 = vmatprep.subr.mxu0 %v2766
        %3100 = vmatpush1.msra.mxu0 %v2765
        %3101 = vmatprep.subr.mxu0 %v2774
        %3102 = vmatpush1.msra.mxu0 %v2773
        %3103 = vmatprep.subr.mxu0 %v2782
        %3104 = vmatpush1.msra.mxu0 %v2781
        %3105 = vmatprep.subr.mxu0 %v2790
        %3106 = vmatpush1.msra.mxu0 %v2789
        %3107 = vmatprep.subr.mxu0 %v2798
        %3108 = vmatpush1.msra.mxu0 %v2797
        %3109 = vmatprep.subr.mxu0 %v2806
        %3110 = vmatpush1.msra.mxu0 %v2805
        %3111 = vmatprep.subr.mxu0 %v2814
        %3112 = vmatpush1.msra.mxu0 %v2813
        %3113 = vmatprep.subr.mxu0 %v2822
        %3114 = vmatpush1.msra.mxu0 %v2821
        %3115 = vmatprep.subr.mxu0 %v2830
        %3116 = vmatpush1.msra.mxu0 %v2829
        %3117 = vmatprep.mubr.f32.mxu0 %v2570
        %3118 = vmatmul.mubr.f32.gmra.mrb[0].mxu0 %v2569
        %v3119 = vpop.f32.mrb[0].mxu0
        %v3120 = vadd.f32 %v2854, %v3119
        %v3121 = vpop.f32.mrb[0].mxu0
        %v3122 = vadd.f32 %v2858, %v3121
        %3123 = vmatprep.mubr.f32.mxu0 %v2572
        %3124 = vmatmul.mubr.f32.gmra.mrb[0].mxu0 %v2571
        %v3125 = vpop.f32.mrb[0].mxu0
        %v3126 = vadd.f32 %v2854, %v3125
        %v3127 = vpop.f32.mrb[0].mxu0
        %v3128 = vadd.f32 %v2858, %v3127
        %3129 = vmatprep.mubr.f32.mxu0 %v2574
        %3130 = vmatmul.mubr.f32.gmra.mrb[0].mxu0 %v2573
        %v3131 = vpop.f32.mrb[0].mxu0
        %v3132 = vadd.f32 %v2854, %v3131
        %v3133 = vpop.f32.mrb[0].mxu0
        %v3134 = vadd.f32 %v2858, %v3133
        %3135 = vmatprep.mubr.f32.mxu0 %v2576
        %3136 = vmatmul.mubr.f32.gmra.mrb[0].mxu0 %v2575
        %v3137 = vpop.f32.mrb[0].mxu0
        %v3138 = vadd.f32 %v2854, %v3137
        %v3139 = vpop.f32.mrb[0].mxu0
        %v3140 = vadd.f32 %v2858, %v3139
        %3141 = vdwg.mxu0
        %3142 = vmatprep.subr.mxu0 %v2584
        %3143 = vmatpush1.msra.mxu0 %v2583
        %3144 = vmatprep.subr.mxu0 %v2592
        %3145 = vmatpush1.msra.mxu0 %v2591
        %3146 = vmatprep.subr.mxu0 %v2600
        %3147 = vmatpush1.msra.mxu0 %v2599
        %3148 = vmatprep.subr.mxu0 %v2608
        %3149 = vmatpush1.msra.mxu0 %v2607
        %3150 = vmatprep.subr.mxu0 %v2616
        %3151 = vmatpush1.msra.mxu0 %v2615
        %3152 = vmatprep.subr.mxu0 %v2624
        %3153 = vmatpush1.msra.mxu0 %v2623
        %3154 = vmatprep.subr.mxu0 %v2632
        %3155 = vmatpush1.msra.mxu0 %v2631
        %3156 = vmatprep.subr.mxu0 %v2640
        %3157 = vmatpush1.msra.mxu0 %v2639
        %3158 = vmatprep.subr.mxu0 %v2648
        %3159 = vmatpush1.msra.mxu0 %v2647
        %3160 = vmatprep.subr.mxu0 %v2656
        %3161 = vmatpush1.msra.mxu0 %v2655
        %3162 = vmatprep.subr.mxu0 %v2664
        %3163 = vmatpush1.msra.mxu0 %v2663
        %3164 = vmatprep.subr.mxu0 %v2672
        %3165 = vmatpush1.msra.mxu0 %v2671
        %3166 = vmatprep.subr.mxu0 %v2680
        %3167 = vmatpush1.msra.mxu0 %v2679
        %3168 = vmatprep.subr.mxu0 %v2688
        %3169 = vmatpush1.msra.mxu0 %v2687
        %3170 = vmatprep.subr.mxu0 %v2696
        %3171 = vmatpush1.msra.mxu0 %v2695
        %3172 = vmatprep.subr.mxu0 %v2704
        %3173 = vmatpush1.msra.mxu0 %v2703
        %3174 = vmatprep.subr.mxu0 %v2712
        %3175 = vmatpush1.msra.mxu0 %v2711
        %3176 = vmatprep.subr.mxu0 %v2720
        %3177 = vmatpush1.msra.mxu0 %v2719
        %3178 = vmatprep.subr.mxu0 %v2728
        %3179 = vmatpush1.msra.mxu0 %v2727
        %3180 = vmatprep.subr.mxu0 %v2736
        %3181 = vmatpush1.msra.mxu0 %v2735
        %3182 = vmatprep.subr.mxu0 %v2744
        %3183 = vmatpush1.msra.mxu0 %v2743
        %3184 = vmatprep.subr.mxu0 %v2752
        %3185 = vmatpush1.msra.mxu0 %v2751
        %3186 = vmatprep.subr.mxu0 %v2760
        %3187 = vmatpush1.msra.mxu0 %v2759
        %3188 = vmatprep.subr.mxu0 %v2768
        %3189 = vmatpush1.msra.mxu0 %v2767
        %3190 = vmatprep.subr.mxu0 %v2776
        %3191 = vmatpush1.msra.mxu0 %v2775
        %3192 = vmatprep.subr.mxu0 %v2784
        %3193 = vmatpush1.msra.mxu0 %v2783
        %3194 = vmatprep.subr.mxu0 %v2792
        %3195 = vmatpush1.msra.mxu0 %v2791
        %3196 = vmatprep.subr.mxu0 %v2800
        %3197 = vmatpush1.msra.mxu0 %v2799
        %3198 = vmatprep.subr.mxu0 %v2808
        %3199 = vmatpush1.msra.mxu0 %v2807
        %3200 = vmatprep.subr.mxu0 %v2816
        %3201 = vmatpush1.msra.mxu0 %v2815
        %3202 = vmatprep.subr.mxu0 %v2824
        %3203 = vmatpush1.msra.mxu0 %v2823
        %3204 = vmatprep.subr.mxu0 %v2832
        %3205 = vmatpush1.msra.mxu0 %v2831
        %3206 = vmatprep.mubr.f32.mxu0 %v2570
        %3207 = vmatmul.mubr.f32.gmra.mrb[0].mxu0 %v2569
        %v3208 = vpop.f32.mrb[0].mxu0
        %v3209 = vadd.f32 %v2862, %v3208
        %v3210 = vpop.f32.mrb[0].mxu0
        %v3211 = vadd.f32 %v2866, %v3210
        %3212 = vmatprep.mubr.f32.mxu0 %v2572
        %3213 = vmatmul.mubr.f32.gmra.mrb[0].mxu0 %v2571
        %v3214 = vpop.f32.mrb[0].mxu0
        %v3215 = vadd.f32 %v2862, %v3214
        %v3216 = vpop.f32.mrb[0].mxu0
        %v3217 = vadd.f32 %v2866, %v3216
        %3218 = vmatprep.mubr.f32.mxu0 %v2574
        %3219 = vmatmul.mubr.f32.gmra.mrb[0].mxu0 %v2573
        %v3220 = vpop.f32.mrb[0].mxu0
        %v3221 = vadd.f32 %v2862, %v3220
        %v3222 = vpop.f32.mrb[0].mxu0
        %v3223 = vadd.f32 %v2866, %v3222
        %3224 = vmatprep.mubr.f32.mxu0 %v2576
        %3225 = vmatmul.mubr.f32.gmra.mrb[0].mxu0 %v2575
        %v3226 = vpop.f32.mrb[0].mxu0
        %v3227 = vadd.f32 %v2862, %v3226
        %v3228 = vpop.f32.mrb[0].mxu0
        %v3229 = vadd.f32 %v2866, %v3228
        %3230 = vdwg.mxu0
        %v3231 = vmul.f32 %v2942, 0.5
        %v3232 = vmul.f32 %v2944, 0.5
        %v3233 = vmul.f32 %v3031, 0.5
        %v3234 = vmul.f32 %v3033, 0.5
        %v3235 = vmul.f32 %v3120, 0.5
        %v3236 = vmul.f32 %v3122, 0.5
        %v3237 = vmul.f32 %v3209, 0.5
        %v3238 = vmul.f32 %v3211, 0.5
        %v3239 = vmul.f32 %v2948, 0.5
        %v3240 = vmul.f32 %v2950, 0.5
        %v3241 = vmul.f32 %v3037, 0.5
        %v3242 = vmul.f32 %v3039, 0.5
        %v3243 = vmul.f32 %v3126, 0.5
        %v3244 = vmul.f32 %v3128, 0.5
        %v3245 = vmul.f32 %v3215, 0.5
        %v3246 = vmul.f32 %v3217, 0.5
        %v3247 = vmul.f32 %v2954, 0.5
        %v3248 = vmul.f32 %v2956, 0.5
        %v3249 = vmul.f32 %v3043, 0.5
        %v3250 = vmul.f32 %v3045, 0.5
        %v3251 = vmul.f32 %v3132, 0.5
        %v3252 = vmul.f32 %v3134, 0.5
        %v3253 = vmul.f32 %v3221, 0.5
        %v3254 = vmul.f32 %v3223, 0.5
        %v3255 = vmul.f32 %v2960, 0.5
        %v3256 = vmul.f32 %v2962, 0.5
        %v3257 = vmul.f32 %v3049, 0.5
        %v3258 = vmul.f32 %v3051, 0.5
        %v3259 = vmul.f32 %v3138, 0.5
        %v3260 = vmul.f32 %v3140, 0.5
        %v3261 = vmul.f32 %v3227, 0.5
        %v3262 = vmul.f32 %v3229, 0.5
        %v3263 = vmul.f32 %v2942, %v2942
        %v3264 = vmul.f32 %v2944, %v2944
        %v3265 = vmul.f32 %v3031, %v3031
        %v3266 = vmul.f32 %v3033, %v3033
        %v3267 = vmul.f32 %v3120, %v3120
        %v3268 = vmul.f32 %v3122, %v3122
        %v3269 = vmul.f32 %v3209, %v3209
        %v3270 = vmul.f32 %v3211, %v3211
        %v3271 = vmul.f32 %v2948, %v2948
        %v3272 = vmul.f32 %v2950, %v2950
        %v3273 = vmul.f32 %v3037, %v3037
        %v3274 = vmul.f32 %v3039, %v3039
        %v3275 = vmul.f32 %v3126, %v3126
        %v3276 = vmul.f32 %v3128, %v3128
        %v3277 = vmul.f32 %v3215, %v3215
        %v3278 = vmul.f32 %v3217, %v3217
        %v3279 = vmul.f32 %v2954, %v2954
        %v3280 = vmul.f32 %v2956, %v2956
        %v3281 = vmul.f32 %v3043, %v3043
        %v3282 = vmul.f32 %v3045, %v3045
        %v3283 = vmul.f32 %v3132, %v3132
        %v3284 = vmul.f32 %v3134, %v3134
        %v3285 = vmul.f32 %v3221, %v3221
        %v3286 = vmul.f32 %v3223, %v3223
        %v3287 = vmul.f32 %v2960, %v2960
        %v3288 = vmul.f32 %v2962, %v2962
        %v3289 = vmul.f32 %v3049, %v3049
        %v3290 = vmul.f32 %v3051, %v3051
        %v3291 = vmul.f32 %v3138, %v3138
        %v3292 = vmul.f32 %v3140, %v3140
        %v3293 = vmul.f32 %v3227, %v3227
        %v3294 = vmul.f32 %v3229, %v3229
        %v3295 = vmul.f32 %v3263, %v2942
        %v3296 = vmul.f32 %v3264, %v2944
        %v3297 = vmul.f32 %v3265, %v3031
        %v3298 = vmul.f32 %v3266, %v3033
        %v3299 = vmul.f32 %v3267, %v3120
        %v3300 = vmul.f32 %v3268, %v3122
        %v3301 = vmul.f32 %v3269, %v3209
        %v3302 = vmul.f32 %v3270, %v3211
        %v3303 = vmul.f32 %v3271, %v2948
        %v3304 = vmul.f32 %v3272, %v2950
        %v3305 = vmul.f32 %v3273, %v3037
        %v3306 = vmul.f32 %v3274, %v3039
        %v3307 = vmul.f32 %v3275, %v3126
        %v3308 = vmul.f32 %v3276, %v3128
        %v3309 = vmul.f32 %v3277, %v3215
        %v3310 = vmul.f32 %v3278, %v3217
        %v3311 = vmul.f32 %v3279, %v2954
        %v3312 = vmul.f32 %v3280, %v2956
        %v3313 = vmul.f32 %v3281, %v3043
        %v3314 = vmul.f32 %v3282, %v3045
        %v3315 = vmul.f32 %v3283, %v3132
        %v3316 = vmul.f32 %v3284, %v3134
        %v3317 = vmul.f32 %v3285, %v3221
        %v3318 = vmul.f32 %v3286, %v3223
        %v3319 = vmul.f32 %v3287, %v2960
        %v3320 = vmul.f32 %v3288, %v2962
        %v3321 = vmul.f32 %v3289, %v3049
        %v3322 = vmul.f32 %v3290, %v3051
        %v3323 = vmul.f32 %v3291, %v3138
        %v3324 = vmul.f32 %v3292, %v3140
        %v3325 = vmul.f32 %v3293, %v3227
        %v3326 = vmul.f32 %v3294, %v3229
        %v3327 = vmul.f32 %v3295, 0.044715
        %v3328 = vmul.f32 %v3296, 0.044715
        %v3329 = vmul.f32 %v3297, 0.044715
        %v3330 = vmul.f32 %v3298, 0.044715
        %v3331 = vmul.f32 %v3299, 0.044715
        %v3332 = vmul.f32 %v3300, 0.044715
        %v3333 = vmul.f32 %v3301, 0.044715
        %v3334 = vmul.f32 %v3302, 0.044715
        %v3335 = vmul.f32 %v3303, 0.044715
        %v3336 = vmul.f32 %v3304, 0.044715
        %v3337 = vmul.f32 %v3305, 0.044715
        %v3338 = vmul.f32 %v3306, 0.044715
        %v3339 = vmul.f32 %v3307, 0.044715
        %v3340 = vmul.f32 %v3308, 0.044715
        %v3341 = vmul.f32 %v3309, 0.044715
        %v3342 = vmul.f32 %v3310, 0.044715
        %v3343 = vmul.f32 %v3311, 0.044715
        %v3344 = vmul.f32 %v3312, 0.044715
        %v3345 = vmul.f32 %v3313, 0.044715
        %v3346 = vmul.f32 %v3314, 0.044715
        %v3347 = vmul.f32 %v3315, 0.044715
        %v3348 = vmul.f32 %v3316, 0.044715
        %v3349 = vmul.f32 %v3317, 0.044715
        %v3350 = vmul.f32 %v3318, 0.044715
        %v3351 = vmul.f32 %v3319, 0.044715
        %v3352 = vmul.f32 %v3320, 0.044715
        %v3353 = vmul.f32 %v3321, 0.044715
        %v3354 = vmul.f32 %v3322, 0.044715
        %v3355 = vmul.f32 %v3323, 0.044715
        %v3356 = vmul.f32 %v3324, 0.044715
        %v3357 = vmul.f32 %v3325, 0.044715
        %v3358 = vmul.f32 %v3326, 0.044715
        %v3359 = vadd.f32 %v2942, %v3327
        %v3360 = vadd.f32 %v2944, %v3328
        %v3361 = vadd.f32 %v3031, %v3329
        %v3362 = vadd.f32 %v3033, %v3330
        %v3363 = vadd.f32 %v3120, %v3331
        %v3364 = vadd.f32 %v3122, %v3332
        %v3365 = vadd.f32 %v3209, %v3333
        %v3366 = vadd.f32 %v3211, %v3334
        %v3367 = vadd.f32 %v2948, %v3335
        %v3368 = vadd.f32 %v2950, %v3336
        %v3369 = vadd.f32 %v3037, %v3337
        %v3370 = vadd.f32 %v3039, %v3338
        %v3371 = vadd.f32 %v3126, %v3339
        %v3372 = vadd.f32 %v3128, %v3340
        %v3373 = vadd.f32 %v3215, %v3341
        %v3374 = vadd.f32 %v3217, %v3342
        %v3375 = vadd.f32 %v2954, %v3343
        %v3376 = vadd.f32 %v2956, %v3344
        %v3377 = vadd.f32 %v3043, %v3345
        %v3378 = vadd.f32 %v3045, %v3346
        %v3379 = vadd.f32 %v3132, %v3347
        %v3380 = vadd.f32 %v3134, %v3348
        %v3381 = vadd.f32 %v3221, %v3349
        %v3382 = vadd.f32 %v3223, %v3350
        %v3383 = vadd.f32 %v2960, %v3351
        %v3384 = vadd.f32 %v2962, %v3352
        %v3385 = vadd.f32 %v3049, %v3353
        %v3386 = vadd.f32 %v3051, %v3354
        %v3387 = vadd.f32 %v3138, %v3355
        %v3388 = vadd.f32 %v3140, %v3356
        %v3389 = vadd.f32 %v3227, %v3357
        %v3390 = vadd.f32 %v3229, %v3358
        %v3391 = vmul.f32 %v3359, 0.7978846
        %v3392 = vmul.f32 %v3360, 0.7978846
        %v3393 = vmul.f32 %v3361, 0.7978846
        %v3394 = vmul.f32 %v3362, 0.7978846
        %v3395 = vmul.f32 %v3363, 0.7978846
        %v3396 = vmul.f32 %v3364, 0.7978846
        %v3397 = vmul.f32 %v3365, 0.7978846
        %v3398 = vmul.f32 %v3366, 0.7978846
        %v3399 = vmul.f32 %v3367, 0.7978846
        %v3400 = vmul.f32 %v3368, 0.7978846
        %v3401 = vmul.f32 %v3369, 0.7978846
        %v3402 = vmul.f32 %v3370, 0.7978846
        %v3403 = vmul.f32 %v3371, 0.7978846
        %v3404 = vmul.f32 %v3372, 0.7978846
        %v3405 = vmul.f32 %v3373, 0.7978846
        %v3406 = vmul.f32 %v3374, 0.7978846
        %v3407 = vmul.f32 %v3375, 0.7978846
        %v3408 = vmul.f32 %v3376, 0.7978846
        %v3409 = vmul.f32 %v3377, 0.7978846
        %v3410 = vmul.f32 %v3378, 0.7978846
        %v3411 = vmul.f32 %v3379, 0.7978846
        %v3412 = vmul.f32 %v3380, 0.7978846
        %v3413 = vmul.f32 %v3381, 0.7978846
        %v3414 = vmul.f32 %v3382, 0.7978846
        %v3415 = vmul.f32 %v3383, 0.7978846
        %v3416 = vmul.f32 %v3384, 0.7978846
        %v3417 = vmul.f32 %v3385, 0.7978846
        %v3418 = vmul.f32 %v3386, 0.7978846
        %v3419 = vmul.f32 %v3387, 0.7978846
        %v3420 = vmul.f32 %v3388, 0.7978846
        %v3421 = vmul.f32 %v3389, 0.7978846
        %v3422 = vmul.f32 %v3390, 0.7978846
        %v3423 = vtanh.pop %v3391
        %v3424 = vtanh.pop %v3392
        %v3425 = vtanh.pop %v3393
        %v3426 = vtanh.pop %v3394
        %v3427 = vtanh.pop %v3395
        %v3428 = vtanh.pop %v3396
        %v3429 = vtanh.pop %v3397
        %v3430 = vtanh.pop %v3398
        %v3431 = vtanh.pop %v3399
        %v3432 = vtanh.pop %v3400
        %v3433 = vtanh.pop %v3401
        %v3434 = vtanh.pop %v3402
        %v3435 = vtanh.pop %v3403
        %v3436 = vtanh.pop %v3404
        %v3437 = vtanh.pop %v3405
        %v3438 = vtanh.pop %v3406
        %v3439 = vtanh.pop %v3407
        %v3440 = vtanh.pop %v3408
        %v3441 = vtanh.pop %v3409
        %v3442 = vtanh.pop %v3410
        %v3443 = vtanh.pop %v3411
        %v3444 = vtanh.pop %v3412
        %v3445 = vtanh.pop %v3413
        %v3446 = vtanh.pop %v3414
        %v3447 = vtanh.pop %v3415
        %v3448 = vtanh.pop %v3416
        %v3449 = vtanh.pop %v3417
        %v3450 = vtanh.pop %v3418
        %v3451 = vtanh.pop %v3419
        %v3452 = vtanh.pop %v3420
        %v3453 = vtanh.pop %v3421
        %v3454 = vtanh.pop %v3422
        %v3455 = vadd.f32 %v3423, 1.0
        %v3456 = vadd.f32 %v3424, 1.0
        %v3457 = vadd.f32 %v3425, 1.0
        %v3458 = vadd.f32 %v3426, 1.0
        %v3459 = vadd.f32 %v3427, 1.0
        %v3460 = vadd.f32 %v3428, 1.0
        %v3461 = vadd.f32 %v3429, 1.0
        %v3462 = vadd.f32 %v3430, 1.0
        %v3463 = vadd.f32 %v3431, 1.0
        %v3464 = vadd.f32 %v3432, 1.0
        %v3465 = vadd.f32 %v3433, 1.0
        %v3466 = vadd.f32 %v3434, 1.0
        %v3467 = vadd.f32 %v3435, 1.0
        %v3468 = vadd.f32 %v3436, 1.0
        %v3469 = vadd.f32 %v3437, 1.0
        %v3470 = vadd.f32 %v3438, 1.0
        %v3471 = vadd.f32 %v3439, 1.0
        %v3472 = vadd.f32 %v3440, 1.0
        %v3473 = vadd.f32 %v3441, 1.0
        %v3474 = vadd.f32 %v3442, 1.0
        %v3475 = vadd.f32 %v3443, 1.0
        %v3476 = vadd.f32 %v3444, 1.0
        %v3477 = vadd.f32 %v3445, 1.0
        %v3478 = vadd.f32 %v3446, 1.0
        %v3479 = vadd.f32 %v3447, 1.0
        %v3480 = vadd.f32 %v3448, 1.0
        %v3481 = vadd.f32 %v3449, 1.0
        %v3482 = vadd.f32 %v3450, 1.0
        %v3483 = vadd.f32 %v3451, 1.0
        %v3484 = vadd.f32 %v3452, 1.0
        %v3485 = vadd.f32 %v3453, 1.0
        %v3486 = vadd.f32 %v3454, 1.0
        %v3487 = vmul.f32 %v3231, %v3455
        %v3488 = vmul.f32 %v3232, %v3456
        %v3489 = vmul.f32 %v3233, %v3457
        %v3490 = vmul.f32 %v3234, %v3458
        %v3491 = vmul.f32 %v3235, %v3459
        %v3492 = vmul.f32 %v3236, %v3460
        %v3493 = vmul.f32 %v3237, %v3461
        %v3494 = vmul.f32 %v3238, %v3462
        %v3495 = vmul.f32 %v3239, %v3463
        %v3496 = vmul.f32 %v3240, %v3464
        %v3497 = vmul.f32 %v3241, %v3465
        %v3498 = vmul.f32 %v3242, %v3466
        %v3499 = vmul.f32 %v3243, %v3467
        %v3500 = vmul.f32 %v3244, %v3468
        %v3501 = vmul.f32 %v3245, %v3469
        %v3502 = vmul.f32 %v3246, %v3470
        %v3503 = vmul.f32 %v3247, %v3471
        %v3504 = vmul.f32 %v3248, %v3472
        %v3505 = vmul.f32 %v3249, %v3473
        %v3506 = vmul.f32 %v3250, %v3474
        %v3507 = vmul.f32 %v3251, %v3475
        %v3508 = vmul.f32 %v3252, %v3476
        %v3509 = vmul.f32 %v3253, %v3477
        %v3510 = vmul.f32 %v3254, %v3478
        %v3511 = vmul.f32 %v3255, %v3479
        %v3512 = vmul.f32 %v3256, %v3480
        %v3513 = vmul.f32 %v3257, %v3481
        %v3514 = vmul.f32 %v3258, %v3482
        %v3515 = vmul.f32 %v3259, %v3483
        %v3516 = vmul.f32 %v3260, %v3484
        %v3517 = vmul.f32 %v3261, %v3485
        %v3518 = vmul.f32 %v3262, %v3486
        %v3519 = vld [vmem:[#allocation15] sm:$0xff]
        %v3520 = vld [vmem:[#allocation15 + $0x8] sm:$0xff]
        %v3521 = vld [vmem:[#allocation15 + $0x10] sm:$0xff]
        %v3522 = vld [vmem:[#allocation15 + $0x18] sm:$0xff]
        %v3523 = vld [vmem:[#allocation15 + $0x20] sm:$0xff]
        %v3524 = vld [vmem:[#allocation15 + $0x28] sm:$0xff]
        %v3525 = vld [vmem:[#allocation15 + $0x30] sm:$0xff]
        %v3526 = vld [vmem:[#allocation15 + $0x38] sm:$0xff]
        %v3527 = vld [vmem:[#allocation15 + $0x40] sm:$0xff]
        %v3528 = vld [vmem:[#allocation15 + $0x48] sm:$0xff]
        %v3529 = vld [vmem:[#allocation15 + $0x50] sm:$0xff]
        %v3530 = vld [vmem:[#allocation15 + $0x58] sm:$0xff]
        %v3531 = vld [vmem:[#allocation15 + $0x60] sm:$0xff]
        %v3532 = vld [vmem:[#allocation15 + $0x68] sm:$0xff]
        %v3533 = vld [vmem:[#allocation15 + $0x70] sm:$0xff]
        %v3534 = vld [vmem:[#allocation15 + $0x78] sm:$0xff]
        %v3535 = vld [vmem:[#allocation15 + $0x80] sm:$0xff]
        %v3536 = vld [vmem:[#allocation15 + $0x88] sm:$0xff]
        %v3537 = vld [vmem:[#allocation15 + $0x90] sm:$0xff]
        %v3538 = vld [vmem:[#allocation15 + $0x98] sm:$0xff]
        %v3539 = vld [vmem:[#allocation15 + $0xa0] sm:$0xff]
        %v3540 = vld [vmem:[#allocation15 + $0xa8] sm:$0xff]
        %v3541 = vld [vmem:[#allocation15 + $0xb0] sm:$0xff]
        %v3542 = vld [vmem:[#allocation15 + $0xb8] sm:$0xff]
        %v3543 = vld [vmem:[#allocation15 + $0xc0] sm:$0xff]
        %v3544 = vld [vmem:[#allocation15 + $0xc8] sm:$0xff]
        %v3545 = vld [vmem:[#allocation15 + $0xd0] sm:$0xff]
        %v3546 = vld [vmem:[#allocation15 + $0xd8] sm:$0xff]
        %v3547 = vld [vmem:[#allocation15 + $0xe0] sm:$0xff]
        %v3548 = vld [vmem:[#allocation15 + $0xe8] sm:$0xff]
        %v3549 = vld [vmem:[#allocation15 + $0xf0] sm:$0xff]
        %v3550 = vld [vmem:[#allocation15 + $0xf8] sm:$0xff]
        %v3551 = vld [vmem:[#allocation15 + $0x100] sm:$0xff]
        %v3552 = vld [vmem:[#allocation15 + $0x108] sm:$0xff]
        %v3553 = vld [vmem:[#allocation15 + $0x110] sm:$0xff]
        %v3554 = vld [vmem:[#allocation15 + $0x118] sm:$0xff]
        %v3555 = vld [vmem:[#allocation15 + $0x120] sm:$0xff]
        %v3556 = vld [vmem:[#allocation15 + $0x128] sm:$0xff]
        %v3557 = vld [vmem:[#allocation15 + $0x130] sm:$0xff]
        %v3558 = vld [vmem:[#allocation15 + $0x138] sm:$0xff]
        %v3559 = vld [vmem:[#allocation15 + $0x140] sm:$0xff]
        %v3560 = vld [vmem:[#allocation15 + $0x148] sm:$0xff]
        %v3561 = vld [vmem:[#allocation15 + $0x150] sm:$0xff]
        %v3562 = vld [vmem:[#allocation15 + $0x158] sm:$0xff]
        %v3563 = vld [vmem:[#allocation15 + $0x160] sm:$0xff]
        %v3564 = vld [vmem:[#allocation15 + $0x168] sm:$0xff]
        %v3565 = vld [vmem:[#allocation15 + $0x170] sm:$0xff]
        %v3566 = vld [vmem:[#allocation15 + $0x178] sm:$0xff]
        %v3567 = vld [vmem:[#allocation15 + $0x180] sm:$0xff]
        %v3568 = vld [vmem:[#allocation15 + $0x188] sm:$0xff]
        %v3569 = vld [vmem:[#allocation15 + $0x190] sm:$0xff]
        %v3570 = vld [vmem:[#allocation15 + $0x198] sm:$0xff]
        %v3571 = vld [vmem:[#allocation15 + $0x1a0] sm:$0xff]
        %v3572 = vld [vmem:[#allocation15 + $0x1a8] sm:$0xff]
        %v3573 = vld [vmem:[#allocation15 + $0x1b0] sm:$0xff]
        %v3574 = vld [vmem:[#allocation15 + $0x1b8] sm:$0xff]
        %v3575 = vld [vmem:[#allocation15 + $0x1c0] sm:$0xff]
        %v3576 = vld [vmem:[#allocation15 + $0x1c8] sm:$0xff]
        %v3577 = vld [vmem:[#allocation15 + $0x1d0] sm:$0xff]
        %v3578 = vld [vmem:[#allocation15 + $0x1d8] sm:$0xff]
        %v3579 = vld [vmem:[#allocation15 + $0x1e0] sm:$0xff]
        %v3580 = vld [vmem:[#allocation15 + $0x1e8] sm:$0xff]
        %v3581 = vld [vmem:[#allocation15 + $0x1f0] sm:$0xff]
        %v3582 = vld [vmem:[#allocation15 + $0x1f8] sm:$0xff]
        %v3583 = vld [vmem:[#allocation15 + $0x200] sm:$0xff]
        %v3584 = vld [vmem:[#allocation15 + $0x208] sm:$0xff]
        %v3585 = vld [vmem:[#allocation15 + $0x210] sm:$0xff]
        %v3586 = vld [vmem:[#allocation15 + $0x218] sm:$0xff]
        %v3587 = vld [vmem:[#allocation15 + $0x220] sm:$0xff]
        %v3588 = vld [vmem:[#allocation15 + $0x228] sm:$0xff]
        %v3589 = vld [vmem:[#allocation15 + $0x230] sm:$0xff]
        %v3590 = vld [vmem:[#allocation15 + $0x238] sm:$0xff]
        %v3591 = vld [vmem:[#allocation15 + $0x240] sm:$0xff]
        %v3592 = vld [vmem:[#allocation15 + $0x248] sm:$0xff]
        %v3593 = vld [vmem:[#allocation15 + $0x250] sm:$0xff]
        %v3594 = vld [vmem:[#allocation15 + $0x258] sm:$0xff]
        %v3595 = vld [vmem:[#allocation15 + $0x260] sm:$0xff]
        %v3596 = vld [vmem:[#allocation15 + $0x268] sm:$0xff]
        %v3597 = vld [vmem:[#allocation15 + $0x270] sm:$0xff]
        %v3598 = vld [vmem:[#allocation15 + $0x278] sm:$0xff]
        %v3599 = vld [vmem:[#allocation15 + $0x280] sm:$0xff]
        %v3600 = vld [vmem:[#allocation15 + $0x288] sm:$0xff]
        %v3601 = vld [vmem:[#allocation15 + $0x290] sm:$0xff]
        %v3602 = vld [vmem:[#allocation15 + $0x298] sm:$0xff]
        %v3603 = vld [vmem:[#allocation15 + $0x2a0] sm:$0xff]
        %v3604 = vld [vmem:[#allocation15 + $0x2a8] sm:$0xff]
        %v3605 = vld [vmem:[#allocation15 + $0x2b0] sm:$0xff]
        %v3606 = vld [vmem:[#allocation15 + $0x2b8] sm:$0xff]
        %v3607 = vld [vmem:[#allocation15 + $0x2c0] sm:$0xff]
        %v3608 = vld [vmem:[#allocation15 + $0x2c8] sm:$0xff]
        %v3609 = vld [vmem:[#allocation15 + $0x2d0] sm:$0xff]
        %v3610 = vld [vmem:[#allocation15 + $0x2d8] sm:$0xff]
        %v3611 = vld [vmem:[#allocation15 + $0x2e0] sm:$0xff]
        %v3612 = vld [vmem:[#allocation15 + $0x2e8] sm:$0xff]
        %v3613 = vld [vmem:[#allocation15 + $0x2f0] sm:$0xff]
        %v3614 = vld [vmem:[#allocation15 + $0x2f8] sm:$0xff]
        %v3615 = vld [vmem:[#allocation15 + $0x300] sm:$0xff]
        %v3616 = vld [vmem:[#allocation15 + $0x308] sm:$0xff]
        %v3617 = vld [vmem:[#allocation15 + $0x310] sm:$0xff]
        %v3618 = vld [vmem:[#allocation15 + $0x318] sm:$0xff]
        %v3619 = vld [vmem:[#allocation15 + $0x320] sm:$0xff]
        %v3620 = vld [vmem:[#allocation15 + $0x328] sm:$0xff]
        %v3621 = vld [vmem:[#allocation15 + $0x330] sm:$0xff]
        %v3622 = vld [vmem:[#allocation15 + $0x338] sm:$0xff]
        %v3623 = vld [vmem:[#allocation15 + $0x340] sm:$0xff]
        %v3624 = vld [vmem:[#allocation15 + $0x348] sm:$0xff]
        %v3625 = vld [vmem:[#allocation15 + $0x350] sm:$0xff]
        %v3626 = vld [vmem:[#allocation15 + $0x358] sm:$0xff]
        %v3627 = vld [vmem:[#allocation15 + $0x360] sm:$0xff]
        %v3628 = vld [vmem:[#allocation15 + $0x368] sm:$0xff]
        %v3629 = vld [vmem:[#allocation15 + $0x370] sm:$0xff]
        %v3630 = vld [vmem:[#allocation15 + $0x378] sm:$0xff]
        %v3631 = vld [vmem:[#allocation15 + $0x380] sm:$0xff]
        %v3632 = vld [vmem:[#allocation15 + $0x388] sm:$0xff]
        %v3633 = vld [vmem:[#allocation15 + $0x390] sm:$0xff]
        %v3634 = vld [vmem:[#allocation15 + $0x398] sm:$0xff]
        %v3635 = vld [vmem:[#allocation15 + $0x3a0] sm:$0xff]
        %v3636 = vld [vmem:[#allocation15 + $0x3a8] sm:$0xff]
        %v3637 = vld [vmem:[#allocation15 + $0x3b0] sm:$0xff]
        %v3638 = vld [vmem:[#allocation15 + $0x3b8] sm:$0xff]
        %v3639 = vld [vmem:[#allocation15 + $0x3c0] sm:$0xff]
        %v3640 = vld [vmem:[#allocation15 + $0x3c8] sm:$0xff]
        %v3641 = vld [vmem:[#allocation15 + $0x3d0] sm:$0xff]
        %v3642 = vld [vmem:[#allocation15 + $0x3d8] sm:$0xff]
        %v3643 = vld [vmem:[#allocation15 + $0x3e0] sm:$0xff]
        %v3644 = vld [vmem:[#allocation15 + $0x3e8] sm:$0xff]
        %v3645 = vld [vmem:[#allocation15 + $0x3f0] sm:$0xff]
        %v3646 = vld [vmem:[#allocation15 + $0x3f8] sm:$0xff]
        %v3647 = vld [vmem:[#allocation15 + $0x400] sm:$0xff]
        %v3648 = vld [vmem:[#allocation15 + $0x408] sm:$0xff]
        %v3649 = vld [vmem:[#allocation15 + $0x410] sm:$0xff]
        %v3650 = vld [vmem:[#allocation15 + $0x418] sm:$0xff]
        %v3651 = vld [vmem:[#allocation15 + $0x420] sm:$0xff]
        %v3652 = vld [vmem:[#allocation15 + $0x428] sm:$0xff]
        %v3653 = vld [vmem:[#allocation15 + $0x430] sm:$0xff]
        %v3654 = vld [vmem:[#allocation15 + $0x438] sm:$0xff]
        %v3655 = vld [vmem:[#allocation15 + $0x440] sm:$0xff]
        %v3656 = vld [vmem:[#allocation15 + $0x448] sm:$0xff]
        %v3657 = vld [vmem:[#allocation15 + $0x450] sm:$0xff]
        %v3658 = vld [vmem:[#allocation15 + $0x458] sm:$0xff]
        %v3659 = vld [vmem:[#allocation15 + $0x460] sm:$0xff]
        %v3660 = vld [vmem:[#allocation15 + $0x468] sm:$0xff]
        %v3661 = vld [vmem:[#allocation15 + $0x470] sm:$0xff]
        %v3662 = vld [vmem:[#allocation15 + $0x478] sm:$0xff]
        %v3663 = vld [vmem:[#allocation15 + $0x480] sm:$0xff]
        %v3664 = vld [vmem:[#allocation15 + $0x488] sm:$0xff]
        %v3665 = vld [vmem:[#allocation15 + $0x490] sm:$0xff]
        %v3666 = vld [vmem:[#allocation15 + $0x498] sm:$0xff]
        %v3667 = vld [vmem:[#allocation15 + $0x4a0] sm:$0xff]
        %v3668 = vld [vmem:[#allocation15 + $0x4a8] sm:$0xff]
        %v3669 = vld [vmem:[#allocation15 + $0x4b0] sm:$0xff]
        %v3670 = vld [vmem:[#allocation15 + $0x4b8] sm:$0xff]
        %v3671 = vld [vmem:[#allocation15 + $0x4c0] sm:$0xff]
        %v3672 = vld [vmem:[#allocation15 + $0x4c8] sm:$0xff]
        %v3673 = vld [vmem:[#allocation15 + $0x4d0] sm:$0xff]
        %v3674 = vld [vmem:[#allocation15 + $0x4d8] sm:$0xff]
        %v3675 = vld [vmem:[#allocation15 + $0x4e0] sm:$0xff]
        %v3676 = vld [vmem:[#allocation15 + $0x4e8] sm:$0xff]
        %v3677 = vld [vmem:[#allocation15 + $0x4f0] sm:$0xff]
        %v3678 = vld [vmem:[#allocation15 + $0x4f8] sm:$0xff]
        %v3679 = vld [vmem:[#allocation15 + $0x500] sm:$0xff]
        %v3680 = vld [vmem:[#allocation15 + $0x508] sm:$0xff]
        %v3681 = vld [vmem:[#allocation15 + $0x510] sm:$0xff]
        %v3682 = vld [vmem:[#allocation15 + $0x518] sm:$0xff]
        %v3683 = vld [vmem:[#allocation15 + $0x520] sm:$0xff]
        %v3684 = vld [vmem:[#allocation15 + $0x528] sm:$0xff]
        %v3685 = vld [vmem:[#allocation15 + $0x530] sm:$0xff]
        %v3686 = vld [vmem:[#allocation15 + $0x538] sm:$0xff]
        %v3687 = vld [vmem:[#allocation15 + $0x540] sm:$0xff]
        %v3688 = vld [vmem:[#allocation15 + $0x548] sm:$0xff]
        %v3689 = vld [vmem:[#allocation15 + $0x550] sm:$0xff]
        %v3690 = vld [vmem:[#allocation15 + $0x558] sm:$0xff]
        %v3691 = vld [vmem:[#allocation15 + $0x560] sm:$0xff]
        %v3692 = vld [vmem:[#allocation15 + $0x568] sm:$0xff]
        %v3693 = vld [vmem:[#allocation15 + $0x570] sm:$0xff]
        %v3694 = vld [vmem:[#allocation15 + $0x578] sm:$0xff]
        %v3695 = vld [vmem:[#allocation15 + $0x580] sm:$0xff]
        %v3696 = vld [vmem:[#allocation15 + $0x588] sm:$0xff]
        %v3697 = vld [vmem:[#allocation15 + $0x590] sm:$0xff]
        %v3698 = vld [vmem:[#allocation15 + $0x598] sm:$0xff]
        %v3699 = vld [vmem:[#allocation15 + $0x5a0] sm:$0xff]
        %v3700 = vld [vmem:[#allocation15 + $0x5a8] sm:$0xff]
        %v3701 = vld [vmem:[#allocation15 + $0x5b0] sm:$0xff]
        %v3702 = vld [vmem:[#allocation15 + $0x5b8] sm:$0xff]
        %v3703 = vld [vmem:[#allocation15 + $0x5c0] sm:$0xff]
        %v3704 = vld [vmem:[#allocation15 + $0x5c8] sm:$0xff]
        %v3705 = vld [vmem:[#allocation15 + $0x5d0] sm:$0xff]
        %v3706 = vld [vmem:[#allocation15 + $0x5d8] sm:$0xff]
        %v3707 = vld [vmem:[#allocation15 + $0x5e0] sm:$0xff]
        %v3708 = vld [vmem:[#allocation15 + $0x5e8] sm:$0xff]
        %v3709 = vld [vmem:[#allocation15 + $0x5f0] sm:$0xff]
        %v3710 = vld [vmem:[#allocation15 + $0x5f8] sm:$0xff]
        %v3711 = vld [vmem:[#allocation15 + $0x600] sm:$0xff]
        %v3712 = vld [vmem:[#allocation15 + $0x608] sm:$0xff]
        %v3713 = vld [vmem:[#allocation15 + $0x610] sm:$0xff]
        %v3714 = vld [vmem:[#allocation15 + $0x618] sm:$0xff]
        %v3715 = vld [vmem:[#allocation15 + $0x620] sm:$0xff]
        %v3716 = vld [vmem:[#allocation15 + $0x628] sm:$0xff]
        %v3717 = vld [vmem:[#allocation15 + $0x630] sm:$0xff]
        %v3718 = vld [vmem:[#allocation15 + $0x638] sm:$0xff]
        %v3719 = vld [vmem:[#allocation15 + $0x640] sm:$0xff]
        %v3720 = vld [vmem:[#allocation15 + $0x648] sm:$0xff]
        %v3721 = vld [vmem:[#allocation15 + $0x650] sm:$0xff]
        %v3722 = vld [vmem:[#allocation15 + $0x658] sm:$0xff]
        %v3723 = vld [vmem:[#allocation15 + $0x660] sm:$0xff]
        %v3724 = vld [vmem:[#allocation15 + $0x668] sm:$0xff]
        %v3725 = vld [vmem:[#allocation15 + $0x670] sm:$0xff]
        %v3726 = vld [vmem:[#allocation15 + $0x678] sm:$0xff]
        %v3727 = vld [vmem:[#allocation15 + $0x680] sm:$0xff]
        %v3728 = vld [vmem:[#allocation15 + $0x688] sm:$0xff]
        %v3729 = vld [vmem:[#allocation15 + $0x690] sm:$0xff]
        %v3730 = vld [vmem:[#allocation15 + $0x698] sm:$0xff]
        %v3731 = vld [vmem:[#allocation15 + $0x6a0] sm:$0xff]
        %v3732 = vld [vmem:[#allocation15 + $0x6a8] sm:$0xff]
        %v3733 = vld [vmem:[#allocation15 + $0x6b0] sm:$0xff]
        %v3734 = vld [vmem:[#allocation15 + $0x6b8] sm:$0xff]
        %v3735 = vld [vmem:[#allocation15 + $0x6c0] sm:$0xff]
        %v3736 = vld [vmem:[#allocation15 + $0x6c8] sm:$0xff]
        %v3737 = vld [vmem:[#allocation15 + $0x6d0] sm:$0xff]
        %v3738 = vld [vmem:[#allocation15 + $0x6d8] sm:$0xff]
        %v3739 = vld [vmem:[#allocation15 + $0x6e0] sm:$0xff]
        %v3740 = vld [vmem:[#allocation15 + $0x6e8] sm:$0xff]
        %v3741 = vld [vmem:[#allocation15 + $0x6f0] sm:$0xff]
        %v3742 = vld [vmem:[#allocation15 + $0x6f8] sm:$0xff]
        %v3743 = vld [vmem:[#allocation15 + $0x700] sm:$0xff]
        %v3744 = vld [vmem:[#allocation15 + $0x708] sm:$0xff]
        %v3745 = vld [vmem:[#allocation15 + $0x710] sm:$0xff]
        %v3746 = vld [vmem:[#allocation15 + $0x718] sm:$0xff]
        %v3747 = vld [vmem:[#allocation15 + $0x720] sm:$0xff]
        %v3748 = vld [vmem:[#allocation15 + $0x728] sm:$0xff]
        %v3749 = vld [vmem:[#allocation15 + $0x730] sm:$0xff]
        %v3750 = vld [vmem:[#allocation15 + $0x738] sm:$0xff]
        %v3751 = vld [vmem:[#allocation15 + $0x740] sm:$0xff]
        %v3752 = vld [vmem:[#allocation15 + $0x748] sm:$0xff]
        %v3753 = vld [vmem:[#allocation15 + $0x750] sm:$0xff]
        %v3754 = vld [vmem:[#allocation15 + $0x758] sm:$0xff]
        %v3755 = vld [vmem:[#allocation15 + $0x760] sm:$0xff]
        %v3756 = vld [vmem:[#allocation15 + $0x768] sm:$0xff]
        %v3757 = vld [vmem:[#allocation15 + $0x770] sm:$0xff]
        %v3758 = vld [vmem:[#allocation15 + $0x778] sm:$0xff]
        %v3759 = vld [vmem:[#allocation15 + $0x780] sm:$0xff]
        %v3760 = vld [vmem:[#allocation15 + $0x788] sm:$0xff]
        %v3761 = vld [vmem:[#allocation15 + $0x790] sm:$0xff]
        %v3762 = vld [vmem:[#allocation15 + $0x798] sm:$0xff]
        %v3763 = vld [vmem:[#allocation15 + $0x7a0] sm:$0xff]
        %v3764 = vld [vmem:[#allocation15 + $0x7a8] sm:$0xff]
        %v3765 = vld [vmem:[#allocation15 + $0x7b0] sm:$0xff]
        %v3766 = vld [vmem:[#allocation15 + $0x7b8] sm:$0xff]
        %v3767 = vld [vmem:[#allocation15 + $0x7c0] sm:$0xff]
        %v3768 = vld [vmem:[#allocation15 + $0x7c8] sm:$0xff]
        %v3769 = vld [vmem:[#allocation15 + $0x7d0] sm:$0xff]
        %v3770 = vld [vmem:[#allocation15 + $0x7d8] sm:$0xff]
        %v3771 = vld [vmem:[#allocation15 + $0x7e0] sm:$0xff]
        %v3772 = vld [vmem:[#allocation15 + $0x7e8] sm:$0xff]
        %v3773 = vld [vmem:[#allocation15 + $0x7f0] sm:$0xff]
        %v3774 = vld [vmem:[#allocation15 + $0x7f8] sm:$0xff]
        %v3775 = vld [vmem:[#allocation17] sm:$0x3]
        %v3777 = vlaneseq
        %v3778 = vshrl.u32 %v3777, 7
        %v3779 = vsub.s32 0, %v3778
        %v3780 = vrot.slane %v3775, %v3779
        %v3781 = vlaneseq
        %v3782 = vshrl.u32 %v3781, 7
        %v3783 = vsub.s32 1, %v3782
        %v3784 = vrot.slane %v3775, %v3783
        %3787 = vmatprep.subr.mxu0 %v3520
        %3788 = vmatpush1.msra.mxu0 %v3519
        %3789 = vmatprep.subr.mxu0 %v3522
        %3790 = vmatpush1.msra.mxu0 %v3521
        %3791 = vmatprep.subr.mxu0 %v3524
        %3792 = vmatpush1.msra.mxu0 %v3523
        %3793 = vmatprep.subr.mxu0 %v3526
        %3794 = vmatpush1.msra.mxu0 %v3525
        %3795 = vmatprep.subr.mxu0 %v3528
        %3796 = vmatpush1.msra.mxu0 %v3527
        %3797 = vmatprep.subr.mxu0 %v3530
        %3798 = vmatpush1.msra.mxu0 %v3529
        %3799 = vmatprep.subr.mxu0 %v3532
        %3800 = vmatpush1.msra.mxu0 %v3531
        %3801 = vmatprep.subr.mxu0 %v3534
        %3802 = vmatpush1.msra.mxu0 %v3533
        %3803 = vmatprep.subr.mxu0 %v3536
        %3804 = vmatpush1.msra.mxu0 %v3535
        %3805 = vmatprep.subr.mxu0 %v3538
        %3806 = vmatpush1.msra.mxu0 %v3537
        %3807 = vmatprep.subr.mxu0 %v3540
        %3808 = vmatpush1.msra.mxu0 %v3539
        %3809 = vmatprep.subr.mxu0 %v3542
        %3810 = vmatpush1.msra.mxu0 %v3541
        %3811 = vmatprep.subr.mxu0 %v3544
        %3812 = vmatpush1.msra.mxu0 %v3543
        %3813 = vmatprep.subr.mxu0 %v3546
        %3814 = vmatpush1.msra.mxu0 %v3545
        %3815 = vmatprep.subr.mxu0 %v3548
        %3816 = vmatpush1.msra.mxu0 %v3547
        %3817 = vmatprep.subr.mxu0 %v3550
        %3818 = vmatpush1.msra.mxu0 %v3549
        %3819 = vmatprep.subr.mxu0 %v3552
        %3820 = vmatpush1.msra.mxu0 %v3551
        %3821 = vmatprep.subr.mxu0 %v3554
        %3822 = vmatpush1.msra.mxu0 %v3553
        %3823 = vmatprep.subr.mxu0 %v3556
        %3824 = vmatpush1.msra.mxu0 %v3555
        %3825 = vmatprep.subr.mxu0 %v3558
        %3826 = vmatpush1.msra.mxu0 %v3557
        %3827 = vmatprep.subr.mxu0 %v3560
        %3828 = vmatpush1.msra.mxu0 %v3559
        %3829 = vmatprep.subr.mxu0 %v3562
        %3830 = vmatpush1.msra.mxu0 %v3561
        %3831 = vmatprep.subr.mxu0 %v3564
        %3832 = vmatpush1.msra.mxu0 %v3563
        %3833 = vmatprep.subr.mxu0 %v3566
        %3834 = vmatpush1.msra.mxu0 %v3565
        %3835 = vmatprep.subr.mxu0 %v3568
        %3836 = vmatpush1.msra.mxu0 %v3567
        %3837 = vmatprep.subr.mxu0 %v3570
        %3838 = vmatpush1.msra.mxu0 %v3569
        %3839 = vmatprep.subr.mxu0 %v3572
        %3840 = vmatpush1.msra.mxu0 %v3571
        %3841 = vmatprep.subr.mxu0 %v3574
        %3842 = vmatpush1.msra.mxu0 %v3573
        %3843 = vmatprep.subr.mxu0 %v3576
        %3844 = vmatpush1.msra.mxu0 %v3575
        %3845 = vmatprep.subr.mxu0 %v3578
        %3846 = vmatpush1.msra.mxu0 %v3577
        %3847 = vmatprep.subr.mxu0 %v3580
        %3848 = vmatpush1.msra.mxu0 %v3579
        %3849 = vmatprep.subr.mxu0 %v3582
        %3850 = vmatpush1.msra.mxu0 %v3581
        %3851 = vmatprep.mubr.f32.mxu0 %v3488
        %3852 = vmatmul.mubr.f32.gmra.mrb[0].mxu0 %v3487
        %v3853 = vpop.f32.mrb[0].mxu0
        %v3854 = vadd.f32 %v3780, %v3853
        %v3855 = vpop.f32.mrb[0].mxu0
        %v3856 = vadd.f32 %v3784, %v3855
        %3857 = vmatprep.mubr.f32.mxu0 %v3496
        %3858 = vmatmul.mubr.f32.gmra.mrb[0].mxu0 %v3495
        %v3859 = vpop.f32.mrb[0].mxu0
        %v3860 = vadd.f32 %v3780, %v3859
        %v3861 = vpop.f32.mrb[0].mxu0
        %v3862 = vadd.f32 %v3784, %v3861
        %3863 = vmatprep.mubr.f32.mxu0 %v3504
        %3864 = vmatmul.mubr.f32.gmra.mrb[0].mxu0 %v3503
        %v3865 = vpop.f32.mrb[0].mxu0
        %v3866 = vadd.f32 %v3780, %v3865
        %v3867 = vpop.f32.mrb[0].mxu0
        %v3868 = vadd.f32 %v3784, %v3867
        %3869 = vmatprep.mubr.f32.mxu0 %v3512
        %3870 = vmatmul.mubr.f32.gmra.mrb[0].mxu0 %v3511
        %v3871 = vpop.f32.mrb[0].mxu0
        %v3872 = vadd.f32 %v3780, %v3871
        %v3873 = vpop.f32.mrb[0].mxu0
        %v3874 = vadd.f32 %v3784, %v3873
        %3875 = vdwg.mxu0
        %3876 = vmatprep.subr.mxu0 %v3584
        %3877 = vmatpush1.msra.mxu0 %v3583
        %3878 = vmatprep.subr.mxu0 %v3586
        %3879 = vmatpush1.msra.mxu0 %v3585
        %3880 = vmatprep.subr.mxu0 %v3588
        %3881 = vmatpush1.msra.mxu0 %v3587
        %3882 = vmatprep.subr.mxu0 %v3590
        %3883 = vmatpush1.msra.mxu0 %v3589
        %3884 = vmatprep.subr.mxu0 %v3592
        %3885 = vmatpush1.msra.mxu0 %v3591
        %3886 = vmatprep.subr.mxu0 %v3594
        %3887 = vmatpush1.msra.mxu0 %v3593
        %3888 = vmatprep.subr.mxu0 %v3596
        %3889 = vmatpush1.msra.mxu0 %v3595
        %3890 = vmatprep.subr.mxu0 %v3598
        %3891 = vmatpush1.msra.mxu0 %v3597
        %3892 = vmatprep.subr.mxu0 %v3600
        %3893 = vmatpush1.msra.mxu0 %v3599
        %3894 = vmatprep.subr.mxu0 %v3602
        %3895 = vmatpush1.msra.mxu0 %v3601
        %3896 = vmatprep.subr.mxu0 %v3604
        %3897 = vmatpush1.msra.mxu0 %v3603
        %3898 = vmatprep.subr.mxu0 %v3606
        %3899 = vmatpush1.msra.mxu0 %v3605
        %3900 = vmatprep.subr.mxu0 %v3608
        %3901 = vmatpush1.msra.mxu0 %v3607
        %3902 = vmatprep.subr.mxu0 %v3610
        %3903 = vmatpush1.msra.mxu0 %v3609
        %3904 = vmatprep.subr.mxu0 %v3612
        %3905 = vmatpush1.msra.mxu0 %v3611
        %3906 = vmatprep.subr.mxu0 %v3614
        %3907 = vmatpush1.msra.mxu0 %v3613
        %3908 = vmatprep.subr.mxu0 %v3616
        %3909 = vmatpush1.msra.mxu0 %v3615
        %3910 = vmatprep.subr.mxu0 %v3618
        %3911 = vmatpush1.msra.mxu0 %v3617
        %3912 = vmatprep.subr.mxu0 %v3620
        %3913 = vmatpush1.msra.mxu0 %v3619
        %3914 = vmatprep.subr.mxu0 %v3622
        %3915 = vmatpush1.msra.mxu0 %v3621
        %3916 = vmatprep.subr.mxu0 %v3624
        %3917 = vmatpush1.msra.mxu0 %v3623
        %3918 = vmatprep.subr.mxu0 %v3626
        %3919 = vmatpush1.msra.mxu0 %v3625
        %3920 = vmatprep.subr.mxu0 %v3628
        %3921 = vmatpush1.msra.mxu0 %v3627
        %3922 = vmatprep.subr.mxu0 %v3630
        %3923 = vmatpush1.msra.mxu0 %v3629
        %3924 = vmatprep.subr.mxu0 %v3632
        %3925 = vmatpush1.msra.mxu0 %v3631
        %3926 = vmatprep.subr.mxu0 %v3634
        %3927 = vmatpush1.msra.mxu0 %v3633
        %3928 = vmatprep.subr.mxu0 %v3636
        %3929 = vmatpush1.msra.mxu0 %v3635
        %3930 = vmatprep.subr.mxu0 %v3638
        %3931 = vmatpush1.msra.mxu0 %v3637
        %3932 = vmatprep.subr.mxu0 %v3640
        %3933 = vmatpush1.msra.mxu0 %v3639
        %3934 = vmatprep.subr.mxu0 %v3642
        %3935 = vmatpush1.msra.mxu0 %v3641
        %3936 = vmatprep.subr.mxu0 %v3644
        %3937 = vmatpush1.msra.mxu0 %v3643
        %3938 = vmatprep.subr.mxu0 %v3646
        %3939 = vmatpush1.msra.mxu0 %v3645
        %3940 = vmatprep.mubr.f32.mxu0 %v3490
        %3941 = vmatmul.mubr.f32.gmra.mrb[0].mxu0 %v3489
        %v3942 = vpop.f32.mrb[0].mxu0
        %v3943 = vadd.f32 %v3854, %v3942
        %v3944 = vpop.f32.mrb[0].mxu0
        %v3945 = vadd.f32 %v3856, %v3944
        %3946 = vmatprep.mubr.f32.mxu0 %v3498
        %3947 = vmatmul.mubr.f32.gmra.mrb[0].mxu0 %v3497
        %v3948 = vpop.f32.mrb[0].mxu0
        %v3949 = vadd.f32 %v3860, %v3948
        %v3950 = vpop.f32.mrb[0].mxu0
        %v3951 = vadd.f32 %v3862, %v3950
        %3952 = vmatprep.mubr.f32.mxu0 %v3506
        %3953 = vmatmul.mubr.f32.gmra.mrb[0].mxu0 %v3505
        %v3954 = vpop.f32.mrb[0].mxu0
        %v3955 = vadd.f32 %v3866, %v3954
        %v3956 = vpop.f32.mrb[0].mxu0
        %v3957 = vadd.f32 %v3868, %v3956
        %3958 = vmatprep.mubr.f32.mxu0 %v3514
        %3959 = vmatmul.mubr.f32.gmra.mrb[0].mxu0 %v3513
        %v3960 = vpop.f32.mrb[0].mxu0
        %v3961 = vadd.f32 %v3872, %v3960
        %v3962 = vpop.f32.mrb[0].mxu0
        %v3963 = vadd.f32 %v3874, %v3962
        %3964 = vdwg.mxu0
        %3965 = vmatprep.subr.mxu0 %v3648
        %3966 = vmatpush1.msra.mxu0 %v3647
        %3967 = vmatprep.subr.mxu0 %v3650
        %3968 = vmatpush1.msra.mxu0 %v3649
        %3969 = vmatprep.subr.mxu0 %v3652
        %3970 = vmatpush1.msra.mxu0 %v3651
        %3971 = vmatprep.subr.mxu0 %v3654
        %3972 = vmatpush1.msra.mxu0 %v3653
        %3973 = vmatprep.subr.mxu0 %v3656
        %3974 = vmatpush1.msra.mxu0 %v3655
        %3975 = vmatprep.subr.mxu0 %v3658
        %3976 = vmatpush1.msra.mxu0 %v3657
        %3977 = vmatprep.subr.mxu0 %v3660
        %3978 = vmatpush1.msra.mxu0 %v3659
        %3979 = vmatprep.subr.mxu0 %v3662
        %3980 = vmatpush1.msra.mxu0 %v3661
        %3981 = vmatprep.subr.mxu0 %v3664
        %3982 = vmatpush1.msra.mxu0 %v3663
        %3983 = vmatprep.subr.mxu0 %v3666
        %3984 = vmatpush1.msra.mxu0 %v3665
        %3985 = vmatprep.subr.mxu0 %v3668
        %3986 = vmatpush1.msra.mxu0 %v3667
        %3987 = vmatprep.subr.mxu0 %v3670
        %3988 = vmatpush1.msra.mxu0 %v3669
        %3989 = vmatprep.subr.mxu0 %v3672
        %3990 = vmatpush1.msra.mxu0 %v3671
        %3991 = vmatprep.subr.mxu0 %v3674
        %3992 = vmatpush1.msra.mxu0 %v3673
        %3993 = vmatprep.subr.mxu0 %v3676
        %3994 = vmatpush1.msra.mxu0 %v3675
        %3995 = vmatprep.subr.mxu0 %v3678
        %3996 = vmatpush1.msra.mxu0 %v3677
        %3997 = vmatprep.subr.mxu0 %v3680
        %3998 = vmatpush1.msra.mxu0 %v3679
        %3999 = vmatprep.subr.mxu0 %v3682
        %4000 = vmatpush1.msra.mxu0 %v3681
        %4001 = vmatprep.subr.mxu0 %v3684
        %4002 = vmatpush1.msra.mxu0 %v3683
        %4003 = vmatprep.subr.mxu0 %v3686
        %4004 = vmatpush1.msra.mxu0 %v3685
        %4005 = vmatprep.subr.mxu0 %v3688
        %4006 = vmatpush1.msra.mxu0 %v3687
        %4007 = vmatprep.subr.mxu0 %v3690
        %4008 = vmatpush1.msra.mxu0 %v3689
        %4009 = vmatprep.subr.mxu0 %v3692
        %4010 = vmatpush1.msra.mxu0 %v3691
        %4011 = vmatprep.subr.mxu0 %v3694
        %4012 = vmatpush1.msra.mxu0 %v3693
        %4013 = vmatprep.subr.mxu0 %v3696
        %4014 = vmatpush1.msra.mxu0 %v3695
        %4015 = vmatprep.subr.mxu0 %v3698
        %4016 = vmatpush1.msra.mxu0 %v3697
        %4017 = vmatprep.subr.mxu0 %v3700
        %4018 = vmatpush1.msra.mxu0 %v3699
        %4019 = vmatprep.subr.mxu0 %v3702
        %4020 = vmatpush1.msra.mxu0 %v3701
        %4021 = vmatprep.subr.mxu0 %v3704
        %4022 = vmatpush1.msra.mxu0 %v3703
        %4023 = vmatprep.subr.mxu0 %v3706
        %4024 = vmatpush1.msra.mxu0 %v3705
        %4025 = vmatprep.subr.mxu0 %v3708
        %4026 = vmatpush1.msra.mxu0 %v3707
        %4027 = vmatprep.subr.mxu0 %v3710
        %4028 = vmatpush1.msra.mxu0 %v3709
        %4029 = vmatprep.mubr.f32.mxu0 %v3492
        %4030 = vmatmul.mubr.f32.gmra.mrb[0].mxu0 %v3491
        %v4031 = vpop.f32.mrb[0].mxu0
        %v4032 = vadd.f32 %v3943, %v4031
        %v4033 = vpop.f32.mrb[0].mxu0
        %v4034 = vadd.f32 %v3945, %v4033
        %4035 = vmatprep.mubr.f32.mxu0 %v3500
        %4036 = vmatmul.mubr.f32.gmra.mrb[0].mxu0 %v3499
        %v4037 = vpop.f32.mrb[0].mxu0
        %v4038 = vadd.f32 %v3949, %v4037
        %v4039 = vpop.f32.mrb[0].mxu0
        %v4040 = vadd.f32 %v3951, %v4039
        %4041 = vmatprep.mubr.f32.mxu0 %v3508
        %4042 = vmatmul.mubr.f32.gmra.mrb[0].mxu0 %v3507
        %v4043 = vpop.f32.mrb[0].mxu0
        %v4044 = vadd.f32 %v3955, %v4043
        %v4045 = vpop.f32.mrb[0].mxu0
        %v4046 = vadd.f32 %v3957, %v4045
        %4047 = vmatprep.mubr.f32.mxu0 %v3516
        %4048 = vmatmul.mubr.f32.gmra.mrb[0].mxu0 %v3515
        %v4049 = vpop.f32.mrb[0].mxu0
        %v4050 = vadd.f32 %v3961, %v4049
        %v4051 = vpop.f32.mrb[0].mxu0
        %v4052 = vadd.f32 %v3963, %v4051
        %4053 = vdwg.mxu0
        %4054 = vmatprep.subr.mxu0 %v3712
        %4055 = vmatpush1.msra.mxu0 %v3711
        %4056 = vmatprep.subr.mxu0 %v3714
        %4057 = vmatpush1.msra.mxu0 %v3713
        %4058 = vmatprep.subr.mxu0 %v3716
        %4059 = vmatpush1.msra.mxu0 %v3715
        %4060 = vmatprep.subr.mxu0 %v3718
        %4061 = vmatpush1.msra.mxu0 %v3717
        %4062 = vmatprep.subr.mxu0 %v3720
        %4063 = vmatpush1.msra.mxu0 %v3719
        %4064 = vmatprep.subr.mxu0 %v3722
        %4065 = vmatpush1.msra.mxu0 %v3721
        %4066 = vmatprep.subr.mxu0 %v3724
        %4067 = vmatpush1.msra.mxu0 %v3723
        %4068 = vmatprep.subr.mxu0 %v3726
        %4069 = vmatpush1.msra.mxu0 %v3725
        %4070 = vmatprep.subr.mxu0 %v3728
        %4071 = vmatpush1.msra.mxu0 %v3727
        %4072 = vmatprep.subr.mxu0 %v3730
        %4073 = vmatpush1.msra.mxu0 %v3729
        %4074 = vmatprep.subr.mxu0 %v3732
        %4075 = vmatpush1.msra.mxu0 %v3731
        %4076 = vmatprep.subr.mxu0 %v3734
        %4077 = vmatpush1.msra.mxu0 %v3733
        %4078 = vmatprep.subr.mxu0 %v3736
        %4079 = vmatpush1.msra.mxu0 %v3735
        %4080 = vmatprep.subr.mxu0 %v3738
        %4081 = vmatpush1.msra.mxu0 %v3737
        %4082 = vmatprep.subr.mxu0 %v3740
        %4083 = vmatpush1.msra.mxu0 %v3739
        %4084 = vmatprep.subr.mxu0 %v3742
        %4085 = vmatpush1.msra.mxu0 %v3741
        %4086 = vmatprep.subr.mxu0 %v3744
        %4087 = vmatpush1.msra.mxu0 %v3743
        %4088 = vmatprep.subr.mxu0 %v3746
        %4089 = vmatpush1.msra.mxu0 %v3745
        %4090 = vmatprep.subr.mxu0 %v3748
        %4091 = vmatpush1.msra.mxu0 %v3747
        %4092 = vmatprep.subr.mxu0 %v3750
        %4093 = vmatpush1.msra.mxu0 %v3749
        %4094 = vmatprep.subr.mxu0 %v3752
        %4095 = vmatpush1.msra.mxu0 %v3751
        %4096 = vmatprep.subr.mxu0 %v3754
        %4097 = vmatpush1.msra.mxu0 %v3753
        %4098 = vmatprep.subr.mxu0 %v3756
        %4099 = vmatpush1.msra.mxu0 %v3755
        %4100 = vmatprep.subr.mxu0 %v3758
        %4101 = vmatpush1.msra.mxu0 %v3757
        %4102 = vmatprep.subr.mxu0 %v3760
        %4103 = vmatpush1.msra.mxu0 %v3759
        %4104 = vmatprep.subr.mxu0 %v3762
        %4105 = vmatpush1.msra.mxu0 %v3761
        %4106 = vmatprep.subr.mxu0 %v3764
        %4107 = vmatpush1.msra.mxu0 %v3763
        %4108 = vmatprep.subr.mxu0 %v3766
        %4109 = vmatpush1.msra.mxu0 %v3765
        %4110 = vmatprep.subr.mxu0 %v3768
        %4111 = vmatpush1.msra.mxu0 %v3767
        %4112 = vmatprep.subr.mxu0 %v3770
        %4113 = vmatpush1.msra.mxu0 %v3769
        %4114 = vmatprep.subr.mxu0 %v3772
        %4115 = vmatpush1.msra.mxu0 %v3771
        %4116 = vmatprep.subr.mxu0 %v3774
        %4117 = vmatpush1.msra.mxu0 %v3773
        %4118 = vmatprep.mubr.f32.mxu0 %v3494
        %4119 = vmatmul.mubr.f32.gmra.mrb[0].mxu0 %v3493
        %v4120 = vpop.f32.mrb[0].mxu0
        %v4121 = vadd.f32 %v4032, %v4120
        %v4122 = vpop.f32.mrb[0].mxu0
        %v4123 = vadd.f32 %v4034, %v4122
        %4124 = vmatprep.mubr.f32.mxu0 %v3502
        %4125 = vmatmul.mubr.f32.gmra.mrb[0].mxu0 %v3501
        %v4126 = vpop.f32.mrb[0].mxu0
        %v4127 = vadd.f32 %v4038, %v4126
        %v4128 = vpop.f32.mrb[0].mxu0
        %v4129 = vadd.f32 %v4040, %v4128
        %4130 = vmatprep.mubr.f32.mxu0 %v3510
        %4131 = vmatmul.mubr.f32.gmra.mrb[0].mxu0 %v3509
        %v4132 = vpop.f32.mrb[0].mxu0
        %v4133 = vadd.f32 %v4044, %v4132
        %v4134 = vpop.f32.mrb[0].mxu0
        %v4135 = vadd.f32 %v4046, %v4134
        %4136 = vmatprep.mubr.f32.mxu0 %v3518
        %4137 = vmatmul.mubr.f32.gmra.mrb[0].mxu0 %v3517
        %v4138 = vpop.f32.mrb[0].mxu0
        %v4139 = vadd.f32 %v4050, %v4138
        %v4140 = vpop.f32.mrb[0].mxu0
        %v4141 = vadd.f32 %v4052, %v4140
        %4142 = vdwg.mxu0
        %v4143 = vadd.f32 %v2569, %v4121
        %v4144 = vadd.f32 %v2570, %v4123
        %v4145 = vadd.f32 %v2571, %v4127
        %v4146 = vadd.f32 %v2572, %v4129
        %v4147 = vadd.f32 %v2573, %v4133
        %v4148 = vadd.f32 %v2574, %v4135
        %v4149 = vadd.f32 %v2575, %v4139
        %v4150 = vadd.f32 %v2576, %v4141
        %4151 = vst [vmem:[%s458] sm:$0xff] %v4143
        %4152 = vst [vmem:[%s458 + $0x8] sm:$0xff] %v4144
        %4153 = vst [vmem:[%s458 + $0x10] sm:$0xff] %v4145
        %4154 = vst [vmem:[%s458 + $0x18] sm:$0xff] %v4146
        %4155 = vst [vmem:[%s458 + $0x20] sm:$0xff] %v4147
        %4156 = vst [vmem:[%s458 + $0x28] sm:$0xff] %v4148
        %4157 = vst [vmem:[%s458 + $0x30] sm:$0xff] %v4149
        %4158 = vst [vmem:[%s458 + $0x38] sm:$0xff] %v4150
        %s4159 = sand.u32 %s232, 1
        %s4160 = scalar_lea.sflag [#allocation5], %s4159
        %s4161 = sand.u32 %s232, 1
        %s4162 = smul.addr %s4161, 64
        %s4163 = scalar_lea.vmem [#allocation18], %s4162
        // Predicated region
        $region93: #{tpu_custom_call.1} parent=55 // pred_check
          %p4164 = pneg %p242
        $region94: #{tpu_custom_call.1} parent=55 // pred_check_branch
          %4166 = sbr.rel (%p4164) target = $region96
        $region95: #{tpu_custom_call.1} parent=55 // pred_region
          %s4168 = ssub.s32 1024, 1024
          %4169 = vsyncadd %s4160, %s4168
          %s4170 = smul.addr %s30, 8
          %s4171 = smul.addr %s4170, 128
          %s4172 = scalar_lea.hbm %s9, %s4171
          %s4173 = sshll.u32 %s4163, 4
          %s4174 = int_to_ptr.vmem [resolvable:$true] %s4173
          %4179 = dma.vmem_to_hbm [thread:$0]  %s4174, 1024, %s4172, %s4160, 256, 256, 16
        $region96: #{tpu_custom_call.1} parent=55 // pred_fallthru
          _
      $region56: #{tpu_custom_call.1} parent=5 // pred_fallthru
        _
      %p4180 = scmp.le.s32.totalorder 2, %s25
      // Predicated region
      $region97: #{tpu_custom_call.1} parent=5 // pred_check
        %p4181 = pneg %p4180
      $region98: #{tpu_custom_call.1} parent=5 // pred_check_branch
        %4183 = sbr.rel (%p4181) target = $region100
      $region99: #{tpu_custom_call.1} parent=5 // pred_region
        %s4184 = ssub.s32 %s25, 2
        // Predicated region
        $region101: #{tpu_custom_call.1} parent=99 // pred_check
          %p4185 = pneg %p248
        $region102: #{tpu_custom_call.1} parent=99 // pred_check_branch
          %4187 = sbr.rel (%p4185) target = $region104
        $region103: #{tpu_custom_call.1} parent=99 // pred_region
          %s4188 = sand.u32 %s233, 1
          %s4189 = scalar_lea.sflag [#allocation5], %s4188
          %s4190 = sand.u32 %s233, 1
          %s4191 = smul.addr %s4190, 64
          %s4192 = scalar_lea.vmem [#allocation18], %s4191
          %4193 = dma.done %s4189, 1024
        $region104: #{tpu_custom_call.1} parent=99 // pred_fallthru
          _
      $region100: #{tpu_custom_call.1} parent=5 // pred_fallthru
        _
    $region6: #{tpu_custom_call.1} parent=1 // loop_footer
      %s29 = sadd.s32 1, %s25
    $region7: #{tpu_custom_call.1} parent=1 // loop_footer_branch
      %24 = sbr.rel target = $region3
    $region8: #{tpu_custom_call.1} parent=1 // loop_exit
      _
    %4194 = vsyncpa [#allocation4], 1
    %s4195 = scalar_lea.sflag [#allocation4], 1
    %4196 = vsyncpa %s4195, 1
    %4197 = vsyncpa [#allocation7], 1
    %4198 = vsyncpa [#allocation10], 1
    %4199 = vsyncpa [#allocation13], 1
    %4200 = vsyncpa [#allocation16], 1
    %4201 = vsyncpa [#allocation5], 1
    %s4202 = scalar_lea.sflag [#allocation5], 1
    %4203 = vsyncpa %s4202, 1

</llo_original>
